<compile_context>
chip_gen: v5e
topology: v5e:2x2
jax: 0.10.0
libtpu: 0.0.40
codegen_flags: <defaults>
</compile_context>

<pallas_src>
import functools
import math

import jax
import jax.numpy as jnp
from jax import lax
from jax.experimental import pallas as pl
from jax.experimental.pallas import tpu as pltpu


INPUT_DIM = 8        # == OUTPUT_DIM (required by the residual adds)
HIDDEN_DIM = 32
LAYER_DIM = 2
OUTPUT_DIM = 8
SEQ_LEN = 60         # > 50 so the hard-coded x[:, :50, :] slice is meaningful
ENC_LEN = 50         # hard-coded in the PyTorch forward
BATCH = 8            # 8 rows == one f32 sublane tile -> aligned per-step slices
LANE = 128           # TPU lane width; here also 4 * HIDDEN_DIM


# -----------------------------------------------------------------------------
# The fused kernel: encoder + both decoders + fc + residual
# -----------------------------------------------------------------------------
def _srivastava_kernel(xpad_ref, wih0_ref, whh0_ref, b0_ref,
                       wih1_ref, whh1_ref, b1_ref, fcw_ref, fcb_ref,
                       outf_ref, outi_ref,
                       pre0e_scr, pre0f_scr, pre0i_scr, y1f_scr, y1i_scr,
                       *, B, T, Th):
    H = HIDDEN_DIM
    f32 = jnp.float32

    # ---- hoisted layer-0 input projections (one big MXU matmul per LSTM) ----
    # Gate order along 4H follows PyTorch: [i, f, g, o]; bias = b_ih + b_hh.
    # Weight index 0 = encoder, 1 = future, 2 = input.
    xh_rows = xpad_ref[pl.ds(0, Th * B), :]
    pre0e_scr[...] = jnp.dot(xh_rows, wih0_ref[0],
                             preferred_element_type=f32) + b0_ref[0]
    pre0f_scr[...] = jnp.dot(xpad_ref[...], wih0_ref[1],
                             preferred_element_type=f32) + b0_ref[1]
    pre0i_scr[...] = jnp.dot(xh_rows, wih0_ref[2],
                             preferred_element_type=f32) + b0_ref[2]

    def cell(gates, c):
        # g-gate columns are pre-scaled by 2 host-side, so tanh(g_pre) is
        # recovered as 2*sigmoid(2*g_pre) - 1 -> a single EUP sigmoid pass over
        # the full (B, 4H) vreg replaces the sigmoid+tanh pair.
        sig = jax.nn.sigmoid(gates)
        i_g = sig[:, 0 * H:1 * H]
        f_g = sig[:, 1 * H:2 * H]
        g_g = 2.0 * sig[:, 2 * H:3 * H] - 1.0
        o_g = sig[:, 3 * H:4 * H]
        c_new = f_g * c + i_g * g_g
        h_new = o_g * jnp.tanh(c_new)
        return h_new, c_new

    def l0_step(pre_scr, whh0, row, h, c):
        gates = pre_scr[pl.ds(row, B), :] + jnp.dot(
            h, whh0, preferred_element_type=f32)
        return cell(gates, c)

    def l1_step(wih1, whh1, b1, y0, h, c):
        # y0 is the previous iteration's layer-0 output (a carry), so its
        # projection sits off the h1 -> h1 critical chain.
        gates = (jnp.dot(y0, wih1, preferred_element_type=f32)
                 + jnp.dot(h, whh1, preferred_element_type=f32) + b1)
        return cell(gates, c)

    # ================================ encoder ================================
    whh0_e = whh0_ref[0]
    wih1_e, whh1_e, b1_e = wih1_ref[0], whh1_ref[0], b1_ref[0]
    zeros = jnp.zeros((B, H), f32)

    # layer-0 step 0 (h == 0 -> gates == pre row 0)
    h0, c0 = cell(pre0e_scr[pl.ds(0, B), :], zeros)

    def enc_body(t, carry):
        h0, c0, y0, h1, c1 = carry
        h1n, c1n = l1_step(wih1_e, whh1_e, b1_e, y0, h1, c1)   # layer-1 step t-1
        row = pl.multiple_of(t * B, B)
        h0n, c0n = l0_step(pre0e_scr, whh0_e, row, h0, c0)     # layer-0 step t
        return (h0n, c0n, h0n, h1n, c1n)

    h0, c0, y0, h1, c1 = lax.fori_loop(1, Th, enc_body, (h0, c0, h0, zeros, zeros))
    h1, c1 = l1_step(wih1_e, whh1_e, b1_e, y0, h1, c1)         # layer-1 step Th-1

    hn0, cn0 = h0, c0          # encoder final state, layer 0
    hn1, cn1 = h1, c1          # encoder final state, layer 1

    # ====================== decoders (fused, both dirs) ======================
    whh0_f = whh0_ref[1]
    wih1_f, whh1_f, b1_f = wih1_ref[1], whh1_ref[1], b1_ref[1]
    whh0_i = whh0_ref[2]
    wih1_i, whh1_i, b1_i = wih1_ref[2], whh1_ref[2], b1_ref[2]

    # t = 0: layer-0 step for both directions (input dir reads reversed rows)
    h0f, c0f = l0_step(pre0f_scr, whh0_f, 0, hn0, cn0)
    h0i, c0i = l0_step(pre0i_scr, whh0_i, (Th - 1) * B, hn0, cn0)

    def dec_body_both(t, carry):
        h0f, c0f, y0f, h1f, c1f, h0i, c0i, y0i, h1i, c1i = carry
        prev = pl.multiple_of((t - 1) * B, B)
        # layer-1 step t-1 of both directions (4 independent chains/iteration)
        h1f_n, c1f_n = l1_step(wih1_f, whh1_f, b1_f, y0f, h1f, c1f)
        h1i_n, c1i_n = l1_step(wih1_i, whh1_i, b1_i, y0i, h1i, c1i)
        y1f_scr[pl.ds(prev, B), :] = h1f_n
        y1i_scr[pl.ds(prev, B), :] = h1i_n
        # layer-0 step t of both directions
        rowf = pl.multiple_of(t * B, B)
        rowi = pl.multiple_of((Th - 1 - t) * B, B)
        h0f_n, c0f_n = l0_step(pre0f_scr, whh0_f, rowf, h0f, c0f)
        h0i_n, c0i_n = l0_step(pre0i_scr, whh0_i, rowi, h0i, c0i)
        return (h0f_n, c0f_n, h0f_n, h1f_n, c1f_n,
                h0i_n, c0i_n, h0i_n, h1i_n, c1i_n)

    carry = (h0f, c0f, h0f, hn1, cn1, h0i, c0i, h0i, hn1, cn1)
    carry = lax.fori_loop(1, Th, dec_body_both, carry)
    h0f, c0f, y0f, h1f, c1f, h0i, c0i, y0i, h1i, c1i = carry

    # boundary (t = Th): final layer-1 step of the `input` decoder, layer-1
    # step Th-1 of `future`, and (if T > Th) layer-0 step Th of `future`.
    h1f, c1f = l1_step(wih1_f, whh1_f, b1_f, y0f, h1f, c1f)
    h1i, c1i = l1_step(wih1_i, whh1_i, b1_i, y0i, h1i, c1i)
    y1f_scr[pl.ds((Th - 1) * B, B), :] = h1f
    y1i_scr[pl.ds((Th - 1) * B, B), :] = h1i

    if T > Th:                                # trace-time constants
        h0f, c0f = l0_step(pre0f_scr, whh0_f, Th * B, h0f, c0f)
        y0f = h0f

        def dec_body_fut(t, carry):
            h0f, c0f, y0f, h1f, c1f = carry
            prev = pl.multiple_of((t - 1) * B, B)
            h1f_n, c1f_n = l1_step(wih1_f, whh1_f, b1_f, y0f, h1f, c1f)
            y1f_scr[pl.ds(prev, B), :] = h1f_n
            rowf = pl.multiple_of(t * B, B)
            h0f_n, c0f_n = l0_step(pre0f_scr, whh0_f, rowf, h0f, c0f)
            return (h0f_n, c0f_n, h0f_n, h1f_n, c1f_n)

        h0f, c0f, y0f, h1f, c1f = lax.fori_loop(
            Th + 1, T, dec_body_fut, (h0f, c0f, y0f, h1f, c1f))
        h1f, c1f = l1_step(wih1_f, whh1_f, b1_f, y0f, h1f, c1f)
        y1f_scr[pl.ds((T - 1) * B, B), :] = h1f

    # =============== fc + residual, lane-dense (128-wide) stores =============
    outf_ref[...] = (jnp.dot(y1f_scr[...], fcw_ref[...],
                             preferred_element_type=f32)
                     + fcb_ref[...] + xpad_ref[...])
    outi_ref[...] = (jnp.dot(y1i_scr[...], fcw_ref[...],
                             preferred_element_type=f32)
                     + fcb_ref[...] + xpad_ref[pl.ds(0, Th * B), :])


# -----------------------------------------------------------------------------
# Wrapper
# -----------------------------------------------------------------------------
def srivastava_lstm_forward(x, params):
    (wih0_all, whh0_all, b0_all, wih1_all, whh1_all, b1_all, fcw, fcb) = params
    B, T, D = x.shape
    Th = min(ENC_LEN, T)
    H = HIDDEN_DIM
    assert B % 8 == 0, "batch must be a multiple of the f32 sublane tile (8)"
    assert D == OUTPUT_DIM, "residual add requires input_dim == output_dim"

    # Lane-dense time-major slab of x: row t*B + b = x[b, t, :], zero-padded
    # lanes D..127 (the padded weight rows are also zero).
    x_tm = jnp.transpose(x, (1, 0, 2)).reshape(T * B, D)
    xpad = jnp.pad(x_tm, ((0, 0), (0, LANE - D)))

    vmem = pl.BlockSpec(memory_space=pltpu.MemorySpace.VMEM)
    kernel = functools.partial(_srivastava_kernel, B=B, T=T, Th=Th)
    outf, outi = pl.pallas_call(
        kernel,
        out_shape=(jax.ShapeDtypeStruct((T * B, LANE), jnp.float32),
                   jax.ShapeDtypeStruct((Th * B, LANE), jnp.float32)),
        in_specs=[vmem] * 9,
        out_specs=(vmem, vmem),
        scratch_shapes=[
            pltpu.VMEM((Th * B, 4 * H), jnp.float32),   # encoder layer-0 pre-acts
            pltpu.VMEM((T * B, 4 * H), jnp.float32),    # future  layer-0 pre-acts
            pltpu.VMEM((Th * B, 4 * H), jnp.float32),   # input   layer-0 pre-acts
            pltpu.VMEM((T * B, H), jnp.float32),        # future  layer-1 outputs
            pltpu.VMEM((Th * B, H), jnp.float32),       # input   layer-1 outputs
        ],
    )(xpad, wih0_all, whh0_all, b0_all, wih1_all, whh1_all, b1_all, fcw, fcb)

    outf = jnp.transpose(outf[:, :OUTPUT_DIM].reshape(T, B, OUTPUT_DIM), (1, 0, 2))
    outi = jnp.transpose(outi[:, :OUTPUT_DIM].reshape(Th, B, OUTPUT_DIM), (1, 0, 2))
    return outf, outi


# -----------------------------------------------------------------------------
# Parameter preparation: PyTorch layout -> kernel layout
#   * transpose weights, fuse b_ih + b_hh
#   * pad layer-0 input weights to 128 rows (lane-dense x slab)
#   * pre-scale the g-gate columns by 2  (tanh(x) == 2*sigmoid(2x) - 1)
#   * stack encoder / future / input along a leading axis (index 0/1/2)
#   * pad fc weight/bias to 128 output lanes (unmasked output stores)
# -----------------------------------------------------------------------------
def prepare_params(enc_raw, fut_raw, inp_raw, fc_w, fc_b):
    H = HIDDEN_DIM
    gscale = jnp.ones((4 * H,), jnp.float32).at[2 * H:3 * H].set(2.0)

    def layer0(w_ih, w_hh, b_ih, b_hh):
        wih = jnp.zeros((LANE, 4 * H), jnp.float32).at[:w_ih.shape[1], :].set(w_ih.T)
        whh = w_hh.T
        b = (b_ih + b_hh)[None, :]
        return wih * gscale, whh * gscale, b * gscale

    def layer1(w_ih, w_hh, b_ih, b_hh):
        return w_ih.T * gscale, w_hh.T * gscale, ((b_ih + b_hh)[None, :]) * gscale

    l0 = [layer0(*p[0]) for p in (enc_raw, fut_raw, inp_raw)]
    l1 = [layer1(*p[1]) for p in (enc_raw, fut_raw, inp_raw)]
    wih0_all = jnp.stack([a for a, _, _ in l0])
    whh0_all = jnp.stack([a for _, a, _ in l0])
    b0_all = jnp.stack([a for _, _, a in l0])
    wih1_all = jnp.stack([a for a, _, _ in l1])
    whh1_all = jnp.stack([a for _, a, _ in l1])
    b1_all = jnp.stack([a for _, _, a in l1])
    fcw = jnp.zeros((H, LANE), jnp.float32).at[:, :fc_w.shape[0]].set(fc_w.T)
    fcb = jnp.zeros((1, LANE), jnp.float32).at[:, :fc_b.shape[0]].set(fc_b[None, :])
    return (wih0_all, whh0_all, b0_all, wih1_all, whh1_all, b1_all, fcw, fcb)


# -----------------------------------------------------------------------------
# Deterministic parameter init (PyTorch-style uniform(-1/sqrt(H), 1/sqrt(H)))
# -----------------------------------------------------------------------------
def init_lstm_params(key, input_dim, hidden_dim, num_layers):
    k = 1.0 / math.sqrt(hidden_dim)
    layers = []
    for l in range(num_layers):
        din = input_dim if l == 0 else hidden_dim
        key, k1, k2, k3, k4 = jax.random.split(key, 5)
        w_ih = jax.random.uniform(k1, (4 * hidden_dim, din), jnp.float32, -k, k)
        w_hh = jax.random.uniform(k2, (4 * hidden_dim, hidden_dim), jnp.float32, -k, k)
        b_ih = jax.random.uniform(k3, (4 * hidden_dim,), jnp.float32, -k, k)
        b_hh = jax.random.uniform(k4, (4 * hidden_dim,), jnp.float32, -k, k)
        layers.append((w_ih, w_hh, b_ih, b_hh))
    return key, layers


def init_fc_params(key, hidden_dim, output_dim):
    k = 1.0 / math.sqrt(hidden_dim)
    key, k1, k2 = jax.random.split(key, 3)
    w = jax.random.uniform(k1, (output_dim, hidden_dim), jnp.float32, -k, k)
    b = jax.random.uniform(k2, (output_dim,), jnp.float32, -k, k)
    return key, (w, b)


# -----------------------------------------------------------------------------
# Pure-JAX reference (raw PyTorch-layout params, no Pallas) for correctness
# -----------------------------------------------------------------------------
def _ref_lstm(x_btd, layers, h0, c0):
    H = HIDDEN_DIM
    inp = x_btd
    hns, cns = [], []
    for l, (w_ih, w_hh, b_ih, b_hh) in enumerate(layers):
        wih, whh, b = w_ih.T, w_hh.T, b_ih + b_hh

        def step(carry, x_t, wih=wih, whh=whh, b=b):
            h, c = carry
            g = x_t @ wih + h @ whh + b
            i = jax.nn.sigmoid(g[:, 0 * H:1 * H])
            f = jax.nn.sigmoid(g[:, 1 * H:2 * H])
            gg = jnp.tanh(g[:, 2 * H:3 * H])
            o = jax.nn.sigmoid(g[:, 3 * H:4 * H])
            c2 = f * c + i * gg
            h2 = o * jnp.tanh(c2)
            return (h2, c2), h2

        (hn, cn), ys = lax.scan(step, (h0[l], c0[l]), jnp.swapaxes(inp, 0, 1))
        inp = jnp.swapaxes(ys, 0, 1)
        hns.append(hn)
        cns.append(cn)
    return inp, jnp.stack(hns), jnp.stack(cns)


def _ref_forward(x, enc_raw, fut_raw, inp_raw, fc_w, fc_b):
    B = x.shape[0]
    xh = x[:, :ENC_LEN, :]
    xrev = jnp.flip(xh, axis=1)
    h0 = jnp.zeros((LAYER_DIM, B, HIDDEN_DIM), jnp.float32)
    c0 = jnp.zeros_like(h0)
    _, hnh, cnh = _ref_lstm(xh, enc_raw, h0, c0)
    yf, _, _ = _ref_lstm(x, fut_raw, hnh, cnh)
    yi, _, _ = _ref_lstm(xrev, inp_raw, hnh, cnh)
    outf = yf @ fc_w.T + fc_b + x
    outi = yi @ fc_w.T + fc_b + xh
    return outf, outi


if __name__ == "__main__":
    key = jax.random.PRNGKey(0)
    key, kx = jax.random.split(key)
    x = jax.random.normal(kx, (BATCH, SEQ_LEN, INPUT_DIM), jnp.float32)

    key, enc_raw = init_lstm_params(key, INPUT_DIM, HIDDEN_DIM, LAYER_DIM)
    key, fut_raw = init_lstm_params(key, INPUT_DIM, HIDDEN_DIM, LAYER_DIM)
    key, inp_raw = init_lstm_params(key, INPUT_DIM, HIDDEN_DIM, LAYER_DIM)
    key, (fc_w, fc_b) = init_fc_params(key, HIDDEN_DIM, OUTPUT_DIM)

    params = prepare_params(enc_raw, fut_raw, inp_raw, fc_w, fc_b)

    fwd = jax.jit(srivastava_lstm_forward)
    outf, outi = fwd(x, params)
    jax.block_until_ready((outf, outi))

    assert outf.shape == (BATCH, SEQ_LEN, OUTPUT_DIM), outf.shape
    assert outi.shape == (BATCH, ENC_LEN, OUTPUT_DIM), outi.shape
    assert bool(jnp.all(jnp.isfinite(outf))) and bool(jnp.all(jnp.isfinite(outi)))

    # Numerical check against the pure-JAX reference (raw params).
    ref_f, ref_i = jax.jit(_ref_forward)(x, enc_raw, fut_raw, inp_raw, fc_w, fc_b)
    assert bool(jnp.allclose(outf, ref_f, atol=1e-3, rtol=1e-3)), \
        float(jnp.max(jnp.abs(outf - ref_f)))
    assert bool(jnp.allclose(outi, ref_i, atol=1e-3, rtol=1e-3)), \
        float(jnp.max(jnp.abs(outi - ref_i)))
    print("KERNEL_OK")
</pallas_src>

<mosaic_0001>
module attributes {stable_mosaic.version = 11 : i64} {
  func.func @_srivastava_kernel(%arg0: memref<480x128xf32, #tpu.memory_space<vmem>>, %arg1: memref<3x128x128xf32, #tpu.memory_space<vmem>>, %arg2: memref<3x32x128xf32, #tpu.memory_space<vmem>>, %arg3: memref<3x1x128xf32, #tpu.memory_space<vmem>>, %arg4: memref<3x32x128xf32, #tpu.memory_space<vmem>>, %arg5: memref<3x32x128xf32, #tpu.memory_space<vmem>>, %arg6: memref<3x1x128xf32, #tpu.memory_space<vmem>>, %arg7: memref<32x128xf32, #tpu.memory_space<vmem>>, %arg8: memref<1x128xf32, #tpu.memory_space<vmem>>, %arg9: memref<480x128xf32, #tpu.memory_space<vmem>>, %arg10: memref<400x128xf32, #tpu.memory_space<vmem>>, %arg11: memref<400x128xf32, #tpu.memory_space<vmem>>, %arg12: memref<480x128xf32, #tpu.memory_space<vmem>>, %arg13: memref<400x128xf32, #tpu.memory_space<vmem>>, %arg14: memref<480x32xf32, #tpu.memory_space<vmem>>, %arg15: memref<400x32xf32, #tpu.memory_space<vmem>>) attributes {dimension_semantics = [], scalar_prefetch = 0 : i64, scratch_operands = 5 : i64, tpu.core_type = #tpu.core_type<tc>} {
    %c0 = arith.constant 0 : index
    %c0_0 = arith.constant 0 : index
    %0 = vector.load %arg0[%c0, %c0_0] : memref<480x128xf32, #tpu.memory_space<vmem>>, vector<400x128xf32>
    %c0_1 = arith.constant 0 : index
    %c0_2 = arith.constant 0 : index
    %c0_3 = arith.constant 0 : index
    %1 = vector.load %arg1[%c0_1, %c0_2, %c0_3] : memref<3x128x128xf32, #tpu.memory_space<vmem>>, vector<1x128x128xf32>
    %2 = vector.shape_cast %1 : vector<1x128x128xf32> to vector<128x128xf32>
    %cst = arith.constant dense<0.000000e+00> : vector<400x128xf32>
    %3 = tpu.matmul %0, %2, %cst {dimension_numbers = #tpu.dot_dimension_numbers<[1], [0], [0], [1], [0, 0, 1, 1], [], []>} : vector<400x128xf32>, vector<128x128xf32>, vector<400x128xf32> -> vector<400x128xf32>
    %c0_4 = arith.constant 0 : index
    %c0_5 = arith.constant 0 : index
    %c0_6 = arith.constant 0 : index
    %4 = vector.load %arg3[%c0_4, %c0_5, %c0_6] : memref<3x1x128xf32, #tpu.memory_space<vmem>>, vector<1x1x128xf32>
    %5 = vector.shape_cast %4 : vector<1x1x128xf32> to vector<1x128xf32>
    %6 = vector.broadcast %5 : vector<1x128xf32> to vector<400x128xf32>
    %7 = arith.addf %3, %6 : vector<400x128xf32>
    %c0_7 = arith.constant 0 : index
    %c0_8 = arith.constant 0 : index
    %8 = vector.load %arg11[%c0_7, %c0_8] : memref<400x128xf32, #tpu.memory_space<vmem>>, vector<400x128xf32>
    tpu.vector_store %arg11[%c0_7, %c0_8], %7 {strides = array<i32>} : memref<400x128xf32, #tpu.memory_space<vmem>>, vector<400x128xf32>,
    %c0_9 = arith.constant 0 : index
    %c0_10 = arith.constant 0 : index
    %9 = vector.load %arg0[%c0_9, %c0_10] : memref<480x128xf32, #tpu.memory_space<vmem>>, vector<480x128xf32>
    %c1 = arith.constant 1 : index
    %c0_11 = arith.constant 0 : index
    %c0_12 = arith.constant 0 : index
    %10 = vector.load %arg1[%c1, %c0_11, %c0_12] : memref<3x128x128xf32, #tpu.memory_space<vmem>>, vector<1x128x128xf32>
    %11 = vector.shape_cast %10 : vector<1x128x128xf32> to vector<128x128xf32>
    %cst_13 = arith.constant dense<0.000000e+00> : vector<480x128xf32>
    %12 = tpu.matmul %9, %11, %cst_13 {dimension_numbers = #tpu.dot_dimension_numbers<[1], [0], [0], [1], [0, 0, 1, 1], [], []>} : vector<480x128xf32>, vector<128x128xf32>, vector<480x128xf32> -> vector<480x128xf32>
    %c1_14 = arith.constant 1 : index
    %c0_15 = arith.constant 0 : index
    %c0_16 = arith.constant 0 : index
    %13 = vector.load %arg3[%c1_14, %c0_15, %c0_16] : memref<3x1x128xf32, #tpu.memory_space<vmem>>, vector<1x1x128xf32>
    %14 = vector.shape_cast %13 : vector<1x1x128xf32> to vector<1x128xf32>
    %15 = vector.broadcast %14 : vector<1x128xf32> to vector<480x128xf32>
    %16 = arith.addf %12, %15 : vector<480x128xf32>
    %c0_17 = arith.constant 0 : index
    %c0_18 = arith.constant 0 : index
    %17 = vector.load %arg12[%c0_17, %c0_18] : memref<480x128xf32, #tpu.memory_space<vmem>>, vector<480x128xf32>
    tpu.vector_store %arg12[%c0_17, %c0_18], %16 {strides = array<i32>} : memref<480x128xf32, #tpu.memory_space<vmem>>, vector<480x128xf32>,
    %c2 = arith.constant 2 : index
    %c0_19 = arith.constant 0 : index
    %c0_20 = arith.constant 0 : index
    %18 = vector.load %arg1[%c2, %c0_19, %c0_20] : memref<3x128x128xf32, #tpu.memory_space<vmem>>, vector<1x128x128xf32>
    %19 = vector.shape_cast %18 : vector<1x128x128xf32> to vector<128x128xf32>
    %cst_21 = arith.constant dense<0.000000e+00> : vector<400x128xf32>
    %20 = tpu.matmul %0, %19, %cst_21 {dimension_numbers = #tpu.dot_dimension_numbers<[1], [0], [0], [1], [0, 0, 1, 1], [], []>} : vector<400x128xf32>, vector<128x128xf32>, vector<400x128xf32> -> vector<400x128xf32>
    %c2_22 = arith.constant 2 : index
    %c0_23 = arith.constant 0 : index
    %c0_24 = arith.constant 0 : index
    %21 = vector.load %arg3[%c2_22, %c0_23, %c0_24] : memref<3x1x128xf32, #tpu.memory_space<vmem>>, vector<1x1x128xf32>
    %22 = vector.shape_cast %21 : vector<1x1x128xf32> to vector<1x128xf32>
    %23 = vector.broadcast %22 : vector<1x128xf32> to vector<400x128xf32>
    %24 = arith.addf %20, %23 : vector<400x128xf32>
    %c0_25 = arith.constant 0 : index
    %c0_26 = arith.constant 0 : index
    %25 = vector.load %arg13[%c0_25, %c0_26] : memref<400x128xf32, #tpu.memory_space<vmem>>, vector<400x128xf32>
    tpu.vector_store %arg13[%c0_25, %c0_26], %24 {strides = array<i32>} : memref<400x128xf32, #tpu.memory_space<vmem>>, vector<400x128xf32>,
    %c0_27 = arith.constant 0 : index
    %c0_28 = arith.constant 0 : index
    %c0_29 = arith.constant 0 : index
    %26 = vector.load %arg2[%c0_27, %c0_28, %c0_29] : memref<3x32x128xf32, #tpu.memory_space<vmem>>, vector<1x32x128xf32>
    %27 = vector.shape_cast %26 : vector<1x32x128xf32> to vector<32x128xf32>
    %c0_30 = arith.constant 0 : index
    %c0_31 = arith.constant 0 : index
    %c0_32 = arith.constant 0 : index
    %28 = vector.load %arg4[%c0_30, %c0_31, %c0_32] : memref<3x32x128xf32, #tpu.memory_space<vmem>>, vector<1x32x128xf32>
    %29 = vector.shape_cast %28 : vector<1x32x128xf32> to vector<32x128xf32>
    %c0_33 = arith.constant 0 : index
    %c0_34 = arith.constant 0 : index
    %c0_35 = arith.constant 0 : index
    %30 = vector.load %arg5[%c0_33, %c0_34, %c0_35] : memref<3x32x128xf32, #tpu.memory_space<vmem>>, vector<1x32x128xf32>
    %31 = vector.shape_cast %30 : vector<1x32x128xf32> to vector<32x128xf32>
    %c0_36 = arith.constant 0 : index
    %c0_37 = arith.constant 0 : index
    %c0_38 = arith.constant 0 : index
    %32 = vector.load %arg6[%c0_36, %c0_37, %c0_38] : memref<3x1x128xf32, #tpu.memory_space<vmem>>, vector<1x1x128xf32>
    %33 = vector.shape_cast %32 : vector<1x1x128xf32> to vector<1x128xf32>
    %cst_39 = arith.constant 0.000000e+00 : f32
    %34 = vector.broadcast %cst_39 : f32 to vector<8x32xf32>
    %c0_40 = arith.constant 0 : index
    %c0_41 = arith.constant 0 : index
    %35 = vector.load %arg11[%c0_40, %c0_41] : memref<400x128xf32, #tpu.memory_space<vmem>>, vector<8x128xf32>
    %36 = arith.negf %35 : vector<8x128xf32>
    %37 = math.exp %36 : vector<8x128xf32>
    %cst_42 = arith.constant 1.000000e+00 : f32
    %38 = vector.broadcast %cst_42 : f32 to vector<8x128xf32>
    %39 = arith.addf %38, %37 : vector<8x128xf32>
    %40 = arith.divf %38, %39 : vector<8x128xf32>
    %41 = vector.extract_strided_slice %40 {offsets = [0, 0], sizes = [8, 32], strides = [1, 1]} : vector<8x128xf32> to vector<8x32xf32>
    %42 = vector.extract_strided_slice %40 {offsets = [0, 32], sizes = [8, 32], strides = [1, 1]} : vector<8x128xf32> to vector<8x32xf32>
    %43 = vector.extract_strided_slice %40 {offsets = [0, 64], sizes = [8, 32], strides = [1, 1]} : vector<8x128xf32> to vector<8x32xf32>
    %cst_43 = arith.constant 2.000000e+00 : f32
    %44 = vector.broadcast %cst_43 : f32 to vector<8x32xf32>
    %45 = arith.mulf %44, %43 : vector<8x32xf32>
    %cst_44 = arith.constant 1.000000e+00 : f32
    %46 = vector.broadcast %cst_44 : f32 to vector<8x32xf32>
    %47 = arith.subf %45, %46 : vector<8x32xf32>
    %48 = vector.extract_strided_slice %40 {offsets = [0, 96], sizes = [8, 32], strides = [1, 1]} : vector<8x128xf32> to vector<8x32xf32>
    %49 = arith.mulf %42, %34 : vector<8x32xf32>
    %50 = arith.mulf %41, %47 : vector<8x32xf32>
    %51 = arith.addf %49, %50 : vector<8x32xf32>
    %52 = math.tanh %51 : vector<8x32xf32>
    %53 = arith.mulf %48, %52 : vector<8x32xf32>
    %c1_i32 = arith.constant 1 : i32
    %c49_i32 = arith.constant 49 : i32
    %54 = arith.addi %c1_i32, %c49_i32 : i32
    %c1_i32_45 = arith.constant 1 : i32
    %55:5 = scf.for %arg16 = %c1_i32 to %54 step %c1_i32_45 iter_args(%arg17 = %53, %arg18 = %51, %arg19 = %53, %arg20 = %34, %arg21 = %34) -> (vector<8x32xf32>, vector<8x32xf32>, vector<8x32xf32>, vector<8x32xf32>, vector<8x32xf32>)  : i32 {
      %cst_140 = arith.constant dense<0.000000e+00> : vector<8x128xf32>
      %252 = tpu.matmul %arg19, %29, %cst_140 {dimension_numbers = #tpu.dot_dimension_numbers<[1], [0], [0], [1], [0, 0, 1, 1], [], []>} : vector<8x32xf32>, vector<32x128xf32>, vector<8x128xf32> -> vector<8x128xf32>
      %cst_141 = arith.constant dense<0.000000e+00> : vector<8x128xf32>
      %253 = tpu.matmul %arg20, %31, %cst_141 {dimension_numbers = #tpu.dot_dimension_numbers<[1], [0], [0], [1], [0, 0, 1, 1], [], []>} : vector<8x32xf32>, vector<32x128xf32>, vector<8x128xf32> -> vector<8x128xf32>
      %254 = arith.addf %252, %253 : vector<8x128xf32>
      %255 = vector.broadcast %33 : vector<1x128xf32> to vector<8x128xf32>
      %256 = arith.addf %254, %255 : vector<8x128xf32>
      %257 = arith.negf %256 : vector<8x128xf32>
      %258 = math.exp %257 : vector<8x128xf32>
      %cst_142 = arith.constant 1.000000e+00 : f32
      %259 = vector.broadcast %cst_142 : f32 to vector<8x128xf32>
      %260 = arith.addf %259, %258 : vector<8x128xf32>
      %261 = arith.divf %259, %260 : vector<8x128xf32>
      %262 = vector.extract_strided_slice %261 {offsets = [0, 0], sizes = [8, 32], strides = [1, 1]} : vector<8x128xf32> to vector<8x32xf32>
      %263 = vector.extract_strided_slice %261 {offsets = [0, 32], sizes = [8, 32], strides = [1, 1]} : vector<8x128xf32> to vector<8x32xf32>
      %264 = vector.extract_strided_slice %261 {offsets = [0, 64], sizes = [8, 32], strides = [1, 1]} : vector<8x128xf32> to vector<8x32xf32>
      %cst_143 = arith.constant 2.000000e+00 : f32
      %265 = vector.broadcast %cst_143 : f32 to vector<8x32xf32>
      %266 = arith.mulf %265, %264 : vector<8x32xf32>
      %cst_144 = arith.constant 1.000000e+00 : f32
      %267 = vector.broadcast %cst_144 : f32 to vector<8x32xf32>
      %268 = arith.subf %266, %267 : vector<8x32xf32>
      %269 = vector.extract_strided_slice %261 {offsets = [0, 96], sizes = [8, 32], strides = [1, 1]} : vector<8x128xf32> to vector<8x32xf32>
      %270 = arith.mulf %263, %arg21 : vector<8x32xf32>
      %271 = arith.mulf %262, %268 : vector<8x32xf32>
      %272 = arith.addf %270, %271 : vector<8x32xf32>
      %273 = math.tanh %272 : vector<8x32xf32>
      %274 = arith.mulf %269, %273 : vector<8x32xf32>
      %c8_i32 = arith.constant 8 : i32
      %275 = arith.muli %arg16, %c8_i32 : i32
      %276 = tpu.assume_multiple %275, 8 : i32
      %277 = arith.index_cast %276 : i32 to index
      %c0_145 = arith.constant 0 : index
      %278 = vector.load %arg11[%277, %c0_145] : memref<400x128xf32, #tpu.memory_space<vmem>>, vector<8x128xf32>
      %cst_146 = arith.constant dense<0.000000e+00> : vector<8x128xf32>
      %279 = tpu.matmul %arg17, %27, %cst_146 {dimension_numbers = #tpu.dot_dimension_numbers<[1], [0], [0], [1], [0, 0, 1, 1], [], []>} : vector<8x32xf32>, vector<32x128xf32>, vector<8x128xf32> -> vector<8x128xf32>
      %280 = arith.addf %278, %279 : vector<8x128xf32>
      %281 = arith.negf %280 : vector<8x128xf32>
      %282 = math.exp %281 : vector<8x128xf32>
      %cst_147 = arith.constant 1.000000e+00 : f32
      %283 = vector.broadcast %cst_147 : f32 to vector<8x128xf32>
      %284 = arith.addf %283, %282 : vector<8x128xf32>
      %285 = arith.divf %283, %284 : vector<8x128xf32>
      %286 = vector.extract_strided_slice %285 {offsets = [0, 0], sizes = [8, 32], strides = [1, 1]} : vector<8x128xf32> to vector<8x32xf32>
      %287 = vector.extract_strided_slice %285 {offsets = [0, 32], sizes = [8, 32], strides = [1, 1]} : vector<8x128xf32> to vector<8x32xf32>
      %288 = vector.extract_strided_slice %285 {offsets = [0, 64], sizes = [8, 32], strides = [1, 1]} : vector<8x128xf32> to vector<8x32xf32>
      %cst_148 = arith.constant 2.000000e+00 : f32
      %289 = vector.broadcast %cst_148 : f32 to vector<8x32xf32>
      %290 = arith.mulf %289, %288 : vector<8x32xf32>
      %cst_149 = arith.constant 1.000000e+00 : f32
      %291 = vector.broadcast %cst_149 : f32 to vector<8x32xf32>
      %292 = arith.subf %290, %291 : vector<8x32xf32>
      %293 = vector.extract_strided_slice %285 {offsets = [0, 96], sizes = [8, 32], strides = [1, 1]} : vector<8x128xf32> to vector<8x32xf32>
      %294 = arith.mulf %287, %arg18 : vector<8x32xf32>
      %295 = arith.mulf %286, %292 : vector<8x32xf32>
      %296 = arith.addf %294, %295 : vector<8x32xf32>
      %297 = math.tanh %296 : vector<8x32xf32>
      %298 = arith.mulf %293, %297 : vector<8x32xf32>
      scf.yield %298, %296, %298, %274, %272 : vector<8x32xf32>, vector<8x32xf32>, vector<8x32xf32>, vector<8x32xf32>, vector<8x32xf32>
    }
    %c49_i32_46 = arith.constant 49 : i32
    %cst_47 = arith.constant dense<0.000000e+00> : vector<8x128xf32>
    %56 = tpu.matmul %55#2, %29, %cst_47 {dimension_numbers = #tpu.dot_dimension_numbers<[1], [0], [0], [1], [0, 0, 1, 1], [], []>} : vector<8x32xf32>, vector<32x128xf32>, vector<8x128xf32> -> vector<8x128xf32>
    %cst_48 = arith.constant dense<0.000000e+00> : vector<8x128xf32>
    %57 = tpu.matmul %55#3, %31, %cst_48 {dimension_numbers = #tpu.dot_dimension_numbers<[1], [0], [0], [1], [0, 0, 1, 1], [], []>} : vector<8x32xf32>, vector<32x128xf32>, vector<8x128xf32> -> vector<8x128xf32>
    %58 = arith.addf %56, %57 : vector<8x128xf32>
    %59 = vector.broadcast %33 : vector<1x128xf32> to vector<8x128xf32>
    %60 = arith.addf %58, %59 : vector<8x128xf32>
    %61 = arith.negf %60 : vector<8x128xf32>
    %62 = math.exp %61 : vector<8x128xf32>
    %cst_49 = arith.constant 1.000000e+00 : f32
    %63 = vector.broadcast %cst_49 : f32 to vector<8x128xf32>
    %64 = arith.addf %63, %62 : vector<8x128xf32>
    %65 = arith.divf %63, %64 : vector<8x128xf32>
    %66 = vector.extract_strided_slice %65 {offsets = [0, 0], sizes = [8, 32], strides = [1, 1]} : vector<8x128xf32> to vector<8x32xf32>
    %67 = vector.extract_strided_slice %65 {offsets = [0, 32], sizes = [8, 32], strides = [1, 1]} : vector<8x128xf32> to vector<8x32xf32>
    %68 = vector.extract_strided_slice %65 {offsets = [0, 64], sizes = [8, 32], strides = [1, 1]} : vector<8x128xf32> to vector<8x32xf32>
    %cst_50 = arith.constant 2.000000e+00 : f32
    %69 = vector.broadcast %cst_50 : f32 to vector<8x32xf32>
    %70 = arith.mulf %69, %68 : vector<8x32xf32>
    %cst_51 = arith.constant 1.000000e+00 : f32
    %71 = vector.broadcast %cst_51 : f32 to vector<8x32xf32>
    %72 = arith.subf %70, %71 : vector<8x32xf32>
    %73 = vector.extract_strided_slice %65 {offsets = [0, 96], sizes = [8, 32], strides = [1, 1]} : vector<8x128xf32> to vector<8x32xf32>
    %74 = arith.mulf %67, %55#4 : vector<8x32xf32>
    %75 = arith.mulf %66, %72 : vector<8x32xf32>
    %76 = arith.addf %74, %75 : vector<8x32xf32>
    %77 = math.tanh %76 : vector<8x32xf32>
    %78 = arith.mulf %73, %77 : vector<8x32xf32>
    %c1_52 = arith.constant 1 : index
    %c0_53 = arith.constant 0 : index
    %c0_54 = arith.constant 0 : index
    %79 = vector.load %arg2[%c1_52, %c0_53, %c0_54] : memref<3x32x128xf32, #tpu.memory_space<vmem>>, vector<1x32x128xf32>
    %80 = vector.shape_cast %79 : vector<1x32x128xf32> to vector<32x128xf32>
    %c1_55 = arith.constant 1 : index
    %c0_56 = arith.constant 0 : index
    %c0_57 = arith.constant 0 : index
    %81 = vector.load %arg4[%c1_55, %c0_56, %c0_57] : memref<3x32x128xf32, #tpu.memory_space<vmem>>, vector<1x32x128xf32>
    %82 = vector.shape_cast %81 : vector<1x32x128xf32> to vector<32x128xf32>
    %c1_58 = arith.constant 1 : index
    %c0_59 = arith.constant 0 : index
    %c0_60 = arith.constant 0 : index
    %83 = vector.load %arg5[%c1_58, %c0_59, %c0_60] : memref<3x32x128xf32, #tpu.memory_space<vmem>>, vector<1x32x128xf32>
    %84 = vector.shape_cast %83 : vector<1x32x128xf32> to vector<32x128xf32>
    %c1_61 = arith.constant 1 : index
    %c0_62 = arith.constant 0 : index
    %c0_63 = arith.constant 0 : index
    %85 = vector.load %arg6[%c1_61, %c0_62, %c0_63] : memref<3x1x128xf32, #tpu.memory_space<vmem>>, vector<1x1x128xf32>
    %86 = vector.shape_cast %85 : vector<1x1x128xf32> to vector<1x128xf32>
    %c2_64 = arith.constant 2 : index
    %c0_65 = arith.constant 0 : index
    %c0_66 = arith.constant 0 : index
    %87 = vector.load %arg2[%c2_64, %c0_65, %c0_66] : memref<3x32x128xf32, #tpu.memory_space<vmem>>, vector<1x32x128xf32>
    %88 = vector.shape_cast %87 : vector<1x32x128xf32> to vector<32x128xf32>
    %c2_67 = arith.constant 2 : index
    %c0_68 = arith.constant 0 : index
    %c0_69 = arith.constant 0 : index
    %89 = vector.load %arg4[%c2_67, %c0_68, %c0_69] : memref<3x32x128xf32, #tpu.memory_space<vmem>>, vector<1x32x128xf32>
    %90 = vector.shape_cast %89 : vector<1x32x128xf32> to vector<32x128xf32>
    %c2_70 = arith.constant 2 : index
    %c0_71 = arith.constant 0 : index
    %c0_72 = arith.constant 0 : index
    %91 = vector.load %arg5[%c2_70, %c0_71, %c0_72] : memref<3x32x128xf32, #tpu.memory_space<vmem>>, vector<1x32x128xf32>
    %92 = vector.shape_cast %91 : vector<1x32x128xf32> to vector<32x128xf32>
    %c2_73 = arith.constant 2 : index
    %c0_74 = arith.constant 0 : index
    %c0_75 = arith.constant 0 : index
    %93 = vector.load %arg6[%c2_73, %c0_74, %c0_75] : memref<3x1x128xf32, #tpu.memory_space<vmem>>, vector<1x1x128xf32>
    %94 = vector.shape_cast %93 : vector<1x1x128xf32> to vector<1x128xf32>
    %c0_76 = arith.constant 0 : index
    %c0_77 = arith.constant 0 : index
    %95 = vector.load %arg12[%c0_76, %c0_77] : memref<480x128xf32, #tpu.memory_space<vmem>>, vector<8x128xf32>
    %cst_78 = arith.constant dense<0.000000e+00> : vector<8x128xf32>
    %96 = tpu.matmul %55#0, %80, %cst_78 {dimension_numbers = #tpu.dot_dimension_numbers<[1], [0], [0], [1], [0, 0, 1, 1], [], []>} : vector<8x32xf32>, vector<32x128xf32>, vector<8x128xf32> -> vector<8x128xf32>
    %97 = arith.addf %95, %96 : vector<8x128xf32>
    %98 = arith.negf %97 : vector<8x128xf32>
    %99 = math.exp %98 : vector<8x128xf32>
    %cst_79 = arith.constant 1.000000e+00 : f32
    %100 = vector.broadcast %cst_79 : f32 to vector<8x128xf32>
    %101 = arith.addf %100, %99 : vector<8x128xf32>
    %102 = arith.divf %100, %101 : vector<8x128xf32>
    %103 = vector.extract_strided_slice %102 {offsets = [0, 0], sizes = [8, 32], strides = [1, 1]} : vector<8x128xf32> to vector<8x32xf32>
    %104 = vector.extract_strided_slice %102 {offsets = [0, 32], sizes = [8, 32], strides = [1, 1]} : vector<8x128xf32> to vector<8x32xf32>
    %105 = vector.extract_strided_slice %102 {offsets = [0, 64], sizes = [8, 32], strides = [1, 1]} : vector<8x128xf32> to vector<8x32xf32>
    %cst_80 = arith.constant 2.000000e+00 : f32
    %106 = vector.broadcast %cst_80 : f32 to vector<8x32xf32>
    %107 = arith.mulf %106, %105 : vector<8x32xf32>
    %cst_81 = arith.constant 1.000000e+00 : f32
    %108 = vector.broadcast %cst_81 : f32 to vector<8x32xf32>
    %109 = arith.subf %107, %108 : vector<8x32xf32>
    %110 = vector.extract_strided_slice %102 {offsets = [0, 96], sizes = [8, 32], strides = [1, 1]} : vector<8x128xf32> to vector<8x32xf32>
    %111 = arith.mulf %104, %55#1 : vector<8x32xf32>
    %112 = arith.mulf %103, %109 : vector<8x32xf32>
    %113 = arith.addf %111, %112 : vector<8x32xf32>
    %114 = math.tanh %113 : vector<8x32xf32>
    %115 = arith.mulf %110, %114 : vector<8x32xf32>
    %c392 = arith.constant 392 : index
    %c0_82 = arith.constant 0 : index
    %116 = vector.load %arg13[%c392, %c0_82] : memref<400x128xf32, #tpu.memory_space<vmem>>, vector<8x128xf32>
    %cst_83 = arith.constant dense<0.000000e+00> : vector<8x128xf32>
    %117 = tpu.matmul %55#0, %88, %cst_83 {dimension_numbers = #tpu.dot_dimension_numbers<[1], [0], [0], [1], [0, 0, 1, 1], [], []>} : vector<8x32xf32>, vector<32x128xf32>, vector<8x128xf32> -> vector<8x128xf32>
    %118 = arith.addf %116, %117 : vector<8x128xf32>
    %119 = arith.negf %118 : vector<8x128xf32>
    %120 = math.exp %119 : vector<8x128xf32>
    %cst_84 = arith.constant 1.000000e+00 : f32
    %121 = vector.broadcast %cst_84 : f32 to vector<8x128xf32>
    %122 = arith.addf %121, %120 : vector<8x128xf32>
    %123 = arith.divf %121, %122 : vector<8x128xf32>
    %124 = vector.extract_strided_slice %123 {offsets = [0, 0], sizes = [8, 32], strides = [1, 1]} : vector<8x128xf32> to vector<8x32xf32>
    %125 = vector.extract_strided_slice %123 {offsets = [0, 32], sizes = [8, 32], strides = [1, 1]} : vector<8x128xf32> to vector<8x32xf32>
    %126 = vector.extract_strided_slice %123 {offsets = [0, 64], sizes = [8, 32], strides = [1, 1]} : vector<8x128xf32> to vector<8x32xf32>
    %cst_85 = arith.constant 2.000000e+00 : f32
    %127 = vector.broadcast %cst_85 : f32 to vector<8x32xf32>
    %128 = arith.mulf %127, %126 : vector<8x32xf32>
    %cst_86 = arith.constant 1.000000e+00 : f32
    %129 = vector.broadcast %cst_86 : f32 to vector<8x32xf32>
    %130 = arith.subf %128, %129 : vector<8x32xf32>
    %131 = vector.extract_strided_slice %123 {offsets = [0, 96], sizes = [8, 32], strides = [1, 1]} : vector<8x128xf32> to vector<8x32xf32>
    %132 = arith.mulf %125, %55#1 : vector<8x32xf32>
    %133 = arith.mulf %124, %130 : vector<8x32xf32>
    %134 = arith.addf %132, %133 : vector<8x32xf32>
    %135 = math.tanh %134 : vector<8x32xf32>
    %136 = arith.mulf %131, %135 : vector<8x32xf32>
    %c1_i32_87 = arith.constant 1 : i32
    %c49_i32_88 = arith.constant 49 : i32
    %137 = arith.addi %c1_i32_87, %c49_i32_88 : i32
    %c1_i32_89 = arith.constant 1 : i32
    %138:10 = scf.for %arg16 = %c1_i32_87 to %137 step %c1_i32_89 iter_args(%arg17 = %115, %arg18 = %113, %arg19 = %115, %arg20 = %78, %arg21 = %76, %arg22 = %136, %arg23 = %134, %arg24 = %136, %arg25 = %78, %arg26 = %76) -> (vector<8x32xf32>, vector<8x32xf32>, vector<8x32xf32>, vector<8x32xf32>, vector<8x32xf32>, vector<8x32xf32>, vector<8x32xf32>, vector<8x32xf32>, vector<8x32xf32>, vector<8x32xf32>)  : i32 {
      %c1_i32_140 = arith.constant 1 : i32
      %252 = arith.subi %arg16, %c1_i32_140 : i32
      %c8_i32 = arith.constant 8 : i32
      %253 = arith.muli %252, %c8_i32 : i32
      %254 = tpu.assume_multiple %253, 8 : i32
      %cst_141 = arith.constant dense<0.000000e+00> : vector<8x128xf32>
      %255 = tpu.matmul %arg19, %82, %cst_141 {dimension_numbers = #tpu.dot_dimension_numbers<[1], [0], [0], [1], [0, 0, 1, 1], [], []>} : vector<8x32xf32>, vector<32x128xf32>, vector<8x128xf32> -> vector<8x128xf32>
      %cst_142 = arith.constant dense<0.000000e+00> : vector<8x128xf32>
      %256 = tpu.matmul %arg20, %84, %cst_142 {dimension_numbers = #tpu.dot_dimension_numbers<[1], [0], [0], [1], [0, 0, 1, 1], [], []>} : vector<8x32xf32>, vector<32x128xf32>, vector<8x128xf32> -> vector<8x128xf32>
      %257 = arith.addf %255, %256 : vector<8x128xf32>
      %258 = vector.broadcast %86 : vector<1x128xf32> to vector<8x128xf32>
      %259 = arith.addf %257, %258 : vector<8x128xf32>
      %260 = arith.negf %259 : vector<8x128xf32>
      %261 = math.exp %260 : vector<8x128xf32>
      %cst_143 = arith.constant 1.000000e+00 : f32
      %262 = vector.broadcast %cst_143 : f32 to vector<8x128xf32>
      %263 = arith.addf %262, %261 : vector<8x128xf32>
      %264 = arith.divf %262, %263 : vector<8x128xf32>
      %265 = vector.extract_strided_slice %264 {offsets = [0, 0], sizes = [8, 32], strides = [1, 1]} : vector<8x128xf32> to vector<8x32xf32>
      %266 = vector.extract_strided_slice %264 {offsets = [0, 32], sizes = [8, 32], strides = [1, 1]} : vector<8x128xf32> to vector<8x32xf32>
      %267 = vector.extract_strided_slice %264 {offsets = [0, 64], sizes = [8, 32], strides = [1, 1]} : vector<8x128xf32> to vector<8x32xf32>
      %cst_144 = arith.constant 2.000000e+00 : f32
      %268 = vector.broadcast %cst_144 : f32 to vector<8x32xf32>
      %269 = arith.mulf %268, %267 : vector<8x32xf32>
      %cst_145 = arith.constant 1.000000e+00 : f32
      %270 = vector.broadcast %cst_145 : f32 to vector<8x32xf32>
      %271 = arith.subf %269, %270 : vector<8x32xf32>
      %272 = vector.extract_strided_slice %264 {offsets = [0, 96], sizes = [8, 32], strides = [1, 1]} : vector<8x128xf32> to vector<8x32xf32>
      %273 = arith.mulf %266, %arg21 : vector<8x32xf32>
      %274 = arith.mulf %265, %271 : vector<8x32xf32>
      %275 = arith.addf %273, %274 : vector<8x32xf32>
      %276 = math.tanh %275 : vector<8x32xf32>
      %277 = arith.mulf %272, %276 : vector<8x32xf32>
      %cst_146 = arith.constant dense<0.000000e+00> : vector<8x128xf32>
      %278 = tpu.matmul %arg24, %90, %cst_146 {dimension_numbers = #tpu.dot_dimension_numbers<[1], [0], [0], [1], [0, 0, 1, 1], [], []>} : vector<8x32xf32>, vector<32x128xf32>, vector<8x128xf32> -> vector<8x128xf32>
      %cst_147 = arith.constant dense<0.000000e+00> : vector<8x128xf32>
      %279 = tpu.matmul %arg25, %92, %cst_147 {dimension_numbers = #tpu.dot_dimension_numbers<[1], [0], [0], [1], [0, 0, 1, 1], [], []>} : vector<8x32xf32>, vector<32x128xf32>, vector<8x128xf32> -> vector<8x128xf32>
      %280 = arith.addf %278, %279 : vector<8x128xf32>
      %281 = vector.broadcast %94 : vector<1x128xf32> to vector<8x128xf32>
      %282 = arith.addf %280, %281 : vector<8x128xf32>
      %283 = arith.negf %282 : vector<8x128xf32>
      %284 = math.exp %283 : vector<8x128xf32>
      %cst_148 = arith.constant 1.000000e+00 : f32
      %285 = vector.broadcast %cst_148 : f32 to vector<8x128xf32>
      %286 = arith.addf %285, %284 : vector<8x128xf32>
      %287 = arith.divf %285, %286 : vector<8x128xf32>
      %288 = vector.extract_strided_slice %287 {offsets = [0, 0], sizes = [8, 32], strides = [1, 1]} : vector<8x128xf32> to vector<8x32xf32>
      %289 = vector.extract_strided_slice %287 {offsets = [0, 32], sizes = [8, 32], strides = [1, 1]} : vector<8x128xf32> to vector<8x32xf32>
      %290 = vector.extract_strided_slice %287 {offsets = [0, 64], sizes = [8, 32], strides = [1, 1]} : vector<8x128xf32> to vector<8x32xf32>
      %cst_149 = arith.constant 2.000000e+00 : f32
      %291 = vector.broadcast %cst_149 : f32 to vector<8x32xf32>
      %292 = arith.mulf %291, %290 : vector<8x32xf32>
      %cst_150 = arith.constant 1.000000e+00 : f32
      %293 = vector.broadcast %cst_150 : f32 to vector<8x32xf32>
      %294 = arith.subf %292, %293 : vector<8x32xf32>
      %295 = vector.extract_strided_slice %287 {offsets = [0, 96], sizes = [8, 32], strides = [1, 1]} : vector<8x128xf32> to vector<8x32xf32>
      %296 = arith.mulf %289, %arg26 : vector<8x32xf32>
      %297 = arith.mulf %288, %294 : vector<8x32xf32>
      %298 = arith.addf %296, %297 : vector<8x32xf32>
      %299 = math.tanh %298 : vector<8x32xf32>
      %300 = arith.mulf %295, %299 : vector<8x32xf32>
      %301 = arith.index_cast %254 : i32 to index
      %c0_151 = arith.constant 0 : index
      %302 = vector.load %arg14[%301, %c0_151] : memref<480x32xf32, #tpu.memory_space<vmem>>, vector<8x32xf32>
      tpu.vector_store %arg14[%301, %c0_151], %277 {strides = array<i32>} : memref<480x32xf32, #tpu.memory_space<vmem>>, vector<8x32xf32>,
      %303 = arith.index_cast %254 : i32 to index
      %c0_152 = arith.constant 0 : index
      %304 = vector.load %arg15[%303, %c0_152] : memref<400x32xf32, #tpu.memory_space<vmem>>, vector<8x32xf32>
      tpu.vector_store %arg15[%303, %c0_152], %300 {strides = array<i32>} : memref<400x32xf32, #tpu.memory_space<vmem>>, vector<8x32xf32>,
      %c8_i32_153 = arith.constant 8 : i32
      %305 = arith.muli %arg16, %c8_i32_153 : i32
      %306 = tpu.assume_multiple %305, 8 : i32
      %c49_i32_154 = arith.constant 49 : i32
      %307 = arith.subi %c49_i32_154, %arg16 : i32
      %c8_i32_155 = arith.constant 8 : i32
      %308 = arith.muli %307, %c8_i32_155 : i32
      %309 = tpu.assume_multiple %308, 8 : i32
      %310 = arith.index_cast %306 : i32 to index
      %c0_156 = arith.constant 0 : index
      %311 = vector.load %arg12[%310, %c0_156] : memref<480x128xf32, #tpu.memory_space<vmem>>, vector<8x128xf32>
      %cst_157 = arith.constant dense<0.000000e+00> : vector<8x128xf32>
      %312 = tpu.matmul %arg17, %80, %cst_157 {dimension_numbers = #tpu.dot_dimension_numbers<[1], [0], [0], [1], [0, 0, 1, 1], [], []>} : vector<8x32xf32>, vector<32x128xf32>, vector<8x128xf32> -> vector<8x128xf32>
      %313 = arith.addf %311, %312 : vector<8x128xf32>
      %314 = arith.negf %313 : vector<8x128xf32>
      %315 = math.exp %314 : vector<8x128xf32>
      %cst_158 = arith.constant 1.000000e+00 : f32
      %316 = vector.broadcast %cst_158 : f32 to vector<8x128xf32>
      %317 = arith.addf %316, %315 : vector<8x128xf32>
      %318 = arith.divf %316, %317 : vector<8x128xf32>
      %319 = vector.extract_strided_slice %318 {offsets = [0, 0], sizes = [8, 32], strides = [1, 1]} : vector<8x128xf32> to vector<8x32xf32>
      %320 = vector.extract_strided_slice %318 {offsets = [0, 32], sizes = [8, 32], strides = [1, 1]} : vector<8x128xf32> to vector<8x32xf32>
      %321 = vector.extract_strided_slice %318 {offsets = [0, 64], sizes = [8, 32], strides = [1, 1]} : vector<8x128xf32> to vector<8x32xf32>
      %cst_159 = arith.constant 2.000000e+00 : f32
      %322 = vector.broadcast %cst_159 : f32 to vector<8x32xf32>
      %323 = arith.mulf %322, %321 : vector<8x32xf32>
      %cst_160 = arith.constant 1.000000e+00 : f32
      %324 = vector.broadcast %cst_160 : f32 to vector<8x32xf32>
      %325 = arith.subf %323, %324 : vector<8x32xf32>
      %326 = vector.extract_strided_slice %318 {offsets = [0, 96], sizes = [8, 32], strides = [1, 1]} : vector<8x128xf32> to vector<8x32xf32>
      %327 = arith.mulf %320, %arg18 : vector<8x32xf32>
      %328 = arith.mulf %319, %325 : vector<8x32xf32>
      %329 = arith.addf %327, %328 : vector<8x32xf32>
      %330 = math.tanh %329 : vector<8x32xf32>
      %331 = arith.mulf %326, %330 : vector<8x32xf32>
      %332 = arith.index_cast %309 : i32 to index
      %c0_161 = arith.constant 0 : index
      %333 = vector.load %arg13[%332, %c0_161] : memref<400x128xf32, #tpu.memory_space<vmem>>, vector<8x128xf32>
      %cst_162 = arith.constant dense<0.000000e+00> : vector<8x128xf32>
      %334 = tpu.matmul %arg22, %88, %cst_162 {dimension_numbers = #tpu.dot_dimension_numbers<[1], [0], [0], [1], [0, 0, 1, 1], [], []>} : vector<8x32xf32>, vector<32x128xf32>, vector<8x128xf32> -> vector<8x128xf32>
      %335 = arith.addf %333, %334 : vector<8x128xf32>
      %336 = arith.negf %335 : vector<8x128xf32>
      %337 = math.exp %336 : vector<8x128xf32>
      %cst_163 = arith.constant 1.000000e+00 : f32
      %338 = vector.broadcast %cst_163 : f32 to vector<8x128xf32>
      %339 = arith.addf %338, %337 : vector<8x128xf32>
      %340 = arith.divf %338, %339 : vector<8x128xf32>
      %341 = vector.extract_strided_slice %340 {offsets = [0, 0], sizes = [8, 32], strides = [1, 1]} : vector<8x128xf32> to vector<8x32xf32>
      %342 = vector.extract_strided_slice %340 {offsets = [0, 32], sizes = [8, 32], strides = [1, 1]} : vector<8x128xf32> to vector<8x32xf32>
      %343 = vector.extract_strided_slice %340 {offsets = [0, 64], sizes = [8, 32], strides = [1, 1]} : vector<8x128xf32> to vector<8x32xf32>
      %cst_164 = arith.constant 2.000000e+00 : f32
      %344 = vector.broadcast %cst_164 : f32 to vector<8x32xf32>
      %345 = arith.mulf %344, %343 : vector<8x32xf32>
      %cst_165 = arith.constant 1.000000e+00 : f32
      %346 = vector.broadcast %cst_165 : f32 to vector<8x32xf32>
      %347 = arith.subf %345, %346 : vector<8x32xf32>
      %348 = vector.extract_strided_slice %340 {offsets = [0, 96], sizes = [8, 32], strides = [1, 1]} : vector<8x128xf32> to vector<8x32xf32>
      %349 = arith.mulf %342, %arg23 : vector<8x32xf32>
      %350 = arith.mulf %341, %347 : vector<8x32xf32>
      %351 = arith.addf %349, %350 : vector<8x32xf32>
      %352 = math.tanh %351 : vector<8x32xf32>
      %353 = arith.mulf %348, %352 : vector<8x32xf32>
      scf.yield %331, %329, %331, %277, %275, %353, %351, %353, %300, %298 : vector<8x32xf32>, vector<8x32xf32>, vector<8x32xf32>, vector<8x32xf32>, vector<8x32xf32>, vector<8x32xf32>, vector<8x32xf32>, vector<8x32xf32>, vector<8x32xf32>, vector<8x32xf32>
    }
    %c49_i32_90 = arith.constant 49 : i32
    %cst_91 = arith.constant dense<0.000000e+00> : vector<8x128xf32>
    %139 = tpu.matmul %138#2, %82, %cst_91 {dimension_numbers = #tpu.dot_dimension_numbers<[1], [0], [0], [1], [0, 0, 1, 1], [], []>} : vector<8x32xf32>, vector<32x128xf32>, vector<8x128xf32> -> vector<8x128xf32>
    %cst_92 = arith.constant dense<0.000000e+00> : vector<8x128xf32>
    %140 = tpu.matmul %138#3, %84, %cst_92 {dimension_numbers = #tpu.dot_dimension_numbers<[1], [0], [0], [1], [0, 0, 1, 1], [], []>} : vector<8x32xf32>, vector<32x128xf32>, vector<8x128xf32> -> vector<8x128xf32>
    %141 = arith.addf %139, %140 : vector<8x128xf32>
    %142 = vector.broadcast %86 : vector<1x128xf32> to vector<8x128xf32>
    %143 = arith.addf %141, %142 : vector<8x128xf32>
    %144 = arith.negf %143 : vector<8x128xf32>
    %145 = math.exp %144 : vector<8x128xf32>
    %cst_93 = arith.constant 1.000000e+00 : f32
    %146 = vector.broadcast %cst_93 : f32 to vector<8x128xf32>
    %147 = arith.addf %146, %145 : vector<8x128xf32>
    %148 = arith.divf %146, %147 : vector<8x128xf32>
    %149 = vector.extract_strided_slice %148 {offsets = [0, 0], sizes = [8, 32], strides = [1, 1]} : vector<8x128xf32> to vector<8x32xf32>
    %150 = vector.extract_strided_slice %148 {offsets = [0, 32], sizes = [8, 32], strides = [1, 1]} : vector<8x128xf32> to vector<8x32xf32>
    %151 = vector.extract_strided_slice %148 {offsets = [0, 64], sizes = [8, 32], strides = [1, 1]} : vector<8x128xf32> to vector<8x32xf32>
    %cst_94 = arith.constant 2.000000e+00 : f32
    %152 = vector.broadcast %cst_94 : f32 to vector<8x32xf32>
    %153 = arith.mulf %152, %151 : vector<8x32xf32>
    %cst_95 = arith.constant 1.000000e+00 : f32
    %154 = vector.broadcast %cst_95 : f32 to vector<8x32xf32>
    %155 = arith.subf %153, %154 : vector<8x32xf32>
    %156 = vector.extract_strided_slice %148 {offsets = [0, 96], sizes = [8, 32], strides = [1, 1]} : vector<8x128xf32> to vector<8x32xf32>
    %157 = arith.mulf %150, %138#4 : vector<8x32xf32>
    %158 = arith.mulf %149, %155 : vector<8x32xf32>
    %159 = arith.addf %157, %158 : vector<8x32xf32>
    %160 = math.tanh %159 : vector<8x32xf32>
    %161 = arith.mulf %156, %160 : vector<8x32xf32>
    %cst_96 = arith.constant dense<0.000000e+00> : vector<8x128xf32>
    %162 = tpu.matmul %138#7, %90, %cst_96 {dimension_numbers = #tpu.dot_dimension_numbers<[1], [0], [0], [1], [0, 0, 1, 1], [], []>} : vector<8x32xf32>, vector<32x128xf32>, vector<8x128xf32> -> vector<8x128xf32>
    %cst_97 = arith.constant dense<0.000000e+00> : vector<8x128xf32>
    %163 = tpu.matmul %138#8, %92, %cst_97 {dimension_numbers = #tpu.dot_dimension_numbers<[1], [0], [0], [1], [0, 0, 1, 1], [], []>} : vector<8x32xf32>, vector<32x128xf32>, vector<8x128xf32> -> vector<8x128xf32>
    %164 = arith.addf %162, %163 : vector<8x128xf32>
    %165 = vector.broadcast %94 : vector<1x128xf32> to vector<8x128xf32>
    %166 = arith.addf %164, %165 : vector<8x128xf32>
    %167 = arith.negf %166 : vector<8x128xf32>
    %168 = math.exp %167 : vector<8x128xf32>
    %cst_98 = arith.constant 1.000000e+00 : f32
    %169 = vector.broadcast %cst_98 : f32 to vector<8x128xf32>
    %170 = arith.addf %169, %168 : vector<8x128xf32>
    %171 = arith.divf %169, %170 : vector<8x128xf32>
    %172 = vector.extract_strided_slice %171 {offsets = [0, 0], sizes = [8, 32], strides = [1, 1]} : vector<8x128xf32> to vector<8x32xf32>
    %173 = vector.extract_strided_slice %171 {offsets = [0, 32], sizes = [8, 32], strides = [1, 1]} : vector<8x128xf32> to vector<8x32xf32>
    %174 = vector.extract_strided_slice %171 {offsets = [0, 64], sizes = [8, 32], strides = [1, 1]} : vector<8x128xf32> to vector<8x32xf32>
    %cst_99 = arith.constant 2.000000e+00 : f32
    %175 = vector.broadcast %cst_99 : f32 to vector<8x32xf32>
    %176 = arith.mulf %175, %174 : vector<8x32xf32>
    %cst_100 = arith.constant 1.000000e+00 : f32
    %177 = vector.broadcast %cst_100 : f32 to vector<8x32xf32>
    %178 = arith.subf %176, %177 : vector<8x32xf32>
    %179 = vector.extract_strided_slice %171 {offsets = [0, 96], sizes = [8, 32], strides = [1, 1]} : vector<8x128xf32> to vector<8x32xf32>
    %180 = arith.mulf %173, %138#9 : vector<8x32xf32>
    %181 = arith.mulf %172, %178 : vector<8x32xf32>
    %182 = arith.addf %180, %181 : vector<8x32xf32>
    %183 = math.tanh %182 : vector<8x32xf32>
    %184 = arith.mulf %179, %183 : vector<8x32xf32>
    %c392_101 = arith.constant 392 : index
    %c0_102 = arith.constant 0 : index
    %185 = vector.load %arg14[%c392_101, %c0_102] : memref<480x32xf32, #tpu.memory_space<vmem>>, vector<8x32xf32>
    tpu.vector_store %arg14[%c392_101, %c0_102], %161 {strides = array<i32>} : memref<480x32xf32, #tpu.memory_space<vmem>>, vector<8x32xf32>,
    %c392_103 = arith.constant 392 : index
    %c0_104 = arith.constant 0 : index
    %186 = vector.load %arg15[%c392_103, %c0_104] : memref<400x32xf32, #tpu.memory_space<vmem>>, vector<8x32xf32>
    tpu.vector_store %arg15[%c392_103, %c0_104], %184 {strides = array<i32>} : memref<400x32xf32, #tpu.memory_space<vmem>>, vector<8x32xf32>,
    %c400 = arith.constant 400 : index
    %c0_105 = arith.constant 0 : index
    %187 = vector.load %arg12[%c400, %c0_105] : memref<480x128xf32, #tpu.memory_space<vmem>>, vector<8x128xf32>
    %cst_106 = arith.constant dense<0.000000e+00> : vector<8x128xf32>
    %188 = tpu.matmul %138#0, %80, %cst_106 {dimension_numbers = #tpu.dot_dimension_numbers<[1], [0], [0], [1], [0, 0, 1, 1], [], []>} : vector<8x32xf32>, vector<32x128xf32>, vector<8x128xf32> -> vector<8x128xf32>
    %189 = arith.addf %187, %188 : vector<8x128xf32>
    %190 = arith.negf %189 : vector<8x128xf32>
    %191 = math.exp %190 : vector<8x128xf32>
    %cst_107 = arith.constant 1.000000e+00 : f32
    %192 = vector.broadcast %cst_107 : f32 to vector<8x128xf32>
    %193 = arith.addf %192, %191 : vector<8x128xf32>
    %194 = arith.divf %192, %193 : vector<8x128xf32>
    %195 = vector.extract_strided_slice %194 {offsets = [0, 0], sizes = [8, 32], strides = [1, 1]} : vector<8x128xf32> to vector<8x32xf32>
    %196 = vector.extract_strided_slice %194 {offsets = [0, 32], sizes = [8, 32], strides = [1, 1]} : vector<8x128xf32> to vector<8x32xf32>
    %197 = vector.extract_strided_slice %194 {offsets = [0, 64], sizes = [8, 32], strides = [1, 1]} : vector<8x128xf32> to vector<8x32xf32>
    %cst_108 = arith.constant 2.000000e+00 : f32
    %198 = vector.broadcast %cst_108 : f32 to vector<8x32xf32>
    %199 = arith.mulf %198, %197 : vector<8x32xf32>
    %cst_109 = arith.constant 1.000000e+00 : f32
    %200 = vector.broadcast %cst_109 : f32 to vector<8x32xf32>
    %201 = arith.subf %199, %200 : vector<8x32xf32>
    %202 = vector.extract_strided_slice %194 {offsets = [0, 96], sizes = [8, 32], strides = [1, 1]} : vector<8x128xf32> to vector<8x32xf32>
    %203 = arith.mulf %196, %138#1 : vector<8x32xf32>
    %204 = arith.mulf %195, %201 : vector<8x32xf32>
    %205 = arith.addf %203, %204 : vector<8x32xf32>
    %206 = math.tanh %205 : vector<8x32xf32>
    %207 = arith.mulf %202, %206 : vector<8x32xf32>
    %c51_i32 = arith.constant 51 : i32
    %c9_i32 = arith.constant 9 : i32
    %208 = arith.addi %c51_i32, %c9_i32 : i32
    %c1_i32_110 = arith.constant 1 : i32
    %209:5 = scf.for %arg16 = %c51_i32 to %208 step %c1_i32_110 iter_args(%arg17 = %207, %arg18 = %205, %arg19 = %207, %arg20 = %161, %arg21 = %159) -> (vector<8x32xf32>, vector<8x32xf32>, vector<8x32xf32>, vector<8x32xf32>, vector<8x32xf32>)  : i32 {
      %c1_i32_140 = arith.constant 1 : i32
      %252 = arith.subi %arg16, %c1_i32_140 : i32
      %c8_i32 = arith.constant 8 : i32
      %253 = arith.muli %252, %c8_i32 : i32
      %254 = tpu.assume_multiple %253, 8 : i32
      %cst_141 = arith.constant dense<0.000000e+00> : vector<8x128xf32>
      %255 = tpu.matmul %arg19, %82, %cst_141 {dimension_numbers = #tpu.dot_dimension_numbers<[1], [0], [0], [1], [0, 0, 1, 1], [], []>} : vector<8x32xf32>, vector<32x128xf32>, vector<8x128xf32> -> vector<8x128xf32>
      %cst_142 = arith.constant dense<0.000000e+00> : vector<8x128xf32>
      %256 = tpu.matmul %arg20, %84, %cst_142 {dimension_numbers = #tpu.dot_dimension_numbers<[1], [0], [0], [1], [0, 0, 1, 1], [], []>} : vector<8x32xf32>, vector<32x128xf32>, vector<8x128xf32> -> vector<8x128xf32>
      %257 = arith.addf %255, %256 : vector<8x128xf32>
      %258 = vector.broadcast %86 : vector<1x128xf32> to vector<8x128xf32>
      %259 = arith.addf %257, %258 : vector<8x128xf32>
      %260 = arith.negf %259 : vector<8x128xf32>
      %261 = math.exp %260 : vector<8x128xf32>
      %cst_143 = arith.constant 1.000000e+00 : f32
      %262 = vector.broadcast %cst_143 : f32 to vector<8x128xf32>
      %263 = arith.addf %262, %261 : vector<8x128xf32>
      %264 = arith.divf %262, %263 : vector<8x128xf32>
      %265 = vector.extract_strided_slice %264 {offsets = [0, 0], sizes = [8, 32], strides = [1, 1]} : vector<8x128xf32> to vector<8x32xf32>
      %266 = vector.extract_strided_slice %264 {offsets = [0, 32], sizes = [8, 32], strides = [1, 1]} : vector<8x128xf32> to vector<8x32xf32>
      %267 = vector.extract_strided_slice %264 {offsets = [0, 64], sizes = [8, 32], strides = [1, 1]} : vector<8x128xf32> to vector<8x32xf32>
      %cst_144 = arith.constant 2.000000e+00 : f32
      %268 = vector.broadcast %cst_144 : f32 to vector<8x32xf32>
      %269 = arith.mulf %268, %267 : vector<8x32xf32>
      %cst_145 = arith.constant 1.000000e+00 : f32
      %270 = vector.broadcast %cst_145 : f32 to vector<8x32xf32>
      %271 = arith.subf %269, %270 : vector<8x32xf32>
      %272 = vector.extract_strided_slice %264 {offsets = [0, 96], sizes = [8, 32], strides = [1, 1]} : vector<8x128xf32> to vector<8x32xf32>
      %273 = arith.mulf %266, %arg21 : vector<8x32xf32>
      %274 = arith.mulf %265, %271 : vector<8x32xf32>
      %275 = arith.addf %273, %274 : vector<8x32xf32>
      %276 = math.tanh %275 : vector<8x32xf32>
      %277 = arith.mulf %272, %276 : vector<8x32xf32>
      %278 = arith.index_cast %254 : i32 to index
      %c0_146 = arith.constant 0 : index
      %279 = vector.load %arg14[%278, %c0_146] : memref<480x32xf32, #tpu.memory_space<vmem>>, vector<8x32xf32>
      tpu.vector_store %arg14[%278, %c0_146], %277 {strides = array<i32>} : memref<480x32xf32, #tpu.memory_space<vmem>>, vector<8x32xf32>,
      %c8_i32_147 = arith.constant 8 : i32
      %280 = arith.muli %arg16, %c8_i32_147 : i32
      %281 = tpu.assume_multiple %280, 8 : i32
      %282 = arith.index_cast %281 : i32 to index
      %c0_148 = arith.constant 0 : index
      %283 = vector.load %arg12[%282, %c0_148] : memref<480x128xf32, #tpu.memory_space<vmem>>, vector<8x128xf32>
      %cst_149 = arith.constant dense<0.000000e+00> : vector<8x128xf32>
      %284 = tpu.matmul %arg17, %80, %cst_149 {dimension_numbers = #tpu.dot_dimension_numbers<[1], [0], [0], [1], [0, 0, 1, 1], [], []>} : vector<8x32xf32>, vector<32x128xf32>, vector<8x128xf32> -> vector<8x128xf32>
      %285 = arith.addf %283, %284 : vector<8x128xf32>
      %286 = arith.negf %285 : vector<8x128xf32>
      %287 = math.exp %286 : vector<8x128xf32>
      %cst_150 = arith.constant 1.000000e+00 : f32
      %288 = vector.broadcast %cst_150 : f32 to vector<8x128xf32>
      %289 = arith.addf %288, %287 : vector<8x128xf32>
      %290 = arith.divf %288, %289 : vector<8x128xf32>
      %291 = vector.extract_strided_slice %290 {offsets = [0, 0], sizes = [8, 32], strides = [1, 1]} : vector<8x128xf32> to vector<8x32xf32>
      %292 = vector.extract_strided_slice %290 {offsets = [0, 32], sizes = [8, 32], strides = [1, 1]} : vector<8x128xf32> to vector<8x32xf32>
      %293 = vector.extract_strided_slice %290 {offsets = [0, 64], sizes = [8, 32], strides = [1, 1]} : vector<8x128xf32> to vector<8x32xf32>
      %cst_151 = arith.constant 2.000000e+00 : f32
      %294 = vector.broadcast %cst_151 : f32 to vector<8x32xf32>
      %295 = arith.mulf %294, %293 : vector<8x32xf32>
      %cst_152 = arith.constant 1.000000e+00 : f32
      %296 = vector.broadcast %cst_152 : f32 to vector<8x32xf32>
      %297 = arith.subf %295, %296 : vector<8x32xf32>
      %298 = vector.extract_strided_slice %290 {offsets = [0, 96], sizes = [8, 32], strides = [1, 1]} : vector<8x128xf32> to vector<8x32xf32>
      %299 = arith.mulf %292, %arg18 : vector<8x32xf32>
      %300 = arith.mulf %291, %297 : vector<8x32xf32>
      %301 = arith.addf %299, %300 : vector<8x32xf32>
      %302 = math.tanh %301 : vector<8x32xf32>
      %303 = arith.mulf %298, %302 : vector<8x32xf32>
      scf.yield %303, %301, %303, %277, %275 : vector<8x32xf32>, vector<8x32xf32>, vector<8x32xf32>, vector<8x32xf32>, vector<8x32xf32>
    }
    %c9_i32_111 = arith.constant 9 : i32
    %cst_112 = arith.constant dense<0.000000e+00> : vector<8x128xf32>
    %210 = tpu.matmul %209#2, %82, %cst_112 {dimension_numbers = #tpu.dot_dimension_numbers<[1], [0], [0], [1], [0, 0, 1, 1], [], []>} : vector<8x32xf32>, vector<32x128xf32>, vector<8x128xf32> -> vector<8x128xf32>
    %cst_113 = arith.constant dense<0.000000e+00> : vector<8x128xf32>
    %211 = tpu.matmul %209#3, %84, %cst_113 {dimension_numbers = #tpu.dot_dimension_numbers<[1], [0], [0], [1], [0, 0, 1, 1], [], []>} : vector<8x32xf32>, vector<32x128xf32>, vector<8x128xf32> -> vector<8x128xf32>
    %212 = arith.addf %210, %211 : vector<8x128xf32>
    %213 = vector.broadcast %86 : vector<1x128xf32> to vector<8x128xf32>
    %214 = arith.addf %212, %213 : vector<8x128xf32>
    %215 = arith.negf %214 : vector<8x128xf32>
    %216 = math.exp %215 : vector<8x128xf32>
    %cst_114 = arith.constant 1.000000e+00 : f32
    %217 = vector.broadcast %cst_114 : f32 to vector<8x128xf32>
    %218 = arith.addf %217, %216 : vector<8x128xf32>
    %219 = arith.divf %217, %218 : vector<8x128xf32>
    %220 = vector.extract_strided_slice %219 {offsets = [0, 0], sizes = [8, 32], strides = [1, 1]} : vector<8x128xf32> to vector<8x32xf32>
    %221 = vector.extract_strided_slice %219 {offsets = [0, 32], sizes = [8, 32], strides = [1, 1]} : vector<8x128xf32> to vector<8x32xf32>
    %222 = vector.extract_strided_slice %219 {offsets = [0, 64], sizes = [8, 32], strides = [1, 1]} : vector<8x128xf32> to vector<8x32xf32>
    %cst_115 = arith.constant 2.000000e+00 : f32
    %223 = vector.broadcast %cst_115 : f32 to vector<8x32xf32>
    %224 = arith.mulf %223, %222 : vector<8x32xf32>
    %cst_116 = arith.constant 1.000000e+00 : f32
    %225 = vector.broadcast %cst_116 : f32 to vector<8x32xf32>
    %226 = arith.subf %224, %225 : vector<8x32xf32>
    %227 = vector.extract_strided_slice %219 {offsets = [0, 96], sizes = [8, 32], strides = [1, 1]} : vector<8x128xf32> to vector<8x32xf32>
    %228 = arith.mulf %221, %209#4 : vector<8x32xf32>
    %229 = arith.mulf %220, %226 : vector<8x32xf32>
    %230 = arith.addf %228, %229 : vector<8x32xf32>
    %231 = math.tanh %230 : vector<8x32xf32>
    %232 = arith.mulf %227, %231 : vector<8x32xf32>
    %c472 = arith.constant 472 : index
    %c0_117 = arith.constant 0 : index
    %233 = vector.load %arg14[%c472, %c0_117] : memref<480x32xf32, #tpu.memory_space<vmem>>, vector<8x32xf32>
    tpu.vector_store %arg14[%c472, %c0_117], %232 {strides = array<i32>} : memref<480x32xf32, #tpu.memory_space<vmem>>, vector<8x32xf32>,
    %c0_118 = arith.constant 0 : index
    %c0_119 = arith.constant 0 : index
    %234 = vector.load %arg14[%c0_118, %c0_119] : memref<480x32xf32, #tpu.memory_space<vmem>>, vector<480x32xf32>
    %c0_120 = arith.constant 0 : index
    %c0_121 = arith.constant 0 : index
    %235 = vector.load %arg7[%c0_120, %c0_121] : memref<32x128xf32, #tpu.memory_space<vmem>>, vector<32x128xf32>
    %cst_122 = arith.constant dense<0.000000e+00> : vector<480x128xf32>
    %236 = tpu.matmul %234, %235, %cst_122 {dimension_numbers = #tpu.dot_dimension_numbers<[1], [0], [0], [1], [0, 0, 1, 1], [], []>} : vector<480x32xf32>, vector<32x128xf32>, vector<480x128xf32> -> vector<480x128xf32>
    %c0_123 = arith.constant 0 : index
    %c0_124 = arith.constant 0 : index
    %237 = vector.load %arg8[%c0_123, %c0_124] : memref<1x128xf32, #tpu.memory_space<vmem>>, vector<1x128xf32>
    %238 = vector.broadcast %237 : vector<1x128xf32> to vector<480x128xf32>
    %239 = arith.addf %236, %238 : vector<480x128xf32>
    %c0_125 = arith.constant 0 : index
    %c0_126 = arith.constant 0 : index
    %240 = vector.load %arg0[%c0_125, %c0_126] : memref<480x128xf32, #tpu.memory_space<vmem>>, vector<480x128xf32>
    %241 = arith.addf %239, %240 : vector<480x128xf32>
    %c0_127 = arith.constant 0 : index
    %c0_128 = arith.constant 0 : index
    %242 = vector.load %arg9[%c0_127, %c0_128] : memref<480x128xf32, #tpu.memory_space<vmem>>, vector<480x128xf32>
    tpu.vector_store %arg9[%c0_127, %c0_128], %241 {strides = array<i32>} : memref<480x128xf32, #tpu.memory_space<vmem>>, vector<480x128xf32>,
    %c0_129 = arith.constant 0 : index
    %c0_130 = arith.constant 0 : index
    %243 = vector.load %arg15[%c0_129, %c0_130] : memref<400x32xf32, #tpu.memory_space<vmem>>, vector<400x32xf32>
    %c0_131 = arith.constant 0 : index
    %c0_132 = arith.constant 0 : index
    %244 = vector.load %arg7[%c0_131, %c0_132] : memref<32x128xf32, #tpu.memory_space<vmem>>, vector<32x128xf32>
    %cst_133 = arith.constant dense<0.000000e+00> : vector<400x128xf32>
    %245 = tpu.matmul %243, %244, %cst_133 {dimension_numbers = #tpu.dot_dimension_numbers<[1], [0], [0], [1], [0, 0, 1, 1], [], []>} : vector<400x32xf32>, vector<32x128xf32>, vector<400x128xf32> -> vector<400x128xf32>
    %c0_134 = arith.constant 0 : index
    %c0_135 = arith.constant 0 : index
    %246 = vector.load %arg8[%c0_134, %c0_135] : memref<1x128xf32, #tpu.memory_space<vmem>>, vector<1x128xf32>
    %247 = vector.broadcast %246 : vector<1x128xf32> to vector<400x128xf32>
    %248 = arith.addf %245, %247 : vector<400x128xf32>
    %c0_136 = arith.constant 0 : index
    %c0_137 = arith.constant 0 : index
    %249 = vector.load %arg0[%c0_136, %c0_137] : memref<480x128xf32, #tpu.memory_space<vmem>>, vector<400x128xf32>
    %250 = arith.addf %248, %249 : vector<400x128xf32>
    %c0_138 = arith.constant 0 : index
    %c0_139 = arith.constant 0 : index
    %251 = vector.load %arg10[%c0_138, %c0_139] : memref<400x128xf32, #tpu.memory_space<vmem>>, vector<400x128xf32>
    tpu.vector_store %arg10[%c0_138, %c0_139], %250 {strides = array<i32>} : memref<400x128xf32, #tpu.memory_space<vmem>>, vector<400x128xf32>,
    return
  }
}

</mosaic_0001>

<llo_original>
// kernel: srivastava_lstm_forward.1
$region0: #{srivastava_lstm_forward.1}
  #allocation0 [shape = 'u32[]', space=smem, size = 0x4, offset = 0x4, fixed_abs, tag = 'smem constant byte address 0x4 - core index']
  #allocation1 [shape = 'u32[72,128]{1,0:T(1,128)}', space=vmem, size = 0x9000, scoped, tag = 'internal scratch']
  #allocation2 [shape = 'f32[400,128]{1,0:T(8,128)}', space=vmem, size = 0x32000, scoped, tag = 'scratch operand']
  #allocation3 [shape = 'f32[480,128]{1,0:T(8,128)}', space=vmem, size = 0x3c000, scoped, tag = 'scratch operand']
  #allocation4 [shape = 'f32[400,128]{1,0:T(8,128)}', space=vmem, size = 0x32000, scoped, tag = 'scratch operand']
  #allocation5 [shape = 'f32[480,32]{1,0:T(8,128)}', space=vmem, size = 0x3c000, scoped, tag = 'scratch operand']
  #allocation6 [shape = 'f32[400,32]{1,0:T(8,128)}', space=vmem, size = 0x32000, scoped, tag = 'scratch operand']
  %s0 = inlined_call_operand.vmem [shape: f32[480,128], index: 0, kind: input, shape index: {}]
  %s1 = inlined_call_operand.vmem [shape: f32[3,128,128], index: 1, kind: input, shape index: {}]
  %s2 = inlined_call_operand.vmem [shape: f32[3,32,128], index: 2, kind: input, shape index: {}]
  %s3 = inlined_call_operand.vmem [shape: f32[3,1,128], index: 3, kind: input, shape index: {}]
  %s4 = inlined_call_operand.vmem [shape: f32[3,32,128], index: 4, kind: input, shape index: {}]
  %s5 = inlined_call_operand.vmem [shape: f32[3,32,128], index: 5, kind: input, shape index: {}]
  %s6 = inlined_call_operand.vmem [shape: f32[3,1,128], index: 6, kind: input, shape index: {}]
  %s7 = inlined_call_operand.vmem [shape: f32[32,128], index: 7, kind: input, shape index: {}]
  %s8 = inlined_call_operand.vmem [shape: f32[1,128], index: 8, kind: input, shape index: {}]
  %s9 = inlined_call_operand.vmem [shape: f32[480,128], index: 9, kind: output, shape index: {0}]
  %s10 = inlined_call_operand.vmem [shape: f32[400,128], index: 10, kind: output, shape index: {1}]
  %11 = xla_tuple %s9, %s10
  %s12 = sld [smem:[#allocation0]]
  $region75: #{srivastava_lstm_forward.1} parent=0
    _
  %s14 = ssub.s32 1, %s12
  %s15 = scalar_select 0, %s14, %s12
  // Predicated region
  $region2: #{srivastava_lstm_forward.1} parent=0 // pred_check
    _
  $region3: #{srivastava_lstm_forward.1} parent=0 // pred_check_branch
    %17 = sbr.rel (0) target = $region5
  $region4: #{srivastava_lstm_forward.1} parent=0 // pred_region
    _
  $region5: #{srivastava_lstm_forward.1} parent=0 // pred_fallthru
    _
  // Predicated region
  $region6: #{srivastava_lstm_forward.1} parent=0 // pred_check
    _
  $region7: #{srivastava_lstm_forward.1} parent=0 // pred_check_branch
    %19 = sbr.rel (0) target = $region9
  $region8: #{srivastava_lstm_forward.1} parent=0 // pred_region
    _
  $region9: #{srivastava_lstm_forward.1} parent=0 // pred_fallthru
    _
  // Predicated region
  $region10: #{srivastava_lstm_forward.1} parent=0 // pred_check
    _
  $region11: #{srivastava_lstm_forward.1} parent=0 // pred_check_branch
    %21 = sbr.rel (0) target = $region13
  $region12: #{srivastava_lstm_forward.1} parent=0 // pred_region
    _
  $region13: #{srivastava_lstm_forward.1} parent=0 // pred_fallthru
    _
  // Predicated region
  $region14: #{srivastava_lstm_forward.1} parent=0 // pred_check
    _
  $region15: #{srivastava_lstm_forward.1} parent=0 // pred_check_branch
    %23 = sbr.rel (0) target = $region17
  $region16: #{srivastava_lstm_forward.1} parent=0 // pred_region
    _
  $region17: #{srivastava_lstm_forward.1} parent=0 // pred_fallthru
    _
  // Predicated region
  $region18: #{srivastava_lstm_forward.1} parent=0 // pred_check
    _
  $region19: #{srivastava_lstm_forward.1} parent=0 // pred_check_branch
    %25 = sbr.rel (0) target = $region21
  $region20: #{srivastava_lstm_forward.1} parent=0 // pred_region
    _
  $region21: #{srivastava_lstm_forward.1} parent=0 // pred_fallthru
    _
  // Predicated region
  $region22: #{srivastava_lstm_forward.1} parent=0 // pred_check
    _
  $region23: #{srivastava_lstm_forward.1} parent=0 // pred_check_branch
    %27 = sbr.rel (0) target = $region25
  $region24: #{srivastava_lstm_forward.1} parent=0 // pred_region
    _
  $region25: #{srivastava_lstm_forward.1} parent=0 // pred_fallthru
    _
  // Predicated region
  $region26: #{srivastava_lstm_forward.1} parent=0 // pred_check
    _
  $region27: #{srivastava_lstm_forward.1} parent=0 // pred_check_branch
    %29 = sbr.rel (0) target = $region29
  $region28: #{srivastava_lstm_forward.1} parent=0 // pred_region
    _
  $region29: #{srivastava_lstm_forward.1} parent=0 // pred_fallthru
    _
  // Predicated region
  $region30: #{srivastava_lstm_forward.1} parent=0 // pred_check
    _
  $region31: #{srivastava_lstm_forward.1} parent=0 // pred_check_branch
    %31 = sbr.rel (0) target = $region33
  $region32: #{srivastava_lstm_forward.1} parent=0 // pred_region
    _
  $region33: #{srivastava_lstm_forward.1} parent=0 // pred_fallthru
    _
  // Predicated region
  $region34: #{srivastava_lstm_forward.1} parent=0 // pred_check
    _
  $region35: #{srivastava_lstm_forward.1} parent=0 // pred_check_branch
    %33 = sbr.rel (0) target = $region37
  $region36: #{srivastava_lstm_forward.1} parent=0 // pred_region
    _
  $region37: #{srivastava_lstm_forward.1} parent=0 // pred_fallthru
    _
  %v34 = vld [vmem:[%s0] sm:$0xff]
  %v35 = vld [vmem:[%s0 + $0x8] sm:$0xff]
  %v36 = vld [vmem:[%s0 + $0x10] sm:$0xff]
  %v37 = vld [vmem:[%s0 + $0x18] sm:$0xff]
  %v38 = vld [vmem:[%s0 + $0x20] sm:$0xff]
  %v39 = vld [vmem:[%s0 + $0x28] sm:$0xff]
  %v40 = vld [vmem:[%s0 + $0x30] sm:$0xff]
  %v41 = vld [vmem:[%s0 + $0x38] sm:$0xff]
  %v42 = vld [vmem:[%s0 + $0x40] sm:$0xff]
  %v43 = vld [vmem:[%s0 + $0x48] sm:$0xff]
  %v44 = vld [vmem:[%s0 + $0x50] sm:$0xff]
  %v45 = vld [vmem:[%s0 + $0x58] sm:$0xff]
  %v46 = vld [vmem:[%s0 + $0x60] sm:$0xff]
  %v47 = vld [vmem:[%s0 + $0x68] sm:$0xff]
  %v48 = vld [vmem:[%s0 + $0x70] sm:$0xff]
  %v49 = vld [vmem:[%s0 + $0x78] sm:$0xff]
  %v50 = vld [vmem:[%s0 + $0x80] sm:$0xff]
  %v51 = vld [vmem:[%s0 + $0x88] sm:$0xff]
  %v52 = vld [vmem:[%s0 + $0x90] sm:$0xff]
  %v53 = vld [vmem:[%s0 + $0x98] sm:$0xff]
  %v54 = vld [vmem:[%s0 + $0xa0] sm:$0xff]
  %v55 = vld [vmem:[%s0 + $0xa8] sm:$0xff]
  %v56 = vld [vmem:[%s0 + $0xb0] sm:$0xff]
  %v57 = vld [vmem:[%s0 + $0xb8] sm:$0xff]
  %v58 = vld [vmem:[%s0 + $0xc0] sm:$0xff]
  %v59 = vld [vmem:[%s0 + $0xc8] sm:$0xff]
  %v60 = vld [vmem:[%s0 + $0xd0] sm:$0xff]
  %v61 = vld [vmem:[%s0 + $0xd8] sm:$0xff]
  %v62 = vld [vmem:[%s0 + $0xe0] sm:$0xff]
  %v63 = vld [vmem:[%s0 + $0xe8] sm:$0xff]
  %v64 = vld [vmem:[%s0 + $0xf0] sm:$0xff]
  %v65 = vld [vmem:[%s0 + $0xf8] sm:$0xff]
  %v66 = vld [vmem:[%s0 + $0x100] sm:$0xff]
  %v67 = vld [vmem:[%s0 + $0x108] sm:$0xff]
  %v68 = vld [vmem:[%s0 + $0x110] sm:$0xff]
  %v69 = vld [vmem:[%s0 + $0x118] sm:$0xff]
  %v70 = vld [vmem:[%s0 + $0x120] sm:$0xff]
  %v71 = vld [vmem:[%s0 + $0x128] sm:$0xff]
  %v72 = vld [vmem:[%s0 + $0x130] sm:$0xff]
  %v73 = vld [vmem:[%s0 + $0x138] sm:$0xff]
  %v74 = vld [vmem:[%s0 + $0x140] sm:$0xff]
  %v75 = vld [vmem:[%s0 + $0x148] sm:$0xff]
  %v76 = vld [vmem:[%s0 + $0x150] sm:$0xff]
  %v77 = vld [vmem:[%s0 + $0x158] sm:$0xff]
  %v78 = vld [vmem:[%s0 + $0x160] sm:$0xff]
  %v79 = vld [vmem:[%s0 + $0x168] sm:$0xff]
  %v80 = vld [vmem:[%s0 + $0x170] sm:$0xff]
  %v81 = vld [vmem:[%s0 + $0x178] sm:$0xff]
  %v82 = vld [vmem:[%s0 + $0x180] sm:$0xff]
  %v83 = vld [vmem:[%s0 + $0x188] sm:$0xff]
  %v84 = vld [vmem:[%s1] sm:$0xff]
  %v85 = vld [vmem:[%s1 + $0x8] sm:$0xff]
  %v86 = vld [vmem:[%s1 + $0x10] sm:$0xff]
  %v87 = vld [vmem:[%s1 + $0x18] sm:$0xff]
  %v88 = vld [vmem:[%s1 + $0x20] sm:$0xff]
  %v89 = vld [vmem:[%s1 + $0x28] sm:$0xff]
  %v90 = vld [vmem:[%s1 + $0x30] sm:$0xff]
  %v91 = vld [vmem:[%s1 + $0x38] sm:$0xff]
  %v92 = vld [vmem:[%s1 + $0x40] sm:$0xff]
  %v93 = vld [vmem:[%s1 + $0x48] sm:$0xff]
  %v94 = vld [vmem:[%s1 + $0x50] sm:$0xff]
  %v95 = vld [vmem:[%s1 + $0x58] sm:$0xff]
  %v96 = vld [vmem:[%s1 + $0x60] sm:$0xff]
  %v97 = vld [vmem:[%s1 + $0x68] sm:$0xff]
  %v98 = vld [vmem:[%s1 + $0x70] sm:$0xff]
  %v99 = vld [vmem:[%s1 + $0x78] sm:$0xff]
  %v100 = vld [vmem:[%s3] sm:$0x1]
  %v102 = vperm.slane %v100, 0
  %104 = vmatpush.msra.mxu0 %v99
  %105 = vmatpush.msra.mxu0 %v98
  %106 = vmatpush.msra.mxu0 %v97
  %107 = vmatpush.msra.mxu0 %v96
  %108 = vmatpush.msra.mxu0 %v95
  %109 = vmatpush.msra.mxu0 %v94
  %110 = vmatpush.msra.mxu0 %v93
  %111 = vmatpush.msra.mxu0 %v92
  %112 = vmatpush.msra.mxu0 %v91
  %113 = vmatpush.msra.mxu0 %v90
  %114 = vmatpush.msra.mxu0 %v89
  %115 = vmatpush.msra.mxu0 %v88
  %116 = vmatpush.msra.mxu0 %v87
  %117 = vmatpush.msra.mxu0 %v86
  %118 = vmatpush.msra.mxu0 %v85
  %119 = vmatpush.msra.mxu0 %v84
  %120 = vmatmul.f32.gmra.mxu0 %v34
  %v121 = vpop.f32.mrf.mxu0
  %v122 = vadd.f32 %v102, %v121
  %123 = vmatmul.f32.gmra.mxu0 %v35
  %v124 = vpop.f32.mrf.mxu0
  %v125 = vadd.f32 %v102, %v124
  %126 = vmatmul.f32.gmra.mxu0 %v36
  %v127 = vpop.f32.mrf.mxu0
  %v128 = vadd.f32 %v102, %v127
  %129 = vmatmul.f32.gmra.mxu0 %v37
  %v130 = vpop.f32.mrf.mxu0
  %v131 = vadd.f32 %v102, %v130
  %132 = vmatmul.f32.gmra.mxu0 %v38
  %v133 = vpop.f32.mrf.mxu0
  %v134 = vadd.f32 %v102, %v133
  %135 = vmatmul.f32.gmra.mxu0 %v39
  %v136 = vpop.f32.mrf.mxu0
  %v137 = vadd.f32 %v102, %v136
  %138 = vmatmul.f32.gmra.mxu0 %v40
  %v139 = vpop.f32.mrf.mxu0
  %v140 = vadd.f32 %v102, %v139
  %141 = vmatmul.f32.gmra.mxu0 %v41
  %v142 = vpop.f32.mrf.mxu0
  %v143 = vadd.f32 %v102, %v142
  %144 = vmatmul.f32.gmra.mxu0 %v42
  %v145 = vpop.f32.mrf.mxu0
  %v146 = vadd.f32 %v102, %v145
  %147 = vmatmul.f32.gmra.mxu0 %v43
  %v148 = vpop.f32.mrf.mxu0
  %v149 = vadd.f32 %v102, %v148
  %150 = vmatmul.f32.gmra.mxu0 %v44
  %v151 = vpop.f32.mrf.mxu0
  %v152 = vadd.f32 %v102, %v151
  %153 = vmatmul.f32.gmra.mxu0 %v45
  %v154 = vpop.f32.mrf.mxu0
  %v155 = vadd.f32 %v102, %v154
  %156 = vmatmul.f32.gmra.mxu0 %v46
  %v157 = vpop.f32.mrf.mxu0
  %v158 = vadd.f32 %v102, %v157
  %159 = vmatmul.f32.gmra.mxu0 %v47
  %v160 = vpop.f32.mrf.mxu0
  %v161 = vadd.f32 %v102, %v160
  %162 = vmatmul.f32.gmra.mxu0 %v48
  %v163 = vpop.f32.mrf.mxu0
  %v164 = vadd.f32 %v102, %v163
  %165 = vmatmul.f32.gmra.mxu0 %v49
  %v166 = vpop.f32.mrf.mxu0
  %v167 = vadd.f32 %v102, %v166
  %168 = vmatmul.f32.gmra.mxu0 %v50
  %v169 = vpop.f32.mrf.mxu0
  %v170 = vadd.f32 %v102, %v169
  %171 = vmatmul.f32.gmra.mxu0 %v51
  %v172 = vpop.f32.mrf.mxu0
  %v173 = vadd.f32 %v102, %v172
  %174 = vmatmul.f32.gmra.mxu0 %v52
  %v175 = vpop.f32.mrf.mxu0
  %v176 = vadd.f32 %v102, %v175
  %177 = vmatmul.f32.gmra.mxu0 %v53
  %v178 = vpop.f32.mrf.mxu0
  %v179 = vadd.f32 %v102, %v178
  %180 = vmatmul.f32.gmra.mxu0 %v54
  %v181 = vpop.f32.mrf.mxu0
  %v182 = vadd.f32 %v102, %v181
  %183 = vmatmul.f32.gmra.mxu0 %v55
  %v184 = vpop.f32.mrf.mxu0
  %v185 = vadd.f32 %v102, %v184
  %186 = vmatmul.f32.gmra.mxu0 %v56
  %v187 = vpop.f32.mrf.mxu0
  %v188 = vadd.f32 %v102, %v187
  %189 = vmatmul.f32.gmra.mxu0 %v57
  %v190 = vpop.f32.mrf.mxu0
  %v191 = vadd.f32 %v102, %v190
  %192 = vmatmul.f32.gmra.mxu0 %v58
  %v193 = vpop.f32.mrf.mxu0
  %v194 = vadd.f32 %v102, %v193
  %195 = vmatmul.f32.gmra.mxu0 %v59
  %v196 = vpop.f32.mrf.mxu0
  %v197 = vadd.f32 %v102, %v196
  %198 = vmatmul.f32.gmra.mxu0 %v60
  %v199 = vpop.f32.mrf.mxu0
  %v200 = vadd.f32 %v102, %v199
  %201 = vmatmul.f32.gmra.mxu0 %v61
  %v202 = vpop.f32.mrf.mxu0
  %v203 = vadd.f32 %v102, %v202
  %204 = vmatmul.f32.gmra.mxu0 %v62
  %v205 = vpop.f32.mrf.mxu0
  %v206 = vadd.f32 %v102, %v205
  %207 = vmatmul.f32.gmra.mxu0 %v63
  %v208 = vpop.f32.mrf.mxu0
  %v209 = vadd.f32 %v102, %v208
  %210 = vmatmul.f32.gmra.mxu0 %v64
  %v211 = vpop.f32.mrf.mxu0
  %v212 = vadd.f32 %v102, %v211
  %213 = vmatmul.f32.gmra.mxu0 %v65
  %v214 = vpop.f32.mrf.mxu0
  %v215 = vadd.f32 %v102, %v214
  %216 = vmatmul.f32.gmra.mxu0 %v66
  %v217 = vpop.f32.mrf.mxu0
  %v218 = vadd.f32 %v102, %v217
  %219 = vmatmul.f32.gmra.mxu0 %v67
  %v220 = vpop.f32.mrf.mxu0
  %v221 = vadd.f32 %v102, %v220
  %222 = vmatmul.f32.gmra.mxu0 %v68
  %v223 = vpop.f32.mrf.mxu0
  %v224 = vadd.f32 %v102, %v223
  %225 = vmatmul.f32.gmra.mxu0 %v69
  %v226 = vpop.f32.mrf.mxu0
  %v227 = vadd.f32 %v102, %v226
  %228 = vmatmul.f32.gmra.mxu0 %v70
  %v229 = vpop.f32.mrf.mxu0
  %v230 = vadd.f32 %v102, %v229
  %231 = vmatmul.f32.gmra.mxu0 %v71
  %v232 = vpop.f32.mrf.mxu0
  %v233 = vadd.f32 %v102, %v232
  %234 = vmatmul.f32.gmra.mxu0 %v72
  %v235 = vpop.f32.mrf.mxu0
  %v236 = vadd.f32 %v102, %v235
  %237 = vmatmul.f32.gmra.mxu0 %v73
  %v238 = vpop.f32.mrf.mxu0
  %v239 = vadd.f32 %v102, %v238
  %240 = vmatmul.f32.gmra.mxu0 %v74
  %v241 = vpop.f32.mrf.mxu0
  %v242 = vadd.f32 %v102, %v241
  %243 = vmatmul.f32.gmra.mxu0 %v75
  %v244 = vpop.f32.mrf.mxu0
  %v245 = vadd.f32 %v102, %v244
  %246 = vmatmul.f32.gmra.mxu0 %v76
  %v247 = vpop.f32.mrf.mxu0
  %v248 = vadd.f32 %v102, %v247
  %249 = vmatmul.f32.gmra.mxu0 %v77
  %v250 = vpop.f32.mrf.mxu0
  %v251 = vadd.f32 %v102, %v250
  %252 = vmatmul.f32.gmra.mxu0 %v78
  %v253 = vpop.f32.mrf.mxu0
  %v254 = vadd.f32 %v102, %v253
  %255 = vmatmul.f32.gmra.mxu0 %v79
  %v256 = vpop.f32.mrf.mxu0
  %v257 = vadd.f32 %v102, %v256
  %258 = vmatmul.f32.gmra.mxu0 %v80
  %v259 = vpop.f32.mrf.mxu0
  %v260 = vadd.f32 %v102, %v259
  %261 = vmatmul.f32.gmra.mxu0 %v81
  %v262 = vpop.f32.mrf.mxu0
  %v263 = vadd.f32 %v102, %v262
  %264 = vmatmul.f32.gmra.mxu0 %v82
  %v265 = vpop.f32.mrf.mxu0
  %v266 = vadd.f32 %v102, %v265
  %267 = vmatmul.f32.gmra.mxu0 %v83
  %v268 = vpop.f32.mrf.mxu0
  %v269 = vadd.f32 %v102, %v268
  %270 = vdwg.mxu0
  %271 = vst [vmem:[#allocation2] sm:$0xff] %v122
  %272 = vst [vmem:[#allocation2 + $0x8] sm:$0xff] %v125
  %273 = vst [vmem:[#allocation2 + $0x10] sm:$0xff] %v128
  %274 = vst [vmem:[#allocation2 + $0x18] sm:$0xff] %v131
  %275 = vst [vmem:[#allocation2 + $0x20] sm:$0xff] %v134
  %276 = vst [vmem:[#allocation2 + $0x28] sm:$0xff] %v137
  %277 = vst [vmem:[#allocation2 + $0x30] sm:$0xff] %v140
  %278 = vst [vmem:[#allocation2 + $0x38] sm:$0xff] %v143
  %279 = vst [vmem:[#allocation2 + $0x40] sm:$0xff] %v146
  %280 = vst [vmem:[#allocation2 + $0x48] sm:$0xff] %v149
  %281 = vst [vmem:[#allocation2 + $0x50] sm:$0xff] %v152
  %282 = vst [vmem:[#allocation2 + $0x58] sm:$0xff] %v155
  %283 = vst [vmem:[#allocation2 + $0x60] sm:$0xff] %v158
  %284 = vst [vmem:[#allocation2 + $0x68] sm:$0xff] %v161
  %285 = vst [vmem:[#allocation2 + $0x70] sm:$0xff] %v164
  %286 = vst [vmem:[#allocation2 + $0x78] sm:$0xff] %v167
  %287 = vst [vmem:[#allocation2 + $0x80] sm:$0xff] %v170
  %288 = vst [vmem:[#allocation2 + $0x88] sm:$0xff] %v173
  %289 = vst [vmem:[#allocation2 + $0x90] sm:$0xff] %v176
  %290 = vst [vmem:[#allocation2 + $0x98] sm:$0xff] %v179
  %291 = vst [vmem:[#allocation2 + $0xa0] sm:$0xff] %v182
  %292 = vst [vmem:[#allocation2 + $0xa8] sm:$0xff] %v185
  %293 = vst [vmem:[#allocation2 + $0xb0] sm:$0xff] %v188
  %294 = vst [vmem:[#allocation2 + $0xb8] sm:$0xff] %v191
  %295 = vst [vmem:[#allocation2 + $0xc0] sm:$0xff] %v194
  %296 = vst [vmem:[#allocation2 + $0xc8] sm:$0xff] %v197
  %297 = vst [vmem:[#allocation2 + $0xd0] sm:$0xff] %v200
  %298 = vst [vmem:[#allocation2 + $0xd8] sm:$0xff] %v203
  %299 = vst [vmem:[#allocation2 + $0xe0] sm:$0xff] %v206
  %300 = vst [vmem:[#allocation2 + $0xe8] sm:$0xff] %v209
  %301 = vst [vmem:[#allocation2 + $0xf0] sm:$0xff] %v212
  %302 = vst [vmem:[#allocation2 + $0xf8] sm:$0xff] %v215
  %303 = vst [vmem:[#allocation2 + $0x100] sm:$0xff] %v218
  %304 = vst [vmem:[#allocation2 + $0x108] sm:$0xff] %v221
  %305 = vst [vmem:[#allocation2 + $0x110] sm:$0xff] %v224
  %306 = vst [vmem:[#allocation2 + $0x118] sm:$0xff] %v227
  %307 = vst [vmem:[#allocation2 + $0x120] sm:$0xff] %v230
  %308 = vst [vmem:[#allocation2 + $0x128] sm:$0xff] %v233
  %309 = vst [vmem:[#allocation2 + $0x130] sm:$0xff] %v236
  %310 = vst [vmem:[#allocation2 + $0x138] sm:$0xff] %v239
  %311 = vst [vmem:[#allocation2 + $0x140] sm:$0xff] %v242
  %312 = vst [vmem:[#allocation2 + $0x148] sm:$0xff] %v245
  %313 = vst [vmem:[#allocation2 + $0x150] sm:$0xff] %v248
  %314 = vst [vmem:[#allocation2 + $0x158] sm:$0xff] %v251
  %315 = vst [vmem:[#allocation2 + $0x160] sm:$0xff] %v254
  %316 = vst [vmem:[#allocation2 + $0x168] sm:$0xff] %v257
  %317 = vst [vmem:[#allocation2 + $0x170] sm:$0xff] %v260
  %318 = vst [vmem:[#allocation2 + $0x178] sm:$0xff] %v263
  %319 = vst [vmem:[#allocation2 + $0x180] sm:$0xff] %v266
  %320 = vst [vmem:[#allocation2 + $0x188] sm:$0xff] %v269
  %v321 = vld [vmem:[%s0] sm:$0xff]
  %v322 = vld [vmem:[%s0 + $0x8] sm:$0xff]
  %v323 = vld [vmem:[%s0 + $0x10] sm:$0xff]
  %v324 = vld [vmem:[%s0 + $0x18] sm:$0xff]
  %v325 = vld [vmem:[%s0 + $0x20] sm:$0xff]
  %v326 = vld [vmem:[%s0 + $0x28] sm:$0xff]
  %v327 = vld [vmem:[%s0 + $0x30] sm:$0xff]
  %v328 = vld [vmem:[%s0 + $0x38] sm:$0xff]
  %v329 = vld [vmem:[%s0 + $0x40] sm:$0xff]
  %v330 = vld [vmem:[%s0 + $0x48] sm:$0xff]
  %v331 = vld [vmem:[%s0 + $0x50] sm:$0xff]
  %v332 = vld [vmem:[%s0 + $0x58] sm:$0xff]
  %v333 = vld [vmem:[%s0 + $0x60] sm:$0xff]
  %v334 = vld [vmem:[%s0 + $0x68] sm:$0xff]
  %v335 = vld [vmem:[%s0 + $0x70] sm:$0xff]
  %v336 = vld [vmem:[%s0 + $0x78] sm:$0xff]
  %v337 = vld [vmem:[%s0 + $0x80] sm:$0xff]
  %v338 = vld [vmem:[%s0 + $0x88] sm:$0xff]
  %v339 = vld [vmem:[%s0 + $0x90] sm:$0xff]
  %v340 = vld [vmem:[%s0 + $0x98] sm:$0xff]
  %v341 = vld [vmem:[%s0 + $0xa0] sm:$0xff]
  %v342 = vld [vmem:[%s0 + $0xa8] sm:$0xff]
  %v343 = vld [vmem:[%s0 + $0xb0] sm:$0xff]
  %v344 = vld [vmem:[%s0 + $0xb8] sm:$0xff]
  %v345 = vld [vmem:[%s0 + $0xc0] sm:$0xff]
  %v346 = vld [vmem:[%s0 + $0xc8] sm:$0xff]
  %v347 = vld [vmem:[%s0 + $0xd0] sm:$0xff]
  %v348 = vld [vmem:[%s0 + $0xd8] sm:$0xff]
  %v349 = vld [vmem:[%s0 + $0xe0] sm:$0xff]
  %v350 = vld [vmem:[%s0 + $0xe8] sm:$0xff]
  %v351 = vld [vmem:[%s0 + $0xf0] sm:$0xff]
  %v352 = vld [vmem:[%s0 + $0xf8] sm:$0xff]
  %v353 = vld [vmem:[%s0 + $0x100] sm:$0xff]
  %v354 = vld [vmem:[%s0 + $0x108] sm:$0xff]
  %v355 = vld [vmem:[%s0 + $0x110] sm:$0xff]
  %v356 = vld [vmem:[%s0 + $0x118] sm:$0xff]
  %v357 = vld [vmem:[%s0 + $0x120] sm:$0xff]
  %v358 = vld [vmem:[%s0 + $0x128] sm:$0xff]
  %v359 = vld [vmem:[%s0 + $0x130] sm:$0xff]
  %v360 = vld [vmem:[%s0 + $0x138] sm:$0xff]
  %v361 = vld [vmem:[%s0 + $0x140] sm:$0xff]
  %v362 = vld [vmem:[%s0 + $0x148] sm:$0xff]
  %v363 = vld [vmem:[%s0 + $0x150] sm:$0xff]
  %v364 = vld [vmem:[%s0 + $0x158] sm:$0xff]
  %v365 = vld [vmem:[%s0 + $0x160] sm:$0xff]
  %v366 = vld [vmem:[%s0 + $0x168] sm:$0xff]
  %v367 = vld [vmem:[%s0 + $0x170] sm:$0xff]
  %v368 = vld [vmem:[%s0 + $0x178] sm:$0xff]
  %v369 = vld [vmem:[%s0 + $0x180] sm:$0xff]
  %v370 = vld [vmem:[%s0 + $0x188] sm:$0xff]
  %v371 = vld [vmem:[%s0 + $0x190] sm:$0xff]
  %v372 = vld [vmem:[%s0 + $0x198] sm:$0xff]
  %v373 = vld [vmem:[%s0 + $0x1a0] sm:$0xff]
  %v374 = vld [vmem:[%s0 + $0x1a8] sm:$0xff]
  %v375 = vld [vmem:[%s0 + $0x1b0] sm:$0xff]
  %v376 = vld [vmem:[%s0 + $0x1b8] sm:$0xff]
  %v377 = vld [vmem:[%s0 + $0x1c0] sm:$0xff]
  %v378 = vld [vmem:[%s0 + $0x1c8] sm:$0xff]
  %v379 = vld [vmem:[%s0 + $0x1d0] sm:$0xff]
  %v380 = vld [vmem:[%s0 + $0x1d8] sm:$0xff]
  %s381 = scalar_lea.vmem %s1, 128
  %v382 = vld [vmem:[%s381] sm:$0xff]
  %v383 = vld [vmem:[%s381 + $0x8] sm:$0xff]
  %v384 = vld [vmem:[%s381 + $0x10] sm:$0xff]
  %v385 = vld [vmem:[%s381 + $0x18] sm:$0xff]
  %v386 = vld [vmem:[%s381 + $0x20] sm:$0xff]
  %v387 = vld [vmem:[%s381 + $0x28] sm:$0xff]
  %v388 = vld [vmem:[%s381 + $0x30] sm:$0xff]
  %v389 = vld [vmem:[%s381 + $0x38] sm:$0xff]
  %v390 = vld [vmem:[%s381 + $0x40] sm:$0xff]
  %v391 = vld [vmem:[%s381 + $0x48] sm:$0xff]
  %v392 = vld [vmem:[%s381 + $0x50] sm:$0xff]
  %v393 = vld [vmem:[%s381 + $0x58] sm:$0xff]
  %v394 = vld [vmem:[%s381 + $0x60] sm:$0xff]
  %v395 = vld [vmem:[%s381 + $0x68] sm:$0xff]
  %v396 = vld [vmem:[%s381 + $0x70] sm:$0xff]
  %v397 = vld [vmem:[%s381 + $0x78] sm:$0xff]
  %s398 = scalar_lea.vmem %s3, 1
  %v399 = vld [vmem:[%s398] sm:$0x1]
  %v401 = vperm.slane %v399, 0
  %403 = vmatpush.msra.mxu0 %v397
  %404 = vmatpush.msra.mxu0 %v396
  %405 = vmatpush.msra.mxu0 %v395
  %406 = vmatpush.msra.mxu0 %v394
  %407 = vmatpush.msra.mxu0 %v393
  %408 = vmatpush.msra.mxu0 %v392
  %409 = vmatpush.msra.mxu0 %v391
  %410 = vmatpush.msra.mxu0 %v390
  %411 = vmatpush.msra.mxu0 %v389
  %412 = vmatpush.msra.mxu0 %v388
  %413 = vmatpush.msra.mxu0 %v387
  %414 = vmatpush.msra.mxu0 %v386
  %415 = vmatpush.msra.mxu0 %v385
  %416 = vmatpush.msra.mxu0 %v384
  %417 = vmatpush.msra.mxu0 %v383
  %418 = vmatpush.msra.mxu0 %v382
  %419 = vmatmul.f32.gmra.mxu0 %v321
  %v420 = vpop.f32.mrf.mxu0
  %v421 = vadd.f32 %v401, %v420
  %422 = vmatmul.f32.gmra.mxu0 %v322
  %v423 = vpop.f32.mrf.mxu0
  %v424 = vadd.f32 %v401, %v423
  %425 = vmatmul.f32.gmra.mxu0 %v323
  %v426 = vpop.f32.mrf.mxu0
  %v427 = vadd.f32 %v401, %v426
  %428 = vmatmul.f32.gmra.mxu0 %v324
  %v429 = vpop.f32.mrf.mxu0
  %v430 = vadd.f32 %v401, %v429
  %431 = vmatmul.f32.gmra.mxu0 %v325
  %v432 = vpop.f32.mrf.mxu0
  %v433 = vadd.f32 %v401, %v432
  %434 = vmatmul.f32.gmra.mxu0 %v326
  %v435 = vpop.f32.mrf.mxu0
  %v436 = vadd.f32 %v401, %v435
  %437 = vmatmul.f32.gmra.mxu0 %v327
  %v438 = vpop.f32.mrf.mxu0
  %v439 = vadd.f32 %v401, %v438
  %440 = vmatmul.f32.gmra.mxu0 %v328
  %v441 = vpop.f32.mrf.mxu0
  %v442 = vadd.f32 %v401, %v441
  %443 = vmatmul.f32.gmra.mxu0 %v329
  %v444 = vpop.f32.mrf.mxu0
  %v445 = vadd.f32 %v401, %v444
  %446 = vmatmul.f32.gmra.mxu0 %v330
  %v447 = vpop.f32.mrf.mxu0
  %v448 = vadd.f32 %v401, %v447
  %449 = vmatmul.f32.gmra.mxu0 %v331
  %v450 = vpop.f32.mrf.mxu0
  %v451 = vadd.f32 %v401, %v450
  %452 = vmatmul.f32.gmra.mxu0 %v332
  %v453 = vpop.f32.mrf.mxu0
  %v454 = vadd.f32 %v401, %v453
  %455 = vmatmul.f32.gmra.mxu0 %v333
  %v456 = vpop.f32.mrf.mxu0
  %v457 = vadd.f32 %v401, %v456
  %458 = vmatmul.f32.gmra.mxu0 %v334
  %v459 = vpop.f32.mrf.mxu0
  %v460 = vadd.f32 %v401, %v459
  %461 = vmatmul.f32.gmra.mxu0 %v335
  %v462 = vpop.f32.mrf.mxu0
  %v463 = vadd.f32 %v401, %v462
  %464 = vmatmul.f32.gmra.mxu0 %v336
  %v465 = vpop.f32.mrf.mxu0
  %v466 = vadd.f32 %v401, %v465
  %467 = vmatmul.f32.gmra.mxu0 %v337
  %v468 = vpop.f32.mrf.mxu0
  %v469 = vadd.f32 %v401, %v468
  %470 = vmatmul.f32.gmra.mxu0 %v338
  %v471 = vpop.f32.mrf.mxu0
  %v472 = vadd.f32 %v401, %v471
  %473 = vmatmul.f32.gmra.mxu0 %v339
  %v474 = vpop.f32.mrf.mxu0
  %v475 = vadd.f32 %v401, %v474
  %476 = vmatmul.f32.gmra.mxu0 %v340
  %v477 = vpop.f32.mrf.mxu0
  %v478 = vadd.f32 %v401, %v477
  %479 = vmatmul.f32.gmra.mxu0 %v341
  %v480 = vpop.f32.mrf.mxu0
  %v481 = vadd.f32 %v401, %v480
  %482 = vmatmul.f32.gmra.mxu0 %v342
  %v483 = vpop.f32.mrf.mxu0
  %v484 = vadd.f32 %v401, %v483
  %485 = vmatmul.f32.gmra.mxu0 %v343
  %v486 = vpop.f32.mrf.mxu0
  %v487 = vadd.f32 %v401, %v486
  %488 = vmatmul.f32.gmra.mxu0 %v344
  %v489 = vpop.f32.mrf.mxu0
  %v490 = vadd.f32 %v401, %v489
  %491 = vmatmul.f32.gmra.mxu0 %v345
  %v492 = vpop.f32.mrf.mxu0
  %v493 = vadd.f32 %v401, %v492
  %494 = vmatmul.f32.gmra.mxu0 %v346
  %v495 = vpop.f32.mrf.mxu0
  %v496 = vadd.f32 %v401, %v495
  %497 = vmatmul.f32.gmra.mxu0 %v347
  %v498 = vpop.f32.mrf.mxu0
  %v499 = vadd.f32 %v401, %v498
  %500 = vmatmul.f32.gmra.mxu0 %v348
  %v501 = vpop.f32.mrf.mxu0
  %v502 = vadd.f32 %v401, %v501
  %503 = vmatmul.f32.gmra.mxu0 %v349
  %v504 = vpop.f32.mrf.mxu0
  %v505 = vadd.f32 %v401, %v504
  %506 = vmatmul.f32.gmra.mxu0 %v350
  %v507 = vpop.f32.mrf.mxu0
  %v508 = vadd.f32 %v401, %v507
  %509 = vmatmul.f32.gmra.mxu0 %v351
  %v510 = vpop.f32.mrf.mxu0
  %v511 = vadd.f32 %v401, %v510
  %512 = vmatmul.f32.gmra.mxu0 %v352
  %v513 = vpop.f32.mrf.mxu0
  %v514 = vadd.f32 %v401, %v513
  %515 = vmatmul.f32.gmra.mxu0 %v353
  %v516 = vpop.f32.mrf.mxu0
  %v517 = vadd.f32 %v401, %v516
  %518 = vmatmul.f32.gmra.mxu0 %v354
  %v519 = vpop.f32.mrf.mxu0
  %v520 = vadd.f32 %v401, %v519
  %521 = vmatmul.f32.gmra.mxu0 %v355
  %v522 = vpop.f32.mrf.mxu0
  %v523 = vadd.f32 %v401, %v522
  %524 = vmatmul.f32.gmra.mxu0 %v356
  %v525 = vpop.f32.mrf.mxu0
  %v526 = vadd.f32 %v401, %v525
  %527 = vmatmul.f32.gmra.mxu0 %v357
  %v528 = vpop.f32.mrf.mxu0
  %v529 = vadd.f32 %v401, %v528
  %530 = vmatmul.f32.gmra.mxu0 %v358
  %v531 = vpop.f32.mrf.mxu0
  %v532 = vadd.f32 %v401, %v531
  %533 = vmatmul.f32.gmra.mxu0 %v359
  %v534 = vpop.f32.mrf.mxu0
  %v535 = vadd.f32 %v401, %v534
  %536 = vmatmul.f32.gmra.mxu0 %v360
  %v537 = vpop.f32.mrf.mxu0
  %v538 = vadd.f32 %v401, %v537
  %539 = vmatmul.f32.gmra.mxu0 %v361
  %v540 = vpop.f32.mrf.mxu0
  %v541 = vadd.f32 %v401, %v540
  %542 = vmatmul.f32.gmra.mxu0 %v362
  %v543 = vpop.f32.mrf.mxu0
  %v544 = vadd.f32 %v401, %v543
  %545 = vmatmul.f32.gmra.mxu0 %v363
  %v546 = vpop.f32.mrf.mxu0
  %v547 = vadd.f32 %v401, %v546
  %548 = vmatmul.f32.gmra.mxu0 %v364
  %v549 = vpop.f32.mrf.mxu0
  %v550 = vadd.f32 %v401, %v549
  %551 = vmatmul.f32.gmra.mxu0 %v365
  %v552 = vpop.f32.mrf.mxu0
  %v553 = vadd.f32 %v401, %v552
  %554 = vmatmul.f32.gmra.mxu0 %v366
  %v555 = vpop.f32.mrf.mxu0
  %v556 = vadd.f32 %v401, %v555
  %557 = vmatmul.f32.gmra.mxu0 %v367
  %v558 = vpop.f32.mrf.mxu0
  %v559 = vadd.f32 %v401, %v558
  %560 = vmatmul.f32.gmra.mxu0 %v368
  %v561 = vpop.f32.mrf.mxu0
  %v562 = vadd.f32 %v401, %v561
  %563 = vmatmul.f32.gmra.mxu0 %v369
  %v564 = vpop.f32.mrf.mxu0
  %v565 = vadd.f32 %v401, %v564
  %566 = vmatmul.f32.gmra.mxu0 %v370
  %v567 = vpop.f32.mrf.mxu0
  %v568 = vadd.f32 %v401, %v567
  %569 = vmatmul.f32.gmra.mxu0 %v371
  %v570 = vpop.f32.mrf.mxu0
  %v571 = vadd.f32 %v401, %v570
  %572 = vmatmul.f32.gmra.mxu0 %v372
  %v573 = vpop.f32.mrf.mxu0
  %v574 = vadd.f32 %v401, %v573
  %575 = vmatmul.f32.gmra.mxu0 %v373
  %v576 = vpop.f32.mrf.mxu0
  %v577 = vadd.f32 %v401, %v576
  %578 = vmatmul.f32.gmra.mxu0 %v374
  %v579 = vpop.f32.mrf.mxu0
  %v580 = vadd.f32 %v401, %v579
  %581 = vmatmul.f32.gmra.mxu0 %v375
  %v582 = vpop.f32.mrf.mxu0
  %v583 = vadd.f32 %v401, %v582
  %584 = vmatmul.f32.gmra.mxu0 %v376
  %v585 = vpop.f32.mrf.mxu0
  %v586 = vadd.f32 %v401, %v585
  %587 = vmatmul.f32.gmra.mxu0 %v377
  %v588 = vpop.f32.mrf.mxu0
  %v589 = vadd.f32 %v401, %v588
  %590 = vmatmul.f32.gmra.mxu0 %v378
  %v591 = vpop.f32.mrf.mxu0
  %v592 = vadd.f32 %v401, %v591
  %593 = vmatmul.f32.gmra.mxu0 %v379
  %v594 = vpop.f32.mrf.mxu0
  %v595 = vadd.f32 %v401, %v594
  %596 = vmatmul.f32.gmra.mxu0 %v380
  %v597 = vpop.f32.mrf.mxu0
  %v598 = vadd.f32 %v401, %v597
  %599 = vdwg.mxu0
  %600 = vst [vmem:[#allocation3] sm:$0xff] %v421
  %601 = vst [vmem:[#allocation3 + $0x8] sm:$0xff] %v424
  %602 = vst [vmem:[#allocation3 + $0x10] sm:$0xff] %v427
  %603 = vst [vmem:[#allocation3 + $0x18] sm:$0xff] %v430
  %604 = vst [vmem:[#allocation3 + $0x20] sm:$0xff] %v433
  %605 = vst [vmem:[#allocation3 + $0x28] sm:$0xff] %v436
  %606 = vst [vmem:[#allocation3 + $0x30] sm:$0xff] %v439
  %607 = vst [vmem:[#allocation3 + $0x38] sm:$0xff] %v442
  %608 = vst [vmem:[#allocation3 + $0x40] sm:$0xff] %v445
  %609 = vst [vmem:[#allocation3 + $0x48] sm:$0xff] %v448
  %610 = vst [vmem:[#allocation3 + $0x50] sm:$0xff] %v451
  %611 = vst [vmem:[#allocation3 + $0x58] sm:$0xff] %v454
  %612 = vst [vmem:[#allocation3 + $0x60] sm:$0xff] %v457
  %613 = vst [vmem:[#allocation3 + $0x68] sm:$0xff] %v460
  %614 = vst [vmem:[#allocation3 + $0x70] sm:$0xff] %v463
  %615 = vst [vmem:[#allocation3 + $0x78] sm:$0xff] %v466
  %616 = vst [vmem:[#allocation3 + $0x80] sm:$0xff] %v469
  %617 = vst [vmem:[#allocation3 + $0x88] sm:$0xff] %v472
  %618 = vst [vmem:[#allocation3 + $0x90] sm:$0xff] %v475
  %619 = vst [vmem:[#allocation3 + $0x98] sm:$0xff] %v478
  %620 = vst [vmem:[#allocation3 + $0xa0] sm:$0xff] %v481
  %621 = vst [vmem:[#allocation3 + $0xa8] sm:$0xff] %v484
  %622 = vst [vmem:[#allocation3 + $0xb0] sm:$0xff] %v487
  %623 = vst [vmem:[#allocation3 + $0xb8] sm:$0xff] %v490
  %624 = vst [vmem:[#allocation3 + $0xc0] sm:$0xff] %v493
  %625 = vst [vmem:[#allocation3 + $0xc8] sm:$0xff] %v496
  %626 = vst [vmem:[#allocation3 + $0xd0] sm:$0xff] %v499
  %627 = vst [vmem:[#allocation3 + $0xd8] sm:$0xff] %v502
  %628 = vst [vmem:[#allocation3 + $0xe0] sm:$0xff] %v505
  %629 = vst [vmem:[#allocation3 + $0xe8] sm:$0xff] %v508
  %630 = vst [vmem:[#allocation3 + $0xf0] sm:$0xff] %v511
  %631 = vst [vmem:[#allocation3 + $0xf8] sm:$0xff] %v514
  %632 = vst [vmem:[#allocation3 + $0x100] sm:$0xff] %v517
  %633 = vst [vmem:[#allocation3 + $0x108] sm:$0xff] %v520
  %634 = vst [vmem:[#allocation3 + $0x110] sm:$0xff] %v523
  %635 = vst [vmem:[#allocation3 + $0x118] sm:$0xff] %v526
  %636 = vst [vmem:[#allocation3 + $0x120] sm:$0xff] %v529
  %637 = vst [vmem:[#allocation3 + $0x128] sm:$0xff] %v532
  %638 = vst [vmem:[#allocation3 + $0x130] sm:$0xff] %v535
  %639 = vst [vmem:[#allocation3 + $0x138] sm:$0xff] %v538
  %640 = vst [vmem:[#allocation3 + $0x140] sm:$0xff] %v541
  %641 = vst [vmem:[#allocation3 + $0x148] sm:$0xff] %v544
  %642 = vst [vmem:[#allocation3 + $0x150] sm:$0xff] %v547
  %643 = vst [vmem:[#allocation3 + $0x158] sm:$0xff] %v550
  %644 = vst [vmem:[#allocation3 + $0x160] sm:$0xff] %v553
  %645 = vst [vmem:[#allocation3 + $0x168] sm:$0xff] %v556
  %646 = vst [vmem:[#allocation3 + $0x170] sm:$0xff] %v559
  %647 = vst [vmem:[#allocation3 + $0x178] sm:$0xff] %v562
  %648 = vst [vmem:[#allocation3 + $0x180] sm:$0xff] %v565
  %649 = vst [vmem:[#allocation3 + $0x188] sm:$0xff] %v568
  %650 = vst [vmem:[#allocation3 + $0x190] sm:$0xff] %v571
  %651 = vst [vmem:[#allocation3 + $0x198] sm:$0xff] %v574
  %652 = vst [vmem:[#allocation3 + $0x1a0] sm:$0xff] %v577
  %653 = vst [vmem:[#allocation3 + $0x1a8] sm:$0xff] %v580
  %654 = vst [vmem:[#allocation3 + $0x1b0] sm:$0xff] %v583
  %655 = vst [vmem:[#allocation3 + $0x1b8] sm:$0xff] %v586
  %656 = vst [vmem:[#allocation3 + $0x1c0] sm:$0xff] %v589
  %657 = vst [vmem:[#allocation3 + $0x1c8] sm:$0xff] %v592
  %658 = vst [vmem:[#allocation3 + $0x1d0] sm:$0xff] %v595
  %659 = vst [vmem:[#allocation3 + $0x1d8] sm:$0xff] %v598
  %s660 = scalar_lea.vmem %s1, 256
  %v661 = vld [vmem:[%s660] sm:$0xff]
  %v662 = vld [vmem:[%s660 + $0x8] sm:$0xff]
  %v663 = vld [vmem:[%s660 + $0x10] sm:$0xff]
  %v664 = vld [vmem:[%s660 + $0x18] sm:$0xff]
  %v665 = vld [vmem:[%s660 + $0x20] sm:$0xff]
  %v666 = vld [vmem:[%s660 + $0x28] sm:$0xff]
  %v667 = vld [vmem:[%s660 + $0x30] sm:$0xff]
  %v668 = vld [vmem:[%s660 + $0x38] sm:$0xff]
  %v669 = vld [vmem:[%s660 + $0x40] sm:$0xff]
  %v670 = vld [vmem:[%s660 + $0x48] sm:$0xff]
  %v671 = vld [vmem:[%s660 + $0x50] sm:$0xff]
  %v672 = vld [vmem:[%s660 + $0x58] sm:$0xff]
  %v673 = vld [vmem:[%s660 + $0x60] sm:$0xff]
  %v674 = vld [vmem:[%s660 + $0x68] sm:$0xff]
  %v675 = vld [vmem:[%s660 + $0x70] sm:$0xff]
  %v676 = vld [vmem:[%s660 + $0x78] sm:$0xff]
  %s677 = scalar_lea.vmem %s3, 2
  %v678 = vld [vmem:[%s677] sm:$0x1]
  %v680 = vperm.slane %v678, 0
  %682 = vmatpush.msra.mxu0 %v676
  %683 = vmatpush.msra.mxu0 %v675
  %684 = vmatpush.msra.mxu0 %v674
  %685 = vmatpush.msra.mxu0 %v673
  %686 = vmatpush.msra.mxu0 %v672
  %687 = vmatpush.msra.mxu0 %v671
  %688 = vmatpush.msra.mxu0 %v670
  %689 = vmatpush.msra.mxu0 %v669
  %690 = vmatpush.msra.mxu0 %v668
  %691 = vmatpush.msra.mxu0 %v667
  %692 = vmatpush.msra.mxu0 %v666
  %693 = vmatpush.msra.mxu0 %v665
  %694 = vmatpush.msra.mxu0 %v664
  %695 = vmatpush.msra.mxu0 %v663
  %696 = vmatpush.msra.mxu0 %v662
  %697 = vmatpush.msra.mxu0 %v661
  %698 = vmatmul.f32.gmra.mxu0 %v34
  %v699 = vpop.f32.mrf.mxu0
  %v700 = vadd.f32 %v680, %v699
  %701 = vmatmul.f32.gmra.mxu0 %v35
  %v702 = vpop.f32.mrf.mxu0
  %v703 = vadd.f32 %v680, %v702
  %704 = vmatmul.f32.gmra.mxu0 %v36
  %v705 = vpop.f32.mrf.mxu0
  %v706 = vadd.f32 %v680, %v705
  %707 = vmatmul.f32.gmra.mxu0 %v37
  %v708 = vpop.f32.mrf.mxu0
  %v709 = vadd.f32 %v680, %v708
  %710 = vmatmul.f32.gmra.mxu0 %v38
  %v711 = vpop.f32.mrf.mxu0
  %v712 = vadd.f32 %v680, %v711
  %713 = vmatmul.f32.gmra.mxu0 %v39
  %v714 = vpop.f32.mrf.mxu0
  %v715 = vadd.f32 %v680, %v714
  %716 = vmatmul.f32.gmra.mxu0 %v40
  %v717 = vpop.f32.mrf.mxu0
  %v718 = vadd.f32 %v680, %v717
  %719 = vmatmul.f32.gmra.mxu0 %v41
  %v720 = vpop.f32.mrf.mxu0
  %v721 = vadd.f32 %v680, %v720
  %722 = vmatmul.f32.gmra.mxu0 %v42
  %v723 = vpop.f32.mrf.mxu0
  %v724 = vadd.f32 %v680, %v723
  %725 = vmatmul.f32.gmra.mxu0 %v43
  %v726 = vpop.f32.mrf.mxu0
  %v727 = vadd.f32 %v680, %v726
  %728 = vmatmul.f32.gmra.mxu0 %v44
  %v729 = vpop.f32.mrf.mxu0
  %v730 = vadd.f32 %v680, %v729
  %731 = vmatmul.f32.gmra.mxu0 %v45
  %v732 = vpop.f32.mrf.mxu0
  %v733 = vadd.f32 %v680, %v732
  %734 = vmatmul.f32.gmra.mxu0 %v46
  %v735 = vpop.f32.mrf.mxu0
  %v736 = vadd.f32 %v680, %v735
  %737 = vmatmul.f32.gmra.mxu0 %v47
  %v738 = vpop.f32.mrf.mxu0
  %v739 = vadd.f32 %v680, %v738
  %740 = vmatmul.f32.gmra.mxu0 %v48
  %v741 = vpop.f32.mrf.mxu0
  %v742 = vadd.f32 %v680, %v741
  %743 = vmatmul.f32.gmra.mxu0 %v49
  %v744 = vpop.f32.mrf.mxu0
  %v745 = vadd.f32 %v680, %v744
  %746 = vmatmul.f32.gmra.mxu0 %v50
  %v747 = vpop.f32.mrf.mxu0
  %v748 = vadd.f32 %v680, %v747
  %749 = vmatmul.f32.gmra.mxu0 %v51
  %v750 = vpop.f32.mrf.mxu0
  %v751 = vadd.f32 %v680, %v750
  %752 = vmatmul.f32.gmra.mxu0 %v52
  %v753 = vpop.f32.mrf.mxu0
  %v754 = vadd.f32 %v680, %v753
  %755 = vmatmul.f32.gmra.mxu0 %v53
  %v756 = vpop.f32.mrf.mxu0
  %v757 = vadd.f32 %v680, %v756
  %758 = vmatmul.f32.gmra.mxu0 %v54
  %v759 = vpop.f32.mrf.mxu0
  %v760 = vadd.f32 %v680, %v759
  %761 = vmatmul.f32.gmra.mxu0 %v55
  %v762 = vpop.f32.mrf.mxu0
  %v763 = vadd.f32 %v680, %v762
  %764 = vmatmul.f32.gmra.mxu0 %v56
  %v765 = vpop.f32.mrf.mxu0
  %v766 = vadd.f32 %v680, %v765
  %767 = vmatmul.f32.gmra.mxu0 %v57
  %v768 = vpop.f32.mrf.mxu0
  %v769 = vadd.f32 %v680, %v768
  %770 = vmatmul.f32.gmra.mxu0 %v58
  %v771 = vpop.f32.mrf.mxu0
  %v772 = vadd.f32 %v680, %v771
  %773 = vmatmul.f32.gmra.mxu0 %v59
  %v774 = vpop.f32.mrf.mxu0
  %v775 = vadd.f32 %v680, %v774
  %776 = vmatmul.f32.gmra.mxu0 %v60
  %v777 = vpop.f32.mrf.mxu0
  %v778 = vadd.f32 %v680, %v777
  %779 = vmatmul.f32.gmra.mxu0 %v61
  %v780 = vpop.f32.mrf.mxu0
  %v781 = vadd.f32 %v680, %v780
  %782 = vmatmul.f32.gmra.mxu0 %v62
  %v783 = vpop.f32.mrf.mxu0
  %v784 = vadd.f32 %v680, %v783
  %785 = vmatmul.f32.gmra.mxu0 %v63
  %v786 = vpop.f32.mrf.mxu0
  %v787 = vadd.f32 %v680, %v786
  %788 = vmatmul.f32.gmra.mxu0 %v64
  %v789 = vpop.f32.mrf.mxu0
  %v790 = vadd.f32 %v680, %v789
  %791 = vmatmul.f32.gmra.mxu0 %v65
  %v792 = vpop.f32.mrf.mxu0
  %v793 = vadd.f32 %v680, %v792
  %794 = vmatmul.f32.gmra.mxu0 %v66
  %v795 = vpop.f32.mrf.mxu0
  %v796 = vadd.f32 %v680, %v795
  %797 = vmatmul.f32.gmra.mxu0 %v67
  %v798 = vpop.f32.mrf.mxu0
  %v799 = vadd.f32 %v680, %v798
  %800 = vmatmul.f32.gmra.mxu0 %v68
  %v801 = vpop.f32.mrf.mxu0
  %v802 = vadd.f32 %v680, %v801
  %803 = vmatmul.f32.gmra.mxu0 %v69
  %v804 = vpop.f32.mrf.mxu0
  %v805 = vadd.f32 %v680, %v804
  %806 = vmatmul.f32.gmra.mxu0 %v70
  %v807 = vpop.f32.mrf.mxu0
  %v808 = vadd.f32 %v680, %v807
  %809 = vmatmul.f32.gmra.mxu0 %v71
  %v810 = vpop.f32.mrf.mxu0
  %v811 = vadd.f32 %v680, %v810
  %812 = vmatmul.f32.gmra.mxu0 %v72
  %v813 = vpop.f32.mrf.mxu0
  %v814 = vadd.f32 %v680, %v813
  %815 = vmatmul.f32.gmra.mxu0 %v73
  %v816 = vpop.f32.mrf.mxu0
  %v817 = vadd.f32 %v680, %v816
  %818 = vmatmul.f32.gmra.mxu0 %v74
  %v819 = vpop.f32.mrf.mxu0
  %v820 = vadd.f32 %v680, %v819
  %821 = vmatmul.f32.gmra.mxu0 %v75
  %v822 = vpop.f32.mrf.mxu0
  %v823 = vadd.f32 %v680, %v822
  %824 = vmatmul.f32.gmra.mxu0 %v76
  %v825 = vpop.f32.mrf.mxu0
  %v826 = vadd.f32 %v680, %v825
  %827 = vmatmul.f32.gmra.mxu0 %v77
  %v828 = vpop.f32.mrf.mxu0
  %v829 = vadd.f32 %v680, %v828
  %830 = vmatmul.f32.gmra.mxu0 %v78
  %v831 = vpop.f32.mrf.mxu0
  %v832 = vadd.f32 %v680, %v831
  %833 = vmatmul.f32.gmra.mxu0 %v79
  %v834 = vpop.f32.mrf.mxu0
  %v835 = vadd.f32 %v680, %v834
  %836 = vmatmul.f32.gmra.mxu0 %v80
  %v837 = vpop.f32.mrf.mxu0
  %v838 = vadd.f32 %v680, %v837
  %839 = vmatmul.f32.gmra.mxu0 %v81
  %v840 = vpop.f32.mrf.mxu0
  %v841 = vadd.f32 %v680, %v840
  %842 = vmatmul.f32.gmra.mxu0 %v82
  %v843 = vpop.f32.mrf.mxu0
  %v844 = vadd.f32 %v680, %v843
  %845 = vmatmul.f32.gmra.mxu0 %v83
  %v846 = vpop.f32.mrf.mxu0
  %v847 = vadd.f32 %v680, %v846
  %848 = vdwg.mxu0
  %849 = vst [vmem:[#allocation4] sm:$0xff] %v700
  %850 = vst [vmem:[#allocation4 + $0x8] sm:$0xff] %v703
  %851 = vst [vmem:[#allocation4 + $0x10] sm:$0xff] %v706
  %852 = vst [vmem:[#allocation4 + $0x18] sm:$0xff] %v709
  %853 = vst [vmem:[#allocation4 + $0x20] sm:$0xff] %v712
  %854 = vst [vmem:[#allocation4 + $0x28] sm:$0xff] %v715
  %855 = vst [vmem:[#allocation4 + $0x30] sm:$0xff] %v718
  %856 = vst [vmem:[#allocation4 + $0x38] sm:$0xff] %v721
  %857 = vst [vmem:[#allocation4 + $0x40] sm:$0xff] %v724
  %858 = vst [vmem:[#allocation4 + $0x48] sm:$0xff] %v727
  %859 = vst [vmem:[#allocation4 + $0x50] sm:$0xff] %v730
  %860 = vst [vmem:[#allocation4 + $0x58] sm:$0xff] %v733
  %861 = vst [vmem:[#allocation4 + $0x60] sm:$0xff] %v736
  %862 = vst [vmem:[#allocation4 + $0x68] sm:$0xff] %v739
  %863 = vst [vmem:[#allocation4 + $0x70] sm:$0xff] %v742
  %864 = vst [vmem:[#allocation4 + $0x78] sm:$0xff] %v745
  %865 = vst [vmem:[#allocation4 + $0x80] sm:$0xff] %v748
  %866 = vst [vmem:[#allocation4 + $0x88] sm:$0xff] %v751
  %867 = vst [vmem:[#allocation4 + $0x90] sm:$0xff] %v754
  %868 = vst [vmem:[#allocation4 + $0x98] sm:$0xff] %v757
  %869 = vst [vmem:[#allocation4 + $0xa0] sm:$0xff] %v760
  %870 = vst [vmem:[#allocation4 + $0xa8] sm:$0xff] %v763
  %871 = vst [vmem:[#allocation4 + $0xb0] sm:$0xff] %v766
  %872 = vst [vmem:[#allocation4 + $0xb8] sm:$0xff] %v769
  %873 = vst [vmem:[#allocation4 + $0xc0] sm:$0xff] %v772
  %874 = vst [vmem:[#allocation4 + $0xc8] sm:$0xff] %v775
  %875 = vst [vmem:[#allocation4 + $0xd0] sm:$0xff] %v778
  %876 = vst [vmem:[#allocation4 + $0xd8] sm:$0xff] %v781
  %877 = vst [vmem:[#allocation4 + $0xe0] sm:$0xff] %v784
  %878 = vst [vmem:[#allocation4 + $0xe8] sm:$0xff] %v787
  %879 = vst [vmem:[#allocation4 + $0xf0] sm:$0xff] %v790
  %880 = vst [vmem:[#allocation4 + $0xf8] sm:$0xff] %v793
  %881 = vst [vmem:[#allocation4 + $0x100] sm:$0xff] %v796
  %882 = vst [vmem:[#allocation4 + $0x108] sm:$0xff] %v799
  %883 = vst [vmem:[#allocation4 + $0x110] sm:$0xff] %v802
  %884 = vst [vmem:[#allocation4 + $0x118] sm:$0xff] %v805
  %885 = vst [vmem:[#allocation4 + $0x120] sm:$0xff] %v808
  %886 = vst [vmem:[#allocation4 + $0x128] sm:$0xff] %v811
  %887 = vst [vmem:[#allocation4 + $0x130] sm:$0xff] %v814
  %888 = vst [vmem:[#allocation4 + $0x138] sm:$0xff] %v817
  %889 = vst [vmem:[#allocation4 + $0x140] sm:$0xff] %v820
  %890 = vst [vmem:[#allocation4 + $0x148] sm:$0xff] %v823
  %891 = vst [vmem:[#allocation4 + $0x150] sm:$0xff] %v826
  %892 = vst [vmem:[#allocation4 + $0x158] sm:$0xff] %v829
  %893 = vst [vmem:[#allocation4 + $0x160] sm:$0xff] %v832
  %894 = vst [vmem:[#allocation4 + $0x168] sm:$0xff] %v835
  %895 = vst [vmem:[#allocation4 + $0x170] sm:$0xff] %v838
  %896 = vst [vmem:[#allocation4 + $0x178] sm:$0xff] %v841
  %897 = vst [vmem:[#allocation4 + $0x180] sm:$0xff] %v844
  %898 = vst [vmem:[#allocation4 + $0x188] sm:$0xff] %v847
  %v899 = vld [vmem:[%s2] sm:$0xff]
  %v900 = vld [vmem:[%s2 + $0x8] sm:$0xff]
  %v901 = vld [vmem:[%s2 + $0x10] sm:$0xff]
  %v902 = vld [vmem:[%s2 + $0x18] sm:$0xff]
  %v903 = vld [vmem:[%s4] sm:$0xff]
  %v904 = vld [vmem:[%s4 + $0x8] sm:$0xff]
  %v905 = vld [vmem:[%s4 + $0x10] sm:$0xff]
  %v906 = vld [vmem:[%s4 + $0x18] sm:$0xff]
  %v907 = vld [vmem:[%s5] sm:$0xff]
  %v908 = vld [vmem:[%s5 + $0x8] sm:$0xff]
  %v909 = vld [vmem:[%s5 + $0x10] sm:$0xff]
  %v910 = vld [vmem:[%s5 + $0x18] sm:$0xff]
  %v911 = vld [vmem:[%s6] sm:$0x1]
  %v912 = vld [vmem:[#allocation2] sm:$0xff]
  %v913 = vxor.u32 %v912, 2147483648
  %v914 = vmul.f32 %v913, 1.442695
  %v915 = vpow.pop %v914
  %v916 = vadd.f32 %v915, 1.0
  %v917 = vrcp.pop %v916
  %v918 = vmul.f32 %v916, %v917
  %v919 = vsub.f32 1.0, %v918
  %v920 = vmul.f32 %v917, %v919
  %v921 = vadd.f32 %v917, %v920
  %vm922 = vweird.f32 %v916
  %vm923 = vweird.f32 %v917
  %vm924 = vmor %vm922, %vm923
  %v925 = vsel %vm924, %v917, %v921
  %v926 = vand.u32 2147483647, %v916
  %vm927 = vcmp.eq.f32.partialorder %v926, 8.507059e+37
  %v928 = vand.u32 %v916, 2147483648
  %v929 = vor.u32 1.1754944e-38, %v928
  %v930 = vsel %vm927, %v929, %v925
  %v931 = vmul.f32 1.0, %v930
  %v932 = vmul.f32 %v931, 2.0
  %v933 = vsub.f32 %v932, 1.0
  %v934 = vmul.f32 %v931, 0.0
  %936 = vrot.lane.b32.xlu0 %v933, 64
  %v937 = vpop.permute.xlu0 %936
  %v939 = vmul.f32 %v931, %v937
  %941 = vrot.lane.b32.xlu0 %v939, 32
  %v942 = vpop.permute.xlu0 %941
  %v944 = vadd.f32 %v934, %v942
  %v945 = vtanh.pop %v944
  %947 = vrot.lane.b32.xlu0 %v945, 64
  %v948 = vpop.permute.xlu0 %947
  %v950 = vmul.f32 %v931, %v948
  loop: start=1, step=1, limit=50
  $region38: #{srivastava_lstm_forward.1} parent=0 // loop_pre_header
    _
  $region39: #{srivastava_lstm_forward.1} parent=0 // loop_header
    %s952 = sphi 1, %s956
    %p953 = scmp.ge.s32.totalorder %s952, 50
    %v957 = vphi %v950, %v1115
    %v958 = vphi %v944, %v1109
    %v959 = vphi 0.0, %v1053
    %v960 = vphi 0.0, %v1047
  $region40: #{srivastava_lstm_forward.1} parent=0 // loop_header_branch
    %955 = sbr.rel (%p953) target = $region44
  $region41: #{srivastava_lstm_forward.1} parent=0 // loop_body
    %962 = vrot.lane.b32.xlu0 %v959, 32
    %v963 = vpop.permute.xlu0 %962
    %vm964 = vcmask 261120
    %v965 = vsel %vm964, %v963, 0
    %967 = vmatpush.msra.mxu0 0.0
    %968 = vmatpush.msra.mxu0 0.0
    %969 = vmatpush.msra.mxu0 0.0
    %970 = vmatpush.msra.mxu0 0.0
    %971 = vmatpush.msra.mxu0 0.0
    %972 = vmatpush.msra.mxu0 0.0
    %973 = vmatpush.msra.mxu0 0.0
    %974 = vmatpush.msra.mxu0 0.0
    %975 = vmatpush.msra.mxu0 0.0
    %976 = vmatpush.msra.mxu0 0.0
    %977 = vmatpush.msra.mxu0 0.0
    %978 = vmatpush.msra.mxu0 0.0
    %979 = vmatpush.msra.mxu0 %v910
    %980 = vmatpush.msra.mxu0 %v909
    %981 = vmatpush.msra.mxu0 %v908
    %982 = vmatpush.msra.mxu0 %v907
    %983 = vmatmul.f32.gmra.mxu0 %v965
    %v984 = vpop.f32.mrf.mxu0
    %v985 = vadd.f32 0.0, %v984
    %986 = vdwg.mxu0
    %988 = vrot.lane.b32.xlu0 %v957, 32
    %v989 = vpop.permute.xlu0 %988
    %v990 = vsel %vm964, %v989, 0
    %992 = vmatpush.msra.mxu0 0.0
    %993 = vmatpush.msra.mxu0 0.0
    %994 = vmatpush.msra.mxu0 0.0
    %995 = vmatpush.msra.mxu0 0.0
    %996 = vmatpush.msra.mxu0 0.0
    %997 = vmatpush.msra.mxu0 0.0
    %998 = vmatpush.msra.mxu0 0.0
    %999 = vmatpush.msra.mxu0 0.0
    %1000 = vmatpush.msra.mxu0 0.0
    %1001 = vmatpush.msra.mxu0 0.0
    %1002 = vmatpush.msra.mxu0 0.0
    %1003 = vmatpush.msra.mxu0 0.0
    %1004 = vmatpush.msra.mxu0 %v906
    %1005 = vmatpush.msra.mxu0 %v905
    %1006 = vmatpush.msra.mxu0 %v904
    %1007 = vmatpush.msra.mxu0 %v903
    %1008 = vmatmul.f32.gmra.mxu0 %v990
    %v1009 = vpop.f32.mrf.mxu0
    %v1010 = vadd.f32 %v985, %v1009
    %1011 = vdwg.mxu0
    %v1013 = vperm.slane %v911, 0
    %v1015 = vadd.f32 %v1010, %v1013
    %v1016 = vxor.u32 %v1015, 2147483648
    %v1017 = vmul.f32 %v1016, 1.442695
    %v1018 = vpow.pop %v1017
    %v1019 = vadd.f32 %v1018, 1.0
    %v1020 = vrcp.pop %v1019
    %v1021 = vmul.f32 %v1019, %v1020
    %v1022 = vsub.f32 1.0, %v1021
    %v1023 = vmul.f32 %v1020, %v1022
    %v1024 = vadd.f32 %v1020, %v1023
    %vm1025 = vweird.f32 %v1019
    %vm1026 = vweird.f32 %v1020
    %vm1027 = vmor %vm1025, %vm1026
    %v1028 = vsel %vm1027, %v1020, %v1024
    %v1029 = vand.u32 2147483647, %v1019
    %vm1030 = vcmp.eq.f32.partialorder %v1029, 8.507059e+37
    %v1031 = vand.u32 %v1019, 2147483648
    %v1032 = vor.u32 1.1754944e-38, %v1031
    %v1033 = vsel %vm1030, %v1032, %v1028
    %v1034 = vmul.f32 1.0, %v1033
    %v1035 = vmul.f32 %v1034, 2.0
    %v1036 = vsub.f32 %v1035, 1.0
    %v1037 = vmul.f32 %v1034, %v960
    %1039 = vrot.lane.b32.xlu0 %v1036, 64
    %v1040 = vpop.permute.xlu0 %1039
    %v1042 = vmul.f32 %v1034, %v1040
    %1044 = vrot.lane.b32.xlu0 %v1042, 32
    %v1045 = vpop.permute.xlu0 %1044
    %v1047 = vadd.f32 %v1037, %v1045
    %v1048 = vtanh.pop %v1047
    %1050 = vrot.lane.b32.xlu0 %v1048, 64
    %v1051 = vpop.permute.xlu0 %1050
    %v1053 = vmul.f32 %v1034, %v1051
    %s1054 = smul.u32 %s952, 8
    %s1055 = scalar_lea.vmem [#allocation2], %s1054
    %v1056 = vld [vmem:[%s1055] sm:$0xff]
    %1057 = vmatpush.msra.mxu0 0.0
    %1058 = vmatpush.msra.mxu0 0.0
    %1059 = vmatpush.msra.mxu0 0.0
    %1060 = vmatpush.msra.mxu0 0.0
    %1061 = vmatpush.msra.mxu0 0.0
    %1062 = vmatpush.msra.mxu0 0.0
    %1063 = vmatpush.msra.mxu0 0.0
    %1064 = vmatpush.msra.mxu0 0.0
    %1065 = vmatpush.msra.mxu0 0.0
    %1066 = vmatpush.msra.mxu0 0.0
    %1067 = vmatpush.msra.mxu0 0.0
    %1068 = vmatpush.msra.mxu0 0.0
    %1069 = vmatpush.msra.mxu0 %v902
    %1070 = vmatpush.msra.mxu0 %v901
    %1071 = vmatpush.msra.mxu0 %v900
    %1072 = vmatpush.msra.mxu0 %v899
    %1073 = vmatmul.f32.gmra.mxu0 %v990
    %v1074 = vpop.f32.mrf.mxu0
    %v1075 = vadd.f32 0.0, %v1074
    %1076 = vdwg.mxu0
    %v1077 = vadd.f32 %v1056, %v1075
    %v1078 = vxor.u32 %v1077, 2147483648
    %v1079 = vmul.f32 %v1078, 1.442695
    %v1080 = vpow.pop %v1079
    %v1081 = vadd.f32 %v1080, 1.0
    %v1082 = vrcp.pop %v1081
    %v1083 = vmul.f32 %v1081, %v1082
    %v1084 = vsub.f32 1.0, %v1083
    %v1085 = vmul.f32 %v1082, %v1084
    %v1086 = vadd.f32 %v1082, %v1085
    %vm1087 = vweird.f32 %v1081
    %vm1088 = vweird.f32 %v1082
    %vm1089 = vmor %vm1087, %vm1088
    %v1090 = vsel %vm1089, %v1082, %v1086
    %v1091 = vand.u32 2147483647, %v1081
    %vm1092 = vcmp.eq.f32.partialorder %v1091, 8.507059e+37
    %v1093 = vand.u32 %v1081, 2147483648
    %v1094 = vor.u32 1.1754944e-38, %v1093
    %v1095 = vsel %vm1092, %v1094, %v1090
    %v1096 = vmul.f32 1.0, %v1095
    %v1097 = vmul.f32 %v1096, 2.0
    %v1098 = vsub.f32 %v1097, 1.0
    %v1099 = vmul.f32 %v1096, %v958
    %1101 = vrot.lane.b32.xlu0 %v1098, 64
    %v1102 = vpop.permute.xlu0 %1101
    %v1104 = vmul.f32 %v1096, %v1102
    %1106 = vrot.lane.b32.xlu0 %v1104, 32
    %v1107 = vpop.permute.xlu0 %1106
    %v1109 = vadd.f32 %v1099, %v1107
    %v1110 = vtanh.pop %v1109
    %1112 = vrot.lane.b32.xlu0 %v1110, 64
    %v1113 = vpop.permute.xlu0 %1112
    %v1115 = vmul.f32 %v1096, %v1113
  $region42: #{srivastava_lstm_forward.1} parent=0 // loop_footer
    %s956 = sadd.s32 1, %s952
  $region43: #{srivastava_lstm_forward.1} parent=0 // loop_footer_branch
    %951 = sbr.rel target = $region39
  $region44: #{srivastava_lstm_forward.1} parent=0 // loop_exit
    _
  %1117 = vrot.lane.b32.xlu0 %v959, 32
  %v1118 = vpop.permute.xlu0 %1117
  %vm1119 = vcmask 261120
  %v1120 = vsel %vm1119, %v1118, 0
  %1122 = vmatpush.msra.mxu0 0.0
  %1123 = vmatpush.msra.mxu0 0.0
  %1124 = vmatpush.msra.mxu0 0.0
  %1125 = vmatpush.msra.mxu0 0.0
  %1126 = vmatpush.msra.mxu0 0.0
  %1127 = vmatpush.msra.mxu0 0.0
  %1128 = vmatpush.msra.mxu0 0.0
  %1129 = vmatpush.msra.mxu0 0.0
  %1130 = vmatpush.msra.mxu0 0.0
  %1131 = vmatpush.msra.mxu0 0.0
  %1132 = vmatpush.msra.mxu0 0.0
  %1133 = vmatpush.msra.mxu0 0.0
  %1134 = vmatpush.msra.mxu0 %v910
  %1135 = vmatpush.msra.mxu0 %v909
  %1136 = vmatpush.msra.mxu0 %v908
  %1137 = vmatpush.msra.mxu0 %v907
  %1138 = vmatmul.f32.gmra.mxu0 %v1120
  %v1139 = vpop.f32.mrf.mxu0
  %v1140 = vadd.f32 0.0, %v1139
  %1141 = vdwg.mxu0
  %1143 = vrot.lane.b32.xlu0 %v957, 32
  %v1144 = vpop.permute.xlu0 %1143
  %v1145 = vsel %vm1119, %v1144, 0
  %1147 = vmatpush.msra.mxu0 0.0
  %1148 = vmatpush.msra.mxu0 0.0
  %1149 = vmatpush.msra.mxu0 0.0
  %1150 = vmatpush.msra.mxu0 0.0
  %1151 = vmatpush.msra.mxu0 0.0
  %1152 = vmatpush.msra.mxu0 0.0
  %1153 = vmatpush.msra.mxu0 0.0
  %1154 = vmatpush.msra.mxu0 0.0
  %1155 = vmatpush.msra.mxu0 0.0
  %1156 = vmatpush.msra.mxu0 0.0
  %1157 = vmatpush.msra.mxu0 0.0
  %1158 = vmatpush.msra.mxu0 0.0
  %1159 = vmatpush.msra.mxu0 %v906
  %1160 = vmatpush.msra.mxu0 %v905
  %1161 = vmatpush.msra.mxu0 %v904
  %1162 = vmatpush.msra.mxu0 %v903
  %1163 = vmatmul.f32.gmra.mxu0 %v1145
  %v1164 = vpop.f32.mrf.mxu0
  %v1165 = vadd.f32 %v1140, %v1164
  %1166 = vdwg.mxu0
  %v1168 = vperm.slane %v911, 0
  %v1170 = vadd.f32 %v1165, %v1168
  %v1171 = vxor.u32 %v1170, 2147483648
  %v1172 = vmul.f32 %v1171, 1.442695
  %v1173 = vpow.pop %v1172
  %v1174 = vadd.f32 %v1173, 1.0
  %v1175 = vrcp.pop %v1174
  %v1176 = vmul.f32 %v1174, %v1175
  %v1177 = vsub.f32 1.0, %v1176
  %v1178 = vmul.f32 %v1175, %v1177
  %v1179 = vadd.f32 %v1175, %v1178
  %vm1180 = vweird.f32 %v1174
  %vm1181 = vweird.f32 %v1175
  %vm1182 = vmor %vm1180, %vm1181
  %v1183 = vsel %vm1182, %v1175, %v1179
  %v1184 = vand.u32 2147483647, %v1174
  %vm1185 = vcmp.eq.f32.partialorder %v1184, 8.507059e+37
  %v1186 = vand.u32 %v1174, 2147483648
  %v1187 = vor.u32 1.1754944e-38, %v1186
  %v1188 = vsel %vm1185, %v1187, %v1183
  %v1189 = vmul.f32 1.0, %v1188
  %v1190 = vmul.f32 %v1189, 2.0
  %v1191 = vsub.f32 %v1190, 1.0
  %v1192 = vmul.f32 %v1189, %v960
  %1194 = vrot.lane.b32.xlu0 %v1191, 64
  %v1195 = vpop.permute.xlu0 %1194
  %v1197 = vmul.f32 %v1189, %v1195
  %1199 = vrot.lane.b32.xlu0 %v1197, 32
  %v1200 = vpop.permute.xlu0 %1199
  %v1202 = vadd.f32 %v1192, %v1200
  %v1203 = vtanh.pop %v1202
  %1205 = vrot.lane.b32.xlu0 %v1203, 64
  %v1206 = vpop.permute.xlu0 %1205
  %v1208 = vmul.f32 %v1189, %v1206
  %s1209 = scalar_lea.vmem %s2, 32
  %v1210 = vld [vmem:[%s1209] sm:$0xff]
  %v1211 = vld [vmem:[%s1209 + $0x8] sm:$0xff]
  %v1212 = vld [vmem:[%s1209 + $0x10] sm:$0xff]
  %v1213 = vld [vmem:[%s1209 + $0x18] sm:$0xff]
  %s1214 = scalar_lea.vmem %s4, 32
  %v1215 = vld [vmem:[%s1214] sm:$0xff]
  %v1216 = vld [vmem:[%s1214 + $0x8] sm:$0xff]
  %v1217 = vld [vmem:[%s1214 + $0x10] sm:$0xff]
  %v1218 = vld [vmem:[%s1214 + $0x18] sm:$0xff]
  %s1219 = scalar_lea.vmem %s5, 32
  %v1220 = vld [vmem:[%s1219] sm:$0xff]
  %v1221 = vld [vmem:[%s1219 + $0x8] sm:$0xff]
  %v1222 = vld [vmem:[%s1219 + $0x10] sm:$0xff]
  %v1223 = vld [vmem:[%s1219 + $0x18] sm:$0xff]
  %s1224 = scalar_lea.vmem %s6, 1
  %v1225 = vld [vmem:[%s1224] sm:$0x1]
  %s1226 = scalar_lea.vmem %s2, 64
  %v1227 = vld [vmem:[%s1226] sm:$0xff]
  %v1228 = vld [vmem:[%s1226 + $0x8] sm:$0xff]
  %v1229 = vld [vmem:[%s1226 + $0x10] sm:$0xff]
  %v1230 = vld [vmem:[%s1226 + $0x18] sm:$0xff]
  %s1231 = scalar_lea.vmem %s4, 64
  %v1232 = vld [vmem:[%s1231] sm:$0xff]
  %v1233 = vld [vmem:[%s1231 + $0x8] sm:$0xff]
  %v1234 = vld [vmem:[%s1231 + $0x10] sm:$0xff]
  %v1235 = vld [vmem:[%s1231 + $0x18] sm:$0xff]
  %s1236 = scalar_lea.vmem %s5, 64
  %v1237 = vld [vmem:[%s1236] sm:$0xff]
  %v1238 = vld [vmem:[%s1236 + $0x8] sm:$0xff]
  %v1239 = vld [vmem:[%s1236 + $0x10] sm:$0xff]
  %v1240 = vld [vmem:[%s1236 + $0x18] sm:$0xff]
  %s1241 = scalar_lea.vmem %s6, 2
  %v1242 = vld [vmem:[%s1241] sm:$0x1]
  %v1243 = vld [vmem:[#allocation3] sm:$0xff]
  %1244 = vmatpush.msra.mxu0 0.0
  %1245 = vmatpush.msra.mxu0 0.0
  %1246 = vmatpush.msra.mxu0 0.0
  %1247 = vmatpush.msra.mxu0 0.0
  %1248 = vmatpush.msra.mxu0 0.0
  %1249 = vmatpush.msra.mxu0 0.0
  %1250 = vmatpush.msra.mxu0 0.0
  %1251 = vmatpush.msra.mxu0 0.0
  %1252 = vmatpush.msra.mxu0 0.0
  %1253 = vmatpush.msra.mxu0 0.0
  %1254 = vmatpush.msra.mxu0 0.0
  %1255 = vmatpush.msra.mxu0 0.0
  %1256 = vmatpush.msra.mxu0 %v1213
  %1257 = vmatpush.msra.mxu0 %v1212
  %1258 = vmatpush.msra.mxu0 %v1211
  %1259 = vmatpush.msra.mxu0 %v1210
  %1260 = vmatmul.f32.gmra.mxu0 %v1145
  %v1261 = vpop.f32.mrf.mxu0
  %v1262 = vadd.f32 0.0, %v1261
  %1263 = vdwg.mxu0
  %v1264 = vadd.f32 %v1243, %v1262
  %v1265 = vxor.u32 %v1264, 2147483648
  %v1266 = vmul.f32 %v1265, 1.442695
  %v1267 = vpow.pop %v1266
  %v1268 = vadd.f32 %v1267, 1.0
  %v1269 = vrcp.pop %v1268
  %v1270 = vmul.f32 %v1268, %v1269
  %v1271 = vsub.f32 1.0, %v1270
  %v1272 = vmul.f32 %v1269, %v1271
  %v1273 = vadd.f32 %v1269, %v1272
  %vm1274 = vweird.f32 %v1268
  %vm1275 = vweird.f32 %v1269
  %vm1276 = vmor %vm1274, %vm1275
  %v1277 = vsel %vm1276, %v1269, %v1273
  %v1278 = vand.u32 2147483647, %v1268
  %vm1279 = vcmp.eq.f32.partialorder %v1278, 8.507059e+37
  %v1280 = vand.u32 %v1268, 2147483648
  %v1281 = vor.u32 1.1754944e-38, %v1280
  %v1282 = vsel %vm1279, %v1281, %v1277
  %v1283 = vmul.f32 1.0, %v1282
  %v1284 = vmul.f32 %v1283, 2.0
  %v1285 = vsub.f32 %v1284, 1.0
  %v1286 = vmul.f32 %v1283, %v958
  %1288 = vrot.lane.b32.xlu0 %v1285, 64
  %v1289 = vpop.permute.xlu0 %1288
  %v1291 = vmul.f32 %v1283, %v1289
  %1293 = vrot.lane.b32.xlu0 %v1291, 32
  %v1294 = vpop.permute.xlu0 %1293
  %v1296 = vadd.f32 %v1286, %v1294
  %v1297 = vtanh.pop %v1296
  %1299 = vrot.lane.b32.xlu0 %v1297, 64
  %v1300 = vpop.permute.xlu0 %1299
  %v1302 = vmul.f32 %v1283, %v1300
  %v1303 = vld [vmem:[#allocation4 + $0x188] sm:$0xff]
  %1304 = vmatpush.msra.mxu0 0.0
  %1305 = vmatpush.msra.mxu0 0.0
  %1306 = vmatpush.msra.mxu0 0.0
  %1307 = vmatpush.msra.mxu0 0.0
  %1308 = vmatpush.msra.mxu0 0.0
  %1309 = vmatpush.msra.mxu0 0.0
  %1310 = vmatpush.msra.mxu0 0.0
  %1311 = vmatpush.msra.mxu0 0.0
  %1312 = vmatpush.msra.mxu0 0.0
  %1313 = vmatpush.msra.mxu0 0.0
  %1314 = vmatpush.msra.mxu0 0.0
  %1315 = vmatpush.msra.mxu0 0.0
  %1316 = vmatpush.msra.mxu0 %v1230
  %1317 = vmatpush.msra.mxu0 %v1229
  %1318 = vmatpush.msra.mxu0 %v1228
  %1319 = vmatpush.msra.mxu0 %v1227
  %1320 = vmatmul.f32.gmra.mxu0 %v1145
  %v1321 = vpop.f32.mrf.mxu0
  %v1322 = vadd.f32 0.0, %v1321
  %1323 = vdwg.mxu0
  %v1324 = vadd.f32 %v1303, %v1322
  %v1325 = vxor.u32 %v1324, 2147483648
  %v1326 = vmul.f32 %v1325, 1.442695
  %v1327 = vpow.pop %v1326
  %v1328 = vadd.f32 %v1327, 1.0
  %v1329 = vrcp.pop %v1328
  %v1330 = vmul.f32 %v1328, %v1329
  %v1331 = vsub.f32 1.0, %v1330
  %v1332 = vmul.f32 %v1329, %v1331
  %v1333 = vadd.f32 %v1329, %v1332
  %vm1334 = vweird.f32 %v1328
  %vm1335 = vweird.f32 %v1329
  %vm1336 = vmor %vm1334, %vm1335
  %v1337 = vsel %vm1336, %v1329, %v1333
  %v1338 = vand.u32 2147483647, %v1328
  %vm1339 = vcmp.eq.f32.partialorder %v1338, 8.507059e+37
  %v1340 = vand.u32 %v1328, 2147483648
  %v1341 = vor.u32 1.1754944e-38, %v1340
  %v1342 = vsel %vm1339, %v1341, %v1337
  %v1343 = vmul.f32 1.0, %v1342
  %v1344 = vmul.f32 %v1343, 2.0
  %v1345 = vsub.f32 %v1344, 1.0
  %v1346 = vmul.f32 %v1343, %v958
  %1348 = vrot.lane.b32.xlu0 %v1345, 64
  %v1349 = vpop.permute.xlu0 %1348
  %v1351 = vmul.f32 %v1343, %v1349
  %1353 = vrot.lane.b32.xlu0 %v1351, 32
  %v1354 = vpop.permute.xlu0 %1353
  %v1356 = vadd.f32 %v1346, %v1354
  %v1357 = vtanh.pop %v1356
  %1359 = vrot.lane.b32.xlu0 %v1357, 64
  %v1360 = vpop.permute.xlu0 %1359
  %v1362 = vmul.f32 %v1343, %v1360
  loop: start=1, step=1, limit=50
  $region45: #{srivastava_lstm_forward.1} parent=0 // loop_pre_header
    _
  $region46: #{srivastava_lstm_forward.1} parent=0 // loop_header
    %s1364 = sphi 1, %s1368
    %p1365 = scmp.ge.s32.totalorder %s1364, 50
    %v1369 = vphi %v1302, %v1638
    %v1370 = vphi %v1296, %v1632
    %v1371 = vphi %v1208, %v1470
    %v1372 = vphi %v1202, %v1464
    %v1373 = vphi %v1362, %v1699
    %v1374 = vphi %v1356, %v1693
    %v1375 = vphi %v1208, %v1562
    %v1376 = vphi %v1202, %v1556
  $region47: #{srivastava_lstm_forward.1} parent=0 // loop_header_branch
    %1367 = sbr.rel (%p1365) target = $region51
  $region48: #{srivastava_lstm_forward.1} parent=0 // loop_body
    %s1377 = ssub.s32 %s1364, 1
    %s1378 = smul.u32 %s1377, 8
    %1380 = vrot.lane.b32.xlu0 %v1371, 32
    %v1381 = vpop.permute.xlu0 %1380
    %v1382 = vsel %vm1119, %v1381, 0
    %1384 = vmatpush.msra.mxu0 0.0
    %1385 = vmatpush.msra.mxu0 0.0
    %1386 = vmatpush.msra.mxu0 0.0
    %1387 = vmatpush.msra.mxu0 0.0
    %1388 = vmatpush.msra.mxu0 0.0
    %1389 = vmatpush.msra.mxu0 0.0
    %1390 = vmatpush.msra.mxu0 0.0
    %1391 = vmatpush.msra.mxu0 0.0
    %1392 = vmatpush.msra.mxu0 0.0
    %1393 = vmatpush.msra.mxu0 0.0
    %1394 = vmatpush.msra.mxu0 0.0
    %1395 = vmatpush.msra.mxu0 0.0
    %1396 = vmatpush.msra.mxu0 %v1223
    %1397 = vmatpush.msra.mxu0 %v1222
    %1398 = vmatpush.msra.mxu0 %v1221
    %1399 = vmatpush.msra.mxu0 %v1220
    %1400 = vmatmul.f32.gmra.mxu0 %v1382
    %v1401 = vpop.f32.mrf.mxu0
    %v1402 = vadd.f32 0.0, %v1401
    %1403 = vdwg.mxu0
    %1405 = vrot.lane.b32.xlu0 %v1369, 32
    %v1406 = vpop.permute.xlu0 %1405
    %v1407 = vsel %vm1119, %v1406, 0
    %1409 = vmatpush.msra.mxu0 0.0
    %1410 = vmatpush.msra.mxu0 0.0
    %1411 = vmatpush.msra.mxu0 0.0
    %1412 = vmatpush.msra.mxu0 0.0
    %1413 = vmatpush.msra.mxu0 0.0
    %1414 = vmatpush.msra.mxu0 0.0
    %1415 = vmatpush.msra.mxu0 0.0
    %1416 = vmatpush.msra.mxu0 0.0
    %1417 = vmatpush.msra.mxu0 0.0
    %1418 = vmatpush.msra.mxu0 0.0
    %1419 = vmatpush.msra.mxu0 0.0
    %1420 = vmatpush.msra.mxu0 0.0
    %1421 = vmatpush.msra.mxu0 %v1218
    %1422 = vmatpush.msra.mxu0 %v1217
    %1423 = vmatpush.msra.mxu0 %v1216
    %1424 = vmatpush.msra.mxu0 %v1215
    %1425 = vmatmul.f32.gmra.mxu0 %v1407
    %v1426 = vpop.f32.mrf.mxu0
    %v1427 = vadd.f32 %v1402, %v1426
    %1428 = vdwg.mxu0
    %v1430 = vperm.slane %v1225, 0
    %v1432 = vadd.f32 %v1427, %v1430
    %v1433 = vxor.u32 %v1432, 2147483648
    %v1434 = vmul.f32 %v1433, 1.442695
    %v1435 = vpow.pop %v1434
    %v1436 = vadd.f32 %v1435, 1.0
    %v1437 = vrcp.pop %v1436
    %v1438 = vmul.f32 %v1436, %v1437
    %v1439 = vsub.f32 1.0, %v1438
    %v1440 = vmul.f32 %v1437, %v1439
    %v1441 = vadd.f32 %v1437, %v1440
    %vm1442 = vweird.f32 %v1436
    %vm1443 = vweird.f32 %v1437
    %vm1444 = vmor %vm1442, %vm1443
    %v1445 = vsel %vm1444, %v1437, %v1441
    %v1446 = vand.u32 2147483647, %v1436
    %vm1447 = vcmp.eq.f32.partialorder %v1446, 8.507059e+37
    %v1448 = vand.u32 %v1436, 2147483648
    %v1449 = vor.u32 1.1754944e-38, %v1448
    %v1450 = vsel %vm1447, %v1449, %v1445
    %v1451 = vmul.f32 1.0, %v1450
    %v1452 = vmul.f32 %v1451, 2.0
    %v1453 = vsub.f32 %v1452, 1.0
    %v1454 = vmul.f32 %v1451, %v1372
    %1456 = vrot.lane.b32.xlu0 %v1453, 64
    %v1457 = vpop.permute.xlu0 %1456
    %v1459 = vmul.f32 %v1451, %v1457
    %1461 = vrot.lane.b32.xlu0 %v1459, 32
    %v1462 = vpop.permute.xlu0 %1461
    %v1464 = vadd.f32 %v1454, %v1462
    %v1465 = vtanh.pop %v1464
    %1467 = vrot.lane.b32.xlu0 %v1465, 64
    %v1468 = vpop.permute.xlu0 %1467
    %v1470 = vmul.f32 %v1451, %v1468
    %1472 = vrot.lane.b32.xlu0 %v1375, 32
    %v1473 = vpop.permute.xlu0 %1472
    %v1474 = vsel %vm1119, %v1473, 0
    %1476 = vmatpush.msra.mxu0 0.0
    %1477 = vmatpush.msra.mxu0 0.0
    %1478 = vmatpush.msra.mxu0 0.0
    %1479 = vmatpush.msra.mxu0 0.0
    %1480 = vmatpush.msra.mxu0 0.0
    %1481 = vmatpush.msra.mxu0 0.0
    %1482 = vmatpush.msra.mxu0 0.0
    %1483 = vmatpush.msra.mxu0 0.0
    %1484 = vmatpush.msra.mxu0 0.0
    %1485 = vmatpush.msra.mxu0 0.0
    %1486 = vmatpush.msra.mxu0 0.0
    %1487 = vmatpush.msra.mxu0 0.0
    %1488 = vmatpush.msra.mxu0 %v1240
    %1489 = vmatpush.msra.mxu0 %v1239
    %1490 = vmatpush.msra.mxu0 %v1238
    %1491 = vmatpush.msra.mxu0 %v1237
    %1492 = vmatmul.f32.gmra.mxu0 %v1474
    %v1493 = vpop.f32.mrf.mxu0
    %v1494 = vadd.f32 0.0, %v1493
    %1495 = vdwg.mxu0
    %1497 = vrot.lane.b32.xlu0 %v1373, 32
    %v1498 = vpop.permute.xlu0 %1497
    %v1499 = vsel %vm1119, %v1498, 0
    %1501 = vmatpush.msra.mxu0 0.0
    %1502 = vmatpush.msra.mxu0 0.0
    %1503 = vmatpush.msra.mxu0 0.0
    %1504 = vmatpush.msra.mxu0 0.0
    %1505 = vmatpush.msra.mxu0 0.0
    %1506 = vmatpush.msra.mxu0 0.0
    %1507 = vmatpush.msra.mxu0 0.0
    %1508 = vmatpush.msra.mxu0 0.0
    %1509 = vmatpush.msra.mxu0 0.0
    %1510 = vmatpush.msra.mxu0 0.0
    %1511 = vmatpush.msra.mxu0 0.0
    %1512 = vmatpush.msra.mxu0 0.0
    %1513 = vmatpush.msra.mxu0 %v1235
    %1514 = vmatpush.msra.mxu0 %v1234
    %1515 = vmatpush.msra.mxu0 %v1233
    %1516 = vmatpush.msra.mxu0 %v1232
    %1517 = vmatmul.f32.gmra.mxu0 %v1499
    %v1518 = vpop.f32.mrf.mxu0
    %v1519 = vadd.f32 %v1494, %v1518
    %1520 = vdwg.mxu0
    %v1522 = vperm.slane %v1242, 0
    %v1524 = vadd.f32 %v1519, %v1522
    %v1525 = vxor.u32 %v1524, 2147483648
    %v1526 = vmul.f32 %v1525, 1.442695
    %v1527 = vpow.pop %v1526
    %v1528 = vadd.f32 %v1527, 1.0
    %v1529 = vrcp.pop %v1528
    %v1530 = vmul.f32 %v1528, %v1529
    %v1531 = vsub.f32 1.0, %v1530
    %v1532 = vmul.f32 %v1529, %v1531
    %v1533 = vadd.f32 %v1529, %v1532
    %vm1534 = vweird.f32 %v1528
    %vm1535 = vweird.f32 %v1529
    %vm1536 = vmor %vm1534, %vm1535
    %v1537 = vsel %vm1536, %v1529, %v1533
    %v1538 = vand.u32 2147483647, %v1528
    %vm1539 = vcmp.eq.f32.partialorder %v1538, 8.507059e+37
    %v1540 = vand.u32 %v1528, 2147483648
    %v1541 = vor.u32 1.1754944e-38, %v1540
    %v1542 = vsel %vm1539, %v1541, %v1537
    %v1543 = vmul.f32 1.0, %v1542
    %v1544 = vmul.f32 %v1543, 2.0
    %v1545 = vsub.f32 %v1544, 1.0
    %v1546 = vmul.f32 %v1543, %v1376
    %1548 = vrot.lane.b32.xlu0 %v1545, 64
    %v1549 = vpop.permute.xlu0 %1548
    %v1551 = vmul.f32 %v1543, %v1549
    %1553 = vrot.lane.b32.xlu0 %v1551, 32
    %v1554 = vpop.permute.xlu0 %1553
    %v1556 = vadd.f32 %v1546, %v1554
    %v1557 = vtanh.pop %v1556
    %1559 = vrot.lane.b32.xlu0 %v1557, 64
    %v1560 = vpop.permute.xlu0 %1559
    %v1562 = vmul.f32 %v1543, %v1560
    %1564 = vrot.lane.b32.xlu0 %v1470, 32
    %v1565 = vpop.permute.xlu0 %1564
    %s1567 = scalar_lea.vmem [#allocation5], %s1378
    %1568 = vst.msk [vmem:[%s1567] sm:$0xff] %vm1119, %v1565
    %1570 = vrot.lane.b32.xlu0 %v1562, 32
    %v1571 = vpop.permute.xlu0 %1570
    %s1573 = scalar_lea.vmem [#allocation6], %s1378
    %1574 = vst.msk [vmem:[%s1573] sm:$0xff] %vm1119, %v1571
    %s1575 = smul.u32 %s1364, 8
    %s1576 = ssub.s32 49, %s1364
    %s1577 = smul.u32 %s1576, 8
    %s1578 = scalar_lea.vmem [#allocation3], %s1575
    %v1579 = vld [vmem:[%s1578] sm:$0xff]
    %1580 = vmatpush.msra.mxu0 0.0
    %1581 = vmatpush.msra.mxu0 0.0
    %1582 = vmatpush.msra.mxu0 0.0
    %1583 = vmatpush.msra.mxu0 0.0
    %1584 = vmatpush.msra.mxu0 0.0
    %1585 = vmatpush.msra.mxu0 0.0
    %1586 = vmatpush.msra.mxu0 0.0
    %1587 = vmatpush.msra.mxu0 0.0
    %1588 = vmatpush.msra.mxu0 0.0
    %1589 = vmatpush.msra.mxu0 0.0
    %1590 = vmatpush.msra.mxu0 0.0
    %1591 = vmatpush.msra.mxu0 0.0
    %1592 = vmatpush.msra.mxu0 %v1213
    %1593 = vmatpush.msra.mxu0 %v1212
    %1594 = vmatpush.msra.mxu0 %v1211
    %1595 = vmatpush.msra.mxu0 %v1210
    %1596 = vmatmul.f32.gmra.mxu0 %v1407
    %v1597 = vpop.f32.mrf.mxu0
    %v1598 = vadd.f32 0.0, %v1597
    %1599 = vdwg.mxu0
    %v1600 = vadd.f32 %v1579, %v1598
    %v1601 = vxor.u32 %v1600, 2147483648
    %v1602 = vmul.f32 %v1601, 1.442695
    %v1603 = vpow.pop %v1602
    %v1604 = vadd.f32 %v1603, 1.0
    %v1605 = vrcp.pop %v1604
    %v1606 = vmul.f32 %v1604, %v1605
    %v1607 = vsub.f32 1.0, %v1606
    %v1608 = vmul.f32 %v1605, %v1607
    %v1609 = vadd.f32 %v1605, %v1608
    %vm1610 = vweird.f32 %v1604
    %vm1611 = vweird.f32 %v1605
    %vm1612 = vmor %vm1610, %vm1611
    %v1613 = vsel %vm1612, %v1605, %v1609
    %v1614 = vand.u32 2147483647, %v1604
    %vm1615 = vcmp.eq.f32.partialorder %v1614, 8.507059e+37
    %v1616 = vand.u32 %v1604, 2147483648
    %v1617 = vor.u32 1.1754944e-38, %v1616
    %v1618 = vsel %vm1615, %v1617, %v1613
    %v1619 = vmul.f32 1.0, %v1618
    %v1620 = vmul.f32 %v1619, 2.0
    %v1621 = vsub.f32 %v1620, 1.0
    %v1622 = vmul.f32 %v1619, %v1370
    %1624 = vrot.lane.b32.xlu0 %v1621, 64
    %v1625 = vpop.permute.xlu0 %1624
    %v1627 = vmul.f32 %v1619, %v1625
    %1629 = vrot.lane.b32.xlu0 %v1627, 32
    %v1630 = vpop.permute.xlu0 %1629
    %v1632 = vadd.f32 %v1622, %v1630
    %v1633 = vtanh.pop %v1632
    %1635 = vrot.lane.b32.xlu0 %v1633, 64
    %v1636 = vpop.permute.xlu0 %1635
    %v1638 = vmul.f32 %v1619, %v1636
    %s1639 = scalar_lea.vmem [#allocation4], %s1577
    %v1640 = vld [vmem:[%s1639] sm:$0xff]
    %1641 = vmatpush.msra.mxu0 0.0
    %1642 = vmatpush.msra.mxu0 0.0
    %1643 = vmatpush.msra.mxu0 0.0
    %1644 = vmatpush.msra.mxu0 0.0
    %1645 = vmatpush.msra.mxu0 0.0
    %1646 = vmatpush.msra.mxu0 0.0
    %1647 = vmatpush.msra.mxu0 0.0
    %1648 = vmatpush.msra.mxu0 0.0
    %1649 = vmatpush.msra.mxu0 0.0
    %1650 = vmatpush.msra.mxu0 0.0
    %1651 = vmatpush.msra.mxu0 0.0
    %1652 = vmatpush.msra.mxu0 0.0
    %1653 = vmatpush.msra.mxu0 %v1230
    %1654 = vmatpush.msra.mxu0 %v1229
    %1655 = vmatpush.msra.mxu0 %v1228
    %1656 = vmatpush.msra.mxu0 %v1227
    %1657 = vmatmul.f32.gmra.mxu0 %v1499
    %v1658 = vpop.f32.mrf.mxu0
    %v1659 = vadd.f32 0.0, %v1658
    %1660 = vdwg.mxu0
    %v1661 = vadd.f32 %v1640, %v1659
    %v1662 = vxor.u32 %v1661, 2147483648
    %v1663 = vmul.f32 %v1662, 1.442695
    %v1664 = vpow.pop %v1663
    %v1665 = vadd.f32 %v1664, 1.0
    %v1666 = vrcp.pop %v1665
    %v1667 = vmul.f32 %v1665, %v1666
    %v1668 = vsub.f32 1.0, %v1667
    %v1669 = vmul.f32 %v1666, %v1668
    %v1670 = vadd.f32 %v1666, %v1669
    %vm1671 = vweird.f32 %v1665
    %vm1672 = vweird.f32 %v1666
    %vm1673 = vmor %vm1671, %vm1672
    %v1674 = vsel %vm1673, %v1666, %v1670
    %v1675 = vand.u32 2147483647, %v1665
    %vm1676 = vcmp.eq.f32.partialorder %v1675, 8.507059e+37
    %v1677 = vand.u32 %v1665, 2147483648
    %v1678 = vor.u32 1.1754944e-38, %v1677
    %v1679 = vsel %vm1676, %v1678, %v1674
    %v1680 = vmul.f32 1.0, %v1679
    %v1681 = vmul.f32 %v1680, 2.0
    %v1682 = vsub.f32 %v1681, 1.0
    %v1683 = vmul.f32 %v1680, %v1374
    %1685 = vrot.lane.b32.xlu0 %v1682, 64
    %v1686 = vpop.permute.xlu0 %1685
    %v1688 = vmul.f32 %v1680, %v1686
    %1690 = vrot.lane.b32.xlu0 %v1688, 32
    %v1691 = vpop.permute.xlu0 %1690
    %v1693 = vadd.f32 %v1683, %v1691
    %v1694 = vtanh.pop %v1693
    %1696 = vrot.lane.b32.xlu0 %v1694, 64
    %v1697 = vpop.permute.xlu0 %1696
    %v1699 = vmul.f32 %v1680, %v1697
  $region49: #{srivastava_lstm_forward.1} parent=0 // loop_footer
    %s1368 = sadd.s32 1, %s1364
  $region50: #{srivastava_lstm_forward.1} parent=0 // loop_footer_branch
    %1363 = sbr.rel target = $region46
  $region51: #{srivastava_lstm_forward.1} parent=0 // loop_exit
    _
  %1701 = vrot.lane.b32.xlu0 %v1371, 32
  %v1702 = vpop.permute.xlu0 %1701
  %v1703 = vsel %vm1119, %v1702, 0
  %1705 = vmatpush.msra.mxu0 0.0
  %1706 = vmatpush.msra.mxu0 0.0
  %1707 = vmatpush.msra.mxu0 0.0
  %1708 = vmatpush.msra.mxu0 0.0
  %1709 = vmatpush.msra.mxu0 0.0
  %1710 = vmatpush.msra.mxu0 0.0
  %1711 = vmatpush.msra.mxu0 0.0
  %1712 = vmatpush.msra.mxu0 0.0
  %1713 = vmatpush.msra.mxu0 0.0
  %1714 = vmatpush.msra.mxu0 0.0
  %1715 = vmatpush.msra.mxu0 0.0
  %1716 = vmatpush.msra.mxu0 0.0
  %1717 = vmatpush.msra.mxu0 %v1223
  %1718 = vmatpush.msra.mxu0 %v1222
  %1719 = vmatpush.msra.mxu0 %v1221
  %1720 = vmatpush.msra.mxu0 %v1220
  %1721 = vmatmul.f32.gmra.mxu0 %v1703
  %v1722 = vpop.f32.mrf.mxu0
  %v1723 = vadd.f32 0.0, %v1722
  %1724 = vdwg.mxu0
  %1726 = vrot.lane.b32.xlu0 %v1369, 32
  %v1727 = vpop.permute.xlu0 %1726
  %v1728 = vsel %vm1119, %v1727, 0
  %1730 = vmatpush.msra.mxu0 0.0
  %1731 = vmatpush.msra.mxu0 0.0
  %1732 = vmatpush.msra.mxu0 0.0
  %1733 = vmatpush.msra.mxu0 0.0
  %1734 = vmatpush.msra.mxu0 0.0
  %1735 = vmatpush.msra.mxu0 0.0
  %1736 = vmatpush.msra.mxu0 0.0
  %1737 = vmatpush.msra.mxu0 0.0
  %1738 = vmatpush.msra.mxu0 0.0
  %1739 = vmatpush.msra.mxu0 0.0
  %1740 = vmatpush.msra.mxu0 0.0
  %1741 = vmatpush.msra.mxu0 0.0
  %1742 = vmatpush.msra.mxu0 %v1218
  %1743 = vmatpush.msra.mxu0 %v1217
  %1744 = vmatpush.msra.mxu0 %v1216
  %1745 = vmatpush.msra.mxu0 %v1215
  %1746 = vmatmul.f32.gmra.mxu0 %v1728
  %v1747 = vpop.f32.mrf.mxu0
  %v1748 = vadd.f32 %v1723, %v1747
  %1749 = vdwg.mxu0
  %v1751 = vperm.slane %v1225, 0
  %v1753 = vadd.f32 %v1748, %v1751
  %v1754 = vxor.u32 %v1753, 2147483648
  %v1755 = vmul.f32 %v1754, 1.442695
  %v1756 = vpow.pop %v1755
  %v1757 = vadd.f32 %v1756, 1.0
  %v1758 = vrcp.pop %v1757
  %v1759 = vmul.f32 %v1757, %v1758
  %v1760 = vsub.f32 1.0, %v1759
  %v1761 = vmul.f32 %v1758, %v1760
  %v1762 = vadd.f32 %v1758, %v1761
  %vm1763 = vweird.f32 %v1757
  %vm1764 = vweird.f32 %v1758
  %vm1765 = vmor %vm1763, %vm1764
  %v1766 = vsel %vm1765, %v1758, %v1762
  %v1767 = vand.u32 2147483647, %v1757
  %vm1768 = vcmp.eq.f32.partialorder %v1767, 8.507059e+37
  %v1769 = vand.u32 %v1757, 2147483648
  %v1770 = vor.u32 1.1754944e-38, %v1769
  %v1771 = vsel %vm1768, %v1770, %v1766
  %v1772 = vmul.f32 1.0, %v1771
  %v1773 = vmul.f32 %v1772, 2.0
  %v1774 = vsub.f32 %v1773, 1.0
  %v1775 = vmul.f32 %v1772, %v1372
  %1777 = vrot.lane.b32.xlu0 %v1774, 64
  %v1778 = vpop.permute.xlu0 %1777
  %v1780 = vmul.f32 %v1772, %v1778
  %1782 = vrot.lane.b32.xlu0 %v1780, 32
  %v1783 = vpop.permute.xlu0 %1782
  %v1785 = vadd.f32 %v1775, %v1783
  %v1786 = vtanh.pop %v1785
  %1788 = vrot.lane.b32.xlu0 %v1786, 64
  %v1789 = vpop.permute.xlu0 %1788
  %v1791 = vmul.f32 %v1772, %v1789
  %1793 = vrot.lane.b32.xlu0 %v1375, 32
  %v1794 = vpop.permute.xlu0 %1793
  %v1795 = vsel %vm1119, %v1794, 0
  %1797 = vmatpush.msra.mxu0 0.0
  %1798 = vmatpush.msra.mxu0 0.0
  %1799 = vmatpush.msra.mxu0 0.0
  %1800 = vmatpush.msra.mxu0 0.0
  %1801 = vmatpush.msra.mxu0 0.0
  %1802 = vmatpush.msra.mxu0 0.0
  %1803 = vmatpush.msra.mxu0 0.0
  %1804 = vmatpush.msra.mxu0 0.0
  %1805 = vmatpush.msra.mxu0 0.0
  %1806 = vmatpush.msra.mxu0 0.0
  %1807 = vmatpush.msra.mxu0 0.0
  %1808 = vmatpush.msra.mxu0 0.0
  %1809 = vmatpush.msra.mxu0 %v1240
  %1810 = vmatpush.msra.mxu0 %v1239
  %1811 = vmatpush.msra.mxu0 %v1238
  %1812 = vmatpush.msra.mxu0 %v1237
  %1813 = vmatmul.f32.gmra.mxu0 %v1795
  %v1814 = vpop.f32.mrf.mxu0
  %v1815 = vadd.f32 0.0, %v1814
  %1816 = vdwg.mxu0
  %1818 = vrot.lane.b32.xlu0 %v1373, 32
  %v1819 = vpop.permute.xlu0 %1818
  %v1820 = vsel %vm1119, %v1819, 0
  %1822 = vmatpush.msra.mxu0 0.0
  %1823 = vmatpush.msra.mxu0 0.0
  %1824 = vmatpush.msra.mxu0 0.0
  %1825 = vmatpush.msra.mxu0 0.0
  %1826 = vmatpush.msra.mxu0 0.0
  %1827 = vmatpush.msra.mxu0 0.0
  %1828 = vmatpush.msra.mxu0 0.0
  %1829 = vmatpush.msra.mxu0 0.0
  %1830 = vmatpush.msra.mxu0 0.0
  %1831 = vmatpush.msra.mxu0 0.0
  %1832 = vmatpush.msra.mxu0 0.0
  %1833 = vmatpush.msra.mxu0 0.0
  %1834 = vmatpush.msra.mxu0 %v1235
  %1835 = vmatpush.msra.mxu0 %v1234
  %1836 = vmatpush.msra.mxu0 %v1233
  %1837 = vmatpush.msra.mxu0 %v1232
  %1838 = vmatmul.f32.gmra.mxu0 %v1820
  %v1839 = vpop.f32.mrf.mxu0
  %v1840 = vadd.f32 %v1815, %v1839
  %1841 = vdwg.mxu0
  %v1843 = vperm.slane %v1242, 0
  %v1845 = vadd.f32 %v1840, %v1843
  %v1846 = vxor.u32 %v1845, 2147483648
  %v1847 = vmul.f32 %v1846, 1.442695
  %v1848 = vpow.pop %v1847
  %v1849 = vadd.f32 %v1848, 1.0
  %v1850 = vrcp.pop %v1849
  %v1851 = vmul.f32 %v1849, %v1850
  %v1852 = vsub.f32 1.0, %v1851
  %v1853 = vmul.f32 %v1850, %v1852
  %v1854 = vadd.f32 %v1850, %v1853
  %vm1855 = vweird.f32 %v1849
  %vm1856 = vweird.f32 %v1850
  %vm1857 = vmor %vm1855, %vm1856
  %v1858 = vsel %vm1857, %v1850, %v1854
  %v1859 = vand.u32 2147483647, %v1849
  %vm1860 = vcmp.eq.f32.partialorder %v1859, 8.507059e+37
  %v1861 = vand.u32 %v1849, 2147483648
  %v1862 = vor.u32 1.1754944e-38, %v1861
  %v1863 = vsel %vm1860, %v1862, %v1858
  %v1864 = vmul.f32 1.0, %v1863
  %v1865 = vmul.f32 %v1864, 2.0
  %v1866 = vsub.f32 %v1865, 1.0
  %v1867 = vmul.f32 %v1864, %v1376
  %1869 = vrot.lane.b32.xlu0 %v1866, 64
  %v1870 = vpop.permute.xlu0 %1869
  %v1872 = vmul.f32 %v1864, %v1870
  %1874 = vrot.lane.b32.xlu0 %v1872, 32
  %v1875 = vpop.permute.xlu0 %1874
  %v1877 = vadd.f32 %v1867, %v1875
  %v1878 = vtanh.pop %v1877
  %1880 = vrot.lane.b32.xlu0 %v1878, 64
  %v1881 = vpop.permute.xlu0 %1880
  %v1883 = vmul.f32 %v1864, %v1881
  %1885 = vrot.lane.b32.xlu0 %v1791, 32
  %v1886 = vpop.permute.xlu0 %1885
  %1888 = vst.msk [vmem:[#allocation5 + $0x188] sm:$0xff] %vm1119, %v1886
  %1890 = vrot.lane.b32.xlu0 %v1883, 32
  %v1891 = vpop.permute.xlu0 %1890
  %1893 = vst.msk [vmem:[#allocation6 + $0x188] sm:$0xff] %vm1119, %v1891
  %v1894 = vld [vmem:[#allocation3 + $0x190] sm:$0xff]
  %1895 = vmatpush.msra.mxu0 0.0
  %1896 = vmatpush.msra.mxu0 0.0
  %1897 = vmatpush.msra.mxu0 0.0
  %1898 = vmatpush.msra.mxu0 0.0
  %1899 = vmatpush.msra.mxu0 0.0
  %1900 = vmatpush.msra.mxu0 0.0
  %1901 = vmatpush.msra.mxu0 0.0
  %1902 = vmatpush.msra.mxu0 0.0
  %1903 = vmatpush.msra.mxu0 0.0
  %1904 = vmatpush.msra.mxu0 0.0
  %1905 = vmatpush.msra.mxu0 0.0
  %1906 = vmatpush.msra.mxu0 0.0
  %1907 = vmatpush.msra.mxu0 %v1213
  %1908 = vmatpush.msra.mxu0 %v1212
  %1909 = vmatpush.msra.mxu0 %v1211
  %1910 = vmatpush.msra.mxu0 %v1210
  %1911 = vmatmul.f32.gmra.mxu0 %v1728
  %v1912 = vpop.f32.mrf.mxu0
  %v1913 = vadd.f32 0.0, %v1912
  %1914 = vdwg.mxu0
  %v1915 = vadd.f32 %v1894, %v1913
  %v1916 = vxor.u32 %v1915, 2147483648
  %v1917 = vmul.f32 %v1916, 1.442695
  %v1918 = vpow.pop %v1917
  %v1919 = vadd.f32 %v1918, 1.0
  %v1920 = vrcp.pop %v1919
  %v1921 = vmul.f32 %v1919, %v1920
  %v1922 = vsub.f32 1.0, %v1921
  %v1923 = vmul.f32 %v1920, %v1922
  %v1924 = vadd.f32 %v1920, %v1923
  %vm1925 = vweird.f32 %v1919
  %vm1926 = vweird.f32 %v1920
  %vm1927 = vmor %vm1925, %vm1926
  %v1928 = vsel %vm1927, %v1920, %v1924
  %v1929 = vand.u32 2147483647, %v1919
  %vm1930 = vcmp.eq.f32.partialorder %v1929, 8.507059e+37
  %v1931 = vand.u32 %v1919, 2147483648
  %v1932 = vor.u32 1.1754944e-38, %v1931
  %v1933 = vsel %vm1930, %v1932, %v1928
  %v1934 = vmul.f32 1.0, %v1933
  %v1935 = vmul.f32 %v1934, 2.0
  %v1936 = vsub.f32 %v1935, 1.0
  %v1937 = vmul.f32 %v1934, %v1370
  %1939 = vrot.lane.b32.xlu0 %v1936, 64
  %v1940 = vpop.permute.xlu0 %1939
  %v1942 = vmul.f32 %v1934, %v1940
  %1944 = vrot.lane.b32.xlu0 %v1942, 32
  %v1945 = vpop.permute.xlu0 %1944
  %v1947 = vadd.f32 %v1937, %v1945
  %v1948 = vtanh.pop %v1947
  %1950 = vrot.lane.b32.xlu0 %v1948, 64
  %v1951 = vpop.permute.xlu0 %1950
  %v1953 = vmul.f32 %v1934, %v1951
  loop: start=51, step=1, limit=60
  $region52: #{srivastava_lstm_forward.1} parent=0 // loop_pre_header
    _
  $region53: #{srivastava_lstm_forward.1} parent=0 // loop_header
    %s1955 = sphi 51, %s1959
    %p1956 = scmp.ge.s32.totalorder %s1955, 60
    %v1960 = vphi %v1953, %v2122
    %v1961 = vphi %v1947, %v2116
    %v1962 = vphi %v1791, %v2054
    %v1963 = vphi %v1785, %v2048
  $region54: #{srivastava_lstm_forward.1} parent=0 // loop_header_branch
    %1958 = sbr.rel (%p1956) target = $region58
  $region55: #{srivastava_lstm_forward.1} parent=0 // loop_body
    %s1964 = ssub.s32 %s1955, 1
    %s1965 = smul.u32 %s1964, 8
    %1967 = vrot.lane.b32.xlu0 %v1962, 32
    %v1968 = vpop.permute.xlu0 %1967
    %v1969 = vsel %vm1119, %v1968, 0
    %1971 = vmatpush.msra.mxu0 0.0
    %1972 = vmatpush.msra.mxu0 0.0
    %1973 = vmatpush.msra.mxu0 0.0
    %1974 = vmatpush.msra.mxu0 0.0
    %1975 = vmatpush.msra.mxu0 0.0
    %1976 = vmatpush.msra.mxu0 0.0
    %1977 = vmatpush.msra.mxu0 0.0
    %1978 = vmatpush.msra.mxu0 0.0
    %1979 = vmatpush.msra.mxu0 0.0
    %1980 = vmatpush.msra.mxu0 0.0
    %1981 = vmatpush.msra.mxu0 0.0
    %1982 = vmatpush.msra.mxu0 0.0
    %1983 = vmatpush.msra.mxu0 %v1223
    %1984 = vmatpush.msra.mxu0 %v1222
    %1985 = vmatpush.msra.mxu0 %v1221
    %1986 = vmatpush.msra.mxu0 %v1220
    %1987 = vmatmul.f32.gmra.mxu0 %v1969
    %v1988 = vpop.f32.mrf.mxu0
    %v1989 = vadd.f32 0.0, %v1988
    %1990 = vdwg.mxu0
    %1992 = vrot.lane.b32.xlu0 %v1960, 32
    %v1993 = vpop.permute.xlu0 %1992
    %v1994 = vsel %vm1119, %v1993, 0
    %1996 = vmatpush.msra.mxu0 0.0
    %1997 = vmatpush.msra.mxu0 0.0
    %1998 = vmatpush.msra.mxu0 0.0
    %1999 = vmatpush.msra.mxu0 0.0
    %2000 = vmatpush.msra.mxu0 0.0
    %2001 = vmatpush.msra.mxu0 0.0
    %2002 = vmatpush.msra.mxu0 0.0
    %2003 = vmatpush.msra.mxu0 0.0
    %2004 = vmatpush.msra.mxu0 0.0
    %2005 = vmatpush.msra.mxu0 0.0
    %2006 = vmatpush.msra.mxu0 0.0
    %2007 = vmatpush.msra.mxu0 0.0
    %2008 = vmatpush.msra.mxu0 %v1218
    %2009 = vmatpush.msra.mxu0 %v1217
    %2010 = vmatpush.msra.mxu0 %v1216
    %2011 = vmatpush.msra.mxu0 %v1215
    %2012 = vmatmul.f32.gmra.mxu0 %v1994
    %v2013 = vpop.f32.mrf.mxu0
    %v2014 = vadd.f32 %v1989, %v2013
    %2015 = vdwg.mxu0
    %v2016 = vadd.f32 %v2014, %v1751
    %v2017 = vxor.u32 %v2016, 2147483648
    %v2018 = vmul.f32 %v2017, 1.442695
    %v2019 = vpow.pop %v2018
    %v2020 = vadd.f32 %v2019, 1.0
    %v2021 = vrcp.pop %v2020
    %v2022 = vmul.f32 %v2020, %v2021
    %v2023 = vsub.f32 1.0, %v2022
    %v2024 = vmul.f32 %v2021, %v2023
    %v2025 = vadd.f32 %v2021, %v2024
    %vm2026 = vweird.f32 %v2020
    %vm2027 = vweird.f32 %v2021
    %vm2028 = vmor %vm2026, %vm2027
    %v2029 = vsel %vm2028, %v2021, %v2025
    %v2030 = vand.u32 2147483647, %v2020
    %vm2031 = vcmp.eq.f32.partialorder %v2030, 8.507059e+37
    %v2032 = vand.u32 %v2020, 2147483648
    %v2033 = vor.u32 1.1754944e-38, %v2032
    %v2034 = vsel %vm2031, %v2033, %v2029
    %v2035 = vmul.f32 1.0, %v2034
    %v2036 = vmul.f32 %v2035, 2.0
    %v2037 = vsub.f32 %v2036, 1.0
    %v2038 = vmul.f32 %v2035, %v1963
    %2040 = vrot.lane.b32.xlu0 %v2037, 64
    %v2041 = vpop.permute.xlu0 %2040
    %v2043 = vmul.f32 %v2035, %v2041
    %2045 = vrot.lane.b32.xlu0 %v2043, 32
    %v2046 = vpop.permute.xlu0 %2045
    %v2048 = vadd.f32 %v2038, %v2046
    %v2049 = vtanh.pop %v2048
    %2051 = vrot.lane.b32.xlu0 %v2049, 64
    %v2052 = vpop.permute.xlu0 %2051
    %v2054 = vmul.f32 %v2035, %v2052
    %2056 = vrot.lane.b32.xlu0 %v2054, 32
    %v2057 = vpop.permute.xlu0 %2056
    %s2059 = scalar_lea.vmem [#allocation5], %s1965
    %2060 = vst.msk [vmem:[%s2059] sm:$0xff] %vm1119, %v2057
    %s2061 = smul.u32 %s1955, 8
    %s2062 = scalar_lea.vmem [#allocation3], %s2061
    %v2063 = vld [vmem:[%s2062] sm:$0xff]
    %2064 = vmatpush.msra.mxu0 0.0
    %2065 = vmatpush.msra.mxu0 0.0
    %2066 = vmatpush.msra.mxu0 0.0
    %2067 = vmatpush.msra.mxu0 0.0
    %2068 = vmatpush.msra.mxu0 0.0
    %2069 = vmatpush.msra.mxu0 0.0
    %2070 = vmatpush.msra.mxu0 0.0
    %2071 = vmatpush.msra.mxu0 0.0
    %2072 = vmatpush.msra.mxu0 0.0
    %2073 = vmatpush.msra.mxu0 0.0
    %2074 = vmatpush.msra.mxu0 0.0
    %2075 = vmatpush.msra.mxu0 0.0
    %2076 = vmatpush.msra.mxu0 %v1213
    %2077 = vmatpush.msra.mxu0 %v1212
    %2078 = vmatpush.msra.mxu0 %v1211
    %2079 = vmatpush.msra.mxu0 %v1210
    %2080 = vmatmul.f32.gmra.mxu0 %v1994
    %v2081 = vpop.f32.mrf.mxu0
    %v2082 = vadd.f32 0.0, %v2081
    %2083 = vdwg.mxu0
    %v2084 = vadd.f32 %v2063, %v2082
    %v2085 = vxor.u32 %v2084, 2147483648
    %v2086 = vmul.f32 %v2085, 1.442695
    %v2087 = vpow.pop %v2086
    %v2088 = vadd.f32 %v2087, 1.0
    %v2089 = vrcp.pop %v2088
    %v2090 = vmul.f32 %v2088, %v2089
    %v2091 = vsub.f32 1.0, %v2090
    %v2092 = vmul.f32 %v2089, %v2091
    %v2093 = vadd.f32 %v2089, %v2092
    %vm2094 = vweird.f32 %v2088
    %vm2095 = vweird.f32 %v2089
    %vm2096 = vmor %vm2094, %vm2095
    %v2097 = vsel %vm2096, %v2089, %v2093
    %v2098 = vand.u32 2147483647, %v2088
    %vm2099 = vcmp.eq.f32.partialorder %v2098, 8.507059e+37
    %v2100 = vand.u32 %v2088, 2147483648
    %v2101 = vor.u32 1.1754944e-38, %v2100
    %v2102 = vsel %vm2099, %v2101, %v2097
    %v2103 = vmul.f32 1.0, %v2102
    %v2104 = vmul.f32 %v2103, 2.0
    %v2105 = vsub.f32 %v2104, 1.0
    %v2106 = vmul.f32 %v2103, %v1961
    %2108 = vrot.lane.b32.xlu0 %v2105, 64
    %v2109 = vpop.permute.xlu0 %2108
    %v2111 = vmul.f32 %v2103, %v2109
    %2113 = vrot.lane.b32.xlu0 %v2111, 32
    %v2114 = vpop.permute.xlu0 %2113
    %v2116 = vadd.f32 %v2106, %v2114
    %v2117 = vtanh.pop %v2116
    %2119 = vrot.lane.b32.xlu0 %v2117, 64
    %v2120 = vpop.permute.xlu0 %2119
    %v2122 = vmul.f32 %v2103, %v2120
  $region56: #{srivastava_lstm_forward.1} parent=0 // loop_footer
    %s1959 = sadd.s32 1, %s1955
  $region57: #{srivastava_lstm_forward.1} parent=0 // loop_footer_branch
    %1954 = sbr.rel target = $region53
  $region58: #{srivastava_lstm_forward.1} parent=0 // loop_exit
    _
  %2124 = vrot.lane.b32.xlu0 %v1962, 32
  %v2125 = vpop.permute.xlu0 %2124
  %v2126 = vsel %vm1119, %v2125, 0
  %2128 = vmatpush.msra.mxu0 0.0
  %2129 = vmatpush.msra.mxu0 0.0
  %2130 = vmatpush.msra.mxu0 0.0
  %2131 = vmatpush.msra.mxu0 0.0
  %2132 = vmatpush.msra.mxu0 0.0
  %2133 = vmatpush.msra.mxu0 0.0
  %2134 = vmatpush.msra.mxu0 0.0
  %2135 = vmatpush.msra.mxu0 0.0
  %2136 = vmatpush.msra.mxu0 0.0
  %2137 = vmatpush.msra.mxu0 0.0
  %2138 = vmatpush.msra.mxu0 0.0
  %2139 = vmatpush.msra.mxu0 0.0
  %2140 = vmatpush.msra.mxu0 %v1223
  %2141 = vmatpush.msra.mxu0 %v1222
  %2142 = vmatpush.msra.mxu0 %v1221
  %2143 = vmatpush.msra.mxu0 %v1220
  %2144 = vmatmul.f32.gmra.mxu0 %v2126
  %v2145 = vpop.f32.mrf.mxu0
  %v2146 = vadd.f32 0.0, %v2145
  %2147 = vdwg.mxu0
  %2149 = vrot.lane.b32.xlu0 %v1960, 32
  %v2150 = vpop.permute.xlu0 %2149
  %v2151 = vsel %vm1119, %v2150, 0
  %2153 = vmatpush.msra.mxu0 0.0
  %2154 = vmatpush.msra.mxu0 0.0
  %2155 = vmatpush.msra.mxu0 0.0
  %2156 = vmatpush.msra.mxu0 0.0
  %2157 = vmatpush.msra.mxu0 0.0
  %2158 = vmatpush.msra.mxu0 0.0
  %2159 = vmatpush.msra.mxu0 0.0
  %2160 = vmatpush.msra.mxu0 0.0
  %2161 = vmatpush.msra.mxu0 0.0
  %2162 = vmatpush.msra.mxu0 0.0
  %2163 = vmatpush.msra.mxu0 0.0
  %2164 = vmatpush.msra.mxu0 0.0
  %2165 = vmatpush.msra.mxu0 %v1218
  %2166 = vmatpush.msra.mxu0 %v1217
  %2167 = vmatpush.msra.mxu0 %v1216
  %2168 = vmatpush.msra.mxu0 %v1215
  %2169 = vmatmul.f32.gmra.mxu0 %v2151
  %v2170 = vpop.f32.mrf.mxu0
  %v2171 = vadd.f32 %v2146, %v2170
  %2172 = vdwg.mxu0
  %v2173 = vadd.f32 %v2171, %v1751
  %v2174 = vxor.u32 %v2173, 2147483648
  %v2175 = vmul.f32 %v2174, 1.442695
  %v2176 = vpow.pop %v2175
  %v2177 = vadd.f32 %v2176, 1.0
  %v2178 = vrcp.pop %v2177
  %v2179 = vmul.f32 %v2177, %v2178
  %v2180 = vsub.f32 1.0, %v2179
  %v2181 = vmul.f32 %v2178, %v2180
  %v2182 = vadd.f32 %v2178, %v2181
  %vm2183 = vweird.f32 %v2177
  %vm2184 = vweird.f32 %v2178
  %vm2185 = vmor %vm2183, %vm2184
  %v2186 = vsel %vm2185, %v2178, %v2182
  %v2187 = vand.u32 2147483647, %v2177
  %vm2188 = vcmp.eq.f32.partialorder %v2187, 8.507059e+37
  %v2189 = vand.u32 %v2177, 2147483648
  %v2190 = vor.u32 1.1754944e-38, %v2189
  %v2191 = vsel %vm2188, %v2190, %v2186
  %v2192 = vmul.f32 1.0, %v2191
  %v2193 = vmul.f32 %v2192, 2.0
  %v2194 = vsub.f32 %v2193, 1.0
  %v2195 = vmul.f32 %v2192, %v1963
  %2197 = vrot.lane.b32.xlu0 %v2194, 64
  %v2198 = vpop.permute.xlu0 %2197
  %v2200 = vmul.f32 %v2192, %v2198
  %2202 = vrot.lane.b32.xlu0 %v2200, 32
  %v2203 = vpop.permute.xlu0 %2202
  %v2205 = vadd.f32 %v2195, %v2203
  %v2206 = vtanh.pop %v2205
  %2208 = vrot.lane.b32.xlu0 %v2206, 64
  %v2209 = vpop.permute.xlu0 %2208
  %v2211 = vmul.f32 %v2192, %v2209
  %2213 = vrot.lane.b32.xlu0 %v2211, 32
  %v2214 = vpop.permute.xlu0 %2213
  %2216 = vst.msk [vmem:[#allocation5 + $0x1d8] sm:$0xff] %vm1119, %v2214
  %v2217 = vld [vmem:[#allocation5] sm:$0xff]
  %v2218 = vld [vmem:[#allocation5 + $0x8] sm:$0xff]
  %v2219 = vld [vmem:[#allocation5 + $0x10] sm:$0xff]
  %v2220 = vld [vmem:[#allocation5 + $0x18] sm:$0xff]
  %v2221 = vld [vmem:[#allocation5 + $0x20] sm:$0xff]
  %v2222 = vld [vmem:[#allocation5 + $0x28] sm:$0xff]
  %v2223 = vld [vmem:[#allocation5 + $0x30] sm:$0xff]
  %v2224 = vld [vmem:[#allocation5 + $0x38] sm:$0xff]
  %v2225 = vld [vmem:[#allocation5 + $0x40] sm:$0xff]
  %v2226 = vld [vmem:[#allocation5 + $0x48] sm:$0xff]
  %v2227 = vld [vmem:[#allocation5 + $0x50] sm:$0xff]
  %v2228 = vld [vmem:[#allocation5 + $0x58] sm:$0xff]
  %v2229 = vld [vmem:[#allocation5 + $0x60] sm:$0xff]
  %v2230 = vld [vmem:[#allocation5 + $0x68] sm:$0xff]
  %v2231 = vld [vmem:[#allocation5 + $0x70] sm:$0xff]
  %v2232 = vld [vmem:[#allocation5 + $0x78] sm:$0xff]
  %v2233 = vld [vmem:[#allocation5 + $0x80] sm:$0xff]
  %v2234 = vld [vmem:[#allocation5 + $0x88] sm:$0xff]
  %v2235 = vld [vmem:[#allocation5 + $0x90] sm:$0xff]
  %v2236 = vld [vmem:[#allocation5 + $0x98] sm:$0xff]
  %v2237 = vld [vmem:[#allocation5 + $0xa0] sm:$0xff]
  %v2238 = vld [vmem:[#allocation5 + $0xa8] sm:$0xff]
  %v2239 = vld [vmem:[#allocation5 + $0xb0] sm:$0xff]
  %v2240 = vld [vmem:[#allocation5 + $0xb8] sm:$0xff]
  %v2241 = vld [vmem:[#allocation5 + $0xc0] sm:$0xff]
  %v2242 = vld [vmem:[#allocation5 + $0xc8] sm:$0xff]
  %v2243 = vld [vmem:[#allocation5 + $0xd0] sm:$0xff]
  %v2244 = vld [vmem:[#allocation5 + $0xd8] sm:$0xff]
  %v2245 = vld [vmem:[#allocation5 + $0xe0] sm:$0xff]
  %v2246 = vld [vmem:[#allocation5 + $0xe8] sm:$0xff]
  %v2247 = vld [vmem:[#allocation5 + $0xf0] sm:$0xff]
  %v2248 = vld [vmem:[#allocation5 + $0xf8] sm:$0xff]
  %v2249 = vld [vmem:[#allocation5 + $0x100] sm:$0xff]
  %v2250 = vld [vmem:[#allocation5 + $0x108] sm:$0xff]
  %v2251 = vld [vmem:[#allocation5 + $0x110] sm:$0xff]
  %v2252 = vld [vmem:[#allocation5 + $0x118] sm:$0xff]
  %v2253 = vld [vmem:[#allocation5 + $0x120] sm:$0xff]
  %v2254 = vld [vmem:[#allocation5 + $0x128] sm:$0xff]
  %v2255 = vld [vmem:[#allocation5 + $0x130] sm:$0xff]
  %v2256 = vld [vmem:[#allocation5 + $0x138] sm:$0xff]
  %v2257 = vld [vmem:[#allocation5 + $0x140] sm:$0xff]
  %v2258 = vld [vmem:[#allocation5 + $0x148] sm:$0xff]
  %v2259 = vld [vmem:[#allocation5 + $0x150] sm:$0xff]
  %v2260 = vld [vmem:[#allocation5 + $0x158] sm:$0xff]
  %v2261 = vld [vmem:[#allocation5 + $0x160] sm:$0xff]
  %v2262 = vld [vmem:[#allocation5 + $0x168] sm:$0xff]
  %v2263 = vld [vmem:[#allocation5 + $0x170] sm:$0xff]
  %v2264 = vld [vmem:[#allocation5 + $0x178] sm:$0xff]
  %v2265 = vld [vmem:[#allocation5 + $0x180] sm:$0xff]
  %v2266 = vld [vmem:[#allocation5 + $0x188] sm:$0xff]
  %v2267 = vld [vmem:[#allocation5 + $0x190] sm:$0xff]
  %v2268 = vld [vmem:[#allocation5 + $0x198] sm:$0xff]
  %v2269 = vld [vmem:[#allocation5 + $0x1a0] sm:$0xff]
  %v2270 = vld [vmem:[#allocation5 + $0x1a8] sm:$0xff]
  %v2271 = vld [vmem:[#allocation5 + $0x1b0] sm:$0xff]
  %v2272 = vld [vmem:[#allocation5 + $0x1b8] sm:$0xff]
  %v2273 = vld [vmem:[#allocation5 + $0x1c0] sm:$0xff]
  %v2274 = vld [vmem:[#allocation5 + $0x1c8] sm:$0xff]
  %v2275 = vld [vmem:[#allocation5 + $0x1d0] sm:$0xff]
  %v2276 = vld [vmem:[#allocation5 + $0x1d8] sm:$0xff]
  %v2277 = vld [vmem:[%s7] sm:$0xff]
  %v2278 = vld [vmem:[%s7 + $0x8] sm:$0xff]
  %v2279 = vld [vmem:[%s7 + $0x10] sm:$0xff]
  %v2280 = vld [vmem:[%s7 + $0x18] sm:$0xff]
  %v2281 = vld [vmem:[%s8] sm:$0x1]
  %v2283 = vperm.slane %v2281, 0
  %v2286 = vsel %vm1119, %v2217, 0
  %v2289 = vsel %vm1119, %v2218, 0
  %v2292 = vsel %vm1119, %v2219, 0
  %v2295 = vsel %vm1119, %v2220, 0
  %v2298 = vsel %vm1119, %v2221, 0
  %v2301 = vsel %vm1119, %v2222, 0
  %v2304 = vsel %vm1119, %v2223, 0
  %v2307 = vsel %vm1119, %v2224, 0
  %v2310 = vsel %vm1119, %v2225, 0
  %v2313 = vsel %vm1119, %v2226, 0
  %v2316 = vsel %vm1119, %v2227, 0
  %v2319 = vsel %vm1119, %v2228, 0
  %v2322 = vsel %vm1119, %v2229, 0
  %v2325 = vsel %vm1119, %v2230, 0
  %v2328 = vsel %vm1119, %v2231, 0
  %v2331 = vsel %vm1119, %v2232, 0
  %v2334 = vsel %vm1119, %v2233, 0
  %v2337 = vsel %vm1119, %v2234, 0
  %v2340 = vsel %vm1119, %v2235, 0
  %v2343 = vsel %vm1119, %v2236, 0
  %v2346 = vsel %vm1119, %v2237, 0
  %v2349 = vsel %vm1119, %v2238, 0
  %v2352 = vsel %vm1119, %v2239, 0
  %v2355 = vsel %vm1119, %v2240, 0
  %v2358 = vsel %vm1119, %v2241, 0
  %v2361 = vsel %vm1119, %v2242, 0
  %v2364 = vsel %vm1119, %v2243, 0
  %v2367 = vsel %vm1119, %v2244, 0
  %v2370 = vsel %vm1119, %v2245, 0
  %v2373 = vsel %vm1119, %v2246, 0
  %v2376 = vsel %vm1119, %v2247, 0
  %v2379 = vsel %vm1119, %v2248, 0
  %v2382 = vsel %vm1119, %v2249, 0
  %v2385 = vsel %vm1119, %v2250, 0
  %v2388 = vsel %vm1119, %v2251, 0
  %v2391 = vsel %vm1119, %v2252, 0
  %v2394 = vsel %vm1119, %v2253, 0
  %v2397 = vsel %vm1119, %v2254, 0
  %v2400 = vsel %vm1119, %v2255, 0
  %v2403 = vsel %vm1119, %v2256, 0
  %v2406 = vsel %vm1119, %v2257, 0
  %v2409 = vsel %vm1119, %v2258, 0
  %v2412 = vsel %vm1119, %v2259, 0
  %v2415 = vsel %vm1119, %v2260, 0
  %v2418 = vsel %vm1119, %v2261, 0
  %v2421 = vsel %vm1119, %v2262, 0
  %v2424 = vsel %vm1119, %v2263, 0
  %v2427 = vsel %vm1119, %v2264, 0
  %v2430 = vsel %vm1119, %v2265, 0
  %v2433 = vsel %vm1119, %v2266, 0
  %v2436 = vsel %vm1119, %v2267, 0
  %v2439 = vsel %vm1119, %v2268, 0
  %v2442 = vsel %vm1119, %v2269, 0
  %v2445 = vsel %vm1119, %v2270, 0
  %v2448 = vsel %vm1119, %v2271, 0
  %v2451 = vsel %vm1119, %v2272, 0
  %v2454 = vsel %vm1119, %v2273, 0
  %v2457 = vsel %vm1119, %v2274, 0
  %v2460 = vsel %vm1119, %v2275, 0
  %v2463 = vsel %vm1119, %v2276, 0
  %2465 = vmatpush.msra.mxu0 0.0
  %2466 = vmatpush.msra.mxu0 0.0
  %2467 = vmatpush.msra.mxu0 0.0
  %2468 = vmatpush.msra.mxu0 0.0
  %2469 = vmatpush.msra.mxu0 0.0
  %2470 = vmatpush.msra.mxu0 0.0
  %2471 = vmatpush.msra.mxu0 0.0
  %2472 = vmatpush.msra.mxu0 0.0
  %2473 = vmatpush.msra.mxu0 0.0
  %2474 = vmatpush.msra.mxu0 0.0
  %2475 = vmatpush.msra.mxu0 0.0
  %2476 = vmatpush.msra.mxu0 0.0
  %2477 = vmatpush.msra.mxu0 %v2280
  %2478 = vmatpush.msra.mxu0 %v2279
  %2479 = vmatpush.msra.mxu0 %v2278
  %2480 = vmatpush.msra.mxu0 %v2277
  %2481 = vmatmul.f32.gmra.mxu0 %v2286
  %v2482 = vpop.f32.mrf.mxu0
  %v2483 = vadd.f32 %v2283, %v2482
  %2484 = vmatmul.f32.gmra.mxu0 %v2289
  %v2485 = vpop.f32.mrf.mxu0
  %v2486 = vadd.f32 %v2283, %v2485
  %2487 = vmatmul.f32.gmra.mxu0 %v2292
  %v2488 = vpop.f32.mrf.mxu0
  %v2489 = vadd.f32 %v2283, %v2488
  %2490 = vmatmul.f32.gmra.mxu0 %v2295
  %v2491 = vpop.f32.mrf.mxu0
  %v2492 = vadd.f32 %v2283, %v2491
  %2493 = vmatmul.f32.gmra.mxu0 %v2298
  %v2494 = vpop.f32.mrf.mxu0
  %v2495 = vadd.f32 %v2283, %v2494
  %2496 = vmatmul.f32.gmra.mxu0 %v2301
  %v2497 = vpop.f32.mrf.mxu0
  %v2498 = vadd.f32 %v2283, %v2497
  %2499 = vmatmul.f32.gmra.mxu0 %v2304
  %v2500 = vpop.f32.mrf.mxu0
  %v2501 = vadd.f32 %v2283, %v2500
  %2502 = vmatmul.f32.gmra.mxu0 %v2307
  %v2503 = vpop.f32.mrf.mxu0
  %v2504 = vadd.f32 %v2283, %v2503
  %2505 = vmatmul.f32.gmra.mxu0 %v2310
  %v2506 = vpop.f32.mrf.mxu0
  %v2507 = vadd.f32 %v2283, %v2506
  %2508 = vmatmul.f32.gmra.mxu0 %v2313
  %v2509 = vpop.f32.mrf.mxu0
  %v2510 = vadd.f32 %v2283, %v2509
  %2511 = vmatmul.f32.gmra.mxu0 %v2316
  %v2512 = vpop.f32.mrf.mxu0
  %v2513 = vadd.f32 %v2283, %v2512
  %2514 = vmatmul.f32.gmra.mxu0 %v2319
  %v2515 = vpop.f32.mrf.mxu0
  %v2516 = vadd.f32 %v2283, %v2515
  %2517 = vmatmul.f32.gmra.mxu0 %v2322
  %v2518 = vpop.f32.mrf.mxu0
  %v2519 = vadd.f32 %v2283, %v2518
  %2520 = vmatmul.f32.gmra.mxu0 %v2325
  %v2521 = vpop.f32.mrf.mxu0
  %v2522 = vadd.f32 %v2283, %v2521
  %2523 = vmatmul.f32.gmra.mxu0 %v2328
  %v2524 = vpop.f32.mrf.mxu0
  %v2525 = vadd.f32 %v2283, %v2524
  %2526 = vmatmul.f32.gmra.mxu0 %v2331
  %v2527 = vpop.f32.mrf.mxu0
  %v2528 = vadd.f32 %v2283, %v2527
  %2529 = vmatmul.f32.gmra.mxu0 %v2334
  %v2530 = vpop.f32.mrf.mxu0
  %v2531 = vadd.f32 %v2283, %v2530
  %2532 = vmatmul.f32.gmra.mxu0 %v2337
  %v2533 = vpop.f32.mrf.mxu0
  %v2534 = vadd.f32 %v2283, %v2533
  %2535 = vmatmul.f32.gmra.mxu0 %v2340
  %v2536 = vpop.f32.mrf.mxu0
  %v2537 = vadd.f32 %v2283, %v2536
  %2538 = vmatmul.f32.gmra.mxu0 %v2343
  %v2539 = vpop.f32.mrf.mxu0
  %v2540 = vadd.f32 %v2283, %v2539
  %2541 = vmatmul.f32.gmra.mxu0 %v2346
  %v2542 = vpop.f32.mrf.mxu0
  %v2543 = vadd.f32 %v2283, %v2542
  %2544 = vmatmul.f32.gmra.mxu0 %v2349
  %v2545 = vpop.f32.mrf.mxu0
  %v2546 = vadd.f32 %v2283, %v2545
  %2547 = vmatmul.f32.gmra.mxu0 %v2352
  %v2548 = vpop.f32.mrf.mxu0
  %v2549 = vadd.f32 %v2283, %v2548
  %2550 = vmatmul.f32.gmra.mxu0 %v2355
  %v2551 = vpop.f32.mrf.mxu0
  %v2552 = vadd.f32 %v2283, %v2551
  %2553 = vmatmul.f32.gmra.mxu0 %v2358
  %v2554 = vpop.f32.mrf.mxu0
  %v2555 = vadd.f32 %v2283, %v2554
  %2556 = vmatmul.f32.gmra.mxu0 %v2361
  %v2557 = vpop.f32.mrf.mxu0
  %v2558 = vadd.f32 %v2283, %v2557
  %2559 = vmatmul.f32.gmra.mxu0 %v2364
  %v2560 = vpop.f32.mrf.mxu0
  %v2561 = vadd.f32 %v2283, %v2560
  %2562 = vmatmul.f32.gmra.mxu0 %v2367
  %v2563 = vpop.f32.mrf.mxu0
  %v2564 = vadd.f32 %v2283, %v2563
  %2565 = vmatmul.f32.gmra.mxu0 %v2370
  %v2566 = vpop.f32.mrf.mxu0
  %v2567 = vadd.f32 %v2283, %v2566
  %2568 = vmatmul.f32.gmra.mxu0 %v2373
  %v2569 = vpop.f32.mrf.mxu0
  %v2570 = vadd.f32 %v2283, %v2569
  %2571 = vmatmul.f32.gmra.mxu0 %v2376
  %v2572 = vpop.f32.mrf.mxu0
  %v2573 = vadd.f32 %v2283, %v2572
  %2574 = vmatmul.f32.gmra.mxu0 %v2379
  %v2575 = vpop.f32.mrf.mxu0
  %v2576 = vadd.f32 %v2283, %v2575
  %2577 = vmatmul.f32.gmra.mxu0 %v2382
  %v2578 = vpop.f32.mrf.mxu0
  %v2579 = vadd.f32 %v2283, %v2578
  %2580 = vmatmul.f32.gmra.mxu0 %v2385
  %v2581 = vpop.f32.mrf.mxu0
  %v2582 = vadd.f32 %v2283, %v2581
  %2583 = vmatmul.f32.gmra.mxu0 %v2388
  %v2584 = vpop.f32.mrf.mxu0
  %v2585 = vadd.f32 %v2283, %v2584
  %2586 = vmatmul.f32.gmra.mxu0 %v2391
  %v2587 = vpop.f32.mrf.mxu0
  %v2588 = vadd.f32 %v2283, %v2587
  %2589 = vmatmul.f32.gmra.mxu0 %v2394
  %v2590 = vpop.f32.mrf.mxu0
  %v2591 = vadd.f32 %v2283, %v2590
  %2592 = vmatmul.f32.gmra.mxu0 %v2397
  %v2593 = vpop.f32.mrf.mxu0
  %v2594 = vadd.f32 %v2283, %v2593
  %2595 = vmatmul.f32.gmra.mxu0 %v2400
  %v2596 = vpop.f32.mrf.mxu0
  %v2597 = vadd.f32 %v2283, %v2596
  %2598 = vmatmul.f32.gmra.mxu0 %v2403
  %v2599 = vpop.f32.mrf.mxu0
  %v2600 = vadd.f32 %v2283, %v2599
  %2601 = vmatmul.f32.gmra.mxu0 %v2406
  %v2602 = vpop.f32.mrf.mxu0
  %v2603 = vadd.f32 %v2283, %v2602
  %2604 = vmatmul.f32.gmra.mxu0 %v2409
  %v2605 = vpop.f32.mrf.mxu0
  %v2606 = vadd.f32 %v2283, %v2605
  %2607 = vmatmul.f32.gmra.mxu0 %v2412
  %v2608 = vpop.f32.mrf.mxu0
  %v2609 = vadd.f32 %v2283, %v2608
  %2610 = vmatmul.f32.gmra.mxu0 %v2415
  %v2611 = vpop.f32.mrf.mxu0
  %v2612 = vadd.f32 %v2283, %v2611
  %2613 = vmatmul.f32.gmra.mxu0 %v2418
  %v2614 = vpop.f32.mrf.mxu0
  %v2615 = vadd.f32 %v2283, %v2614
  %2616 = vmatmul.f32.gmra.mxu0 %v2421
  %v2617 = vpop.f32.mrf.mxu0
  %v2618 = vadd.f32 %v2283, %v2617
  %2619 = vmatmul.f32.gmra.mxu0 %v2424
  %v2620 = vpop.f32.mrf.mxu0
  %v2621 = vadd.f32 %v2283, %v2620
  %2622 = vmatmul.f32.gmra.mxu0 %v2427
  %v2623 = vpop.f32.mrf.mxu0
  %v2624 = vadd.f32 %v2283, %v2623
  %2625 = vmatmul.f32.gmra.mxu0 %v2430
  %v2626 = vpop.f32.mrf.mxu0
  %v2627 = vadd.f32 %v2283, %v2626
  %2628 = vmatmul.f32.gmra.mxu0 %v2433
  %v2629 = vpop.f32.mrf.mxu0
  %v2630 = vadd.f32 %v2283, %v2629
  %2631 = vmatmul.f32.gmra.mxu0 %v2436
  %v2632 = vpop.f32.mrf.mxu0
  %v2633 = vadd.f32 %v2283, %v2632
  %2634 = vmatmul.f32.gmra.mxu0 %v2439
  %v2635 = vpop.f32.mrf.mxu0
  %v2636 = vadd.f32 %v2283, %v2635
  %2637 = vmatmul.f32.gmra.mxu0 %v2442
  %v2638 = vpop.f32.mrf.mxu0
  %v2639 = vadd.f32 %v2283, %v2638
  %2640 = vmatmul.f32.gmra.mxu0 %v2445
  %v2641 = vpop.f32.mrf.mxu0
  %v2642 = vadd.f32 %v2283, %v2641
  %2643 = vmatmul.f32.gmra.mxu0 %v2448
  %v2644 = vpop.f32.mrf.mxu0
  %v2645 = vadd.f32 %v2283, %v2644
  %2646 = vmatmul.f32.gmra.mxu0 %v2451
  %v2647 = vpop.f32.mrf.mxu0
  %v2648 = vadd.f32 %v2283, %v2647
  %2649 = vmatmul.f32.gmra.mxu0 %v2454
  %v2650 = vpop.f32.mrf.mxu0
  %v2651 = vadd.f32 %v2283, %v2650
  %2652 = vmatmul.f32.gmra.mxu0 %v2457
  %v2653 = vpop.f32.mrf.mxu0
  %v2654 = vadd.f32 %v2283, %v2653
  %2655 = vmatmul.f32.gmra.mxu0 %v2460
  %v2656 = vpop.f32.mrf.mxu0
  %v2657 = vadd.f32 %v2283, %v2656
  %2658 = vmatmul.f32.gmra.mxu0 %v2463
  %v2659 = vpop.f32.mrf.mxu0
  %v2660 = vadd.f32 %v2283, %v2659
  %2661 = vdwg.mxu0
  %v2662 = vld [vmem:[%s0] sm:$0xff]
  %v2663 = vld [vmem:[%s0 + $0x8] sm:$0xff]
  %v2664 = vld [vmem:[%s0 + $0x10] sm:$0xff]
  %v2665 = vld [vmem:[%s0 + $0x18] sm:$0xff]
  %v2666 = vld [vmem:[%s0 + $0x20] sm:$0xff]
  %v2667 = vld [vmem:[%s0 + $0x28] sm:$0xff]
  %v2668 = vld [vmem:[%s0 + $0x30] sm:$0xff]
  %v2669 = vld [vmem:[%s0 + $0x38] sm:$0xff]
  %v2670 = vld [vmem:[%s0 + $0x40] sm:$0xff]
  %v2671 = vld [vmem:[%s0 + $0x48] sm:$0xff]
  %v2672 = vld [vmem:[%s0 + $0x50] sm:$0xff]
  %v2673 = vld [vmem:[%s0 + $0x58] sm:$0xff]
  %v2674 = vld [vmem:[%s0 + $0x60] sm:$0xff]
  %v2675 = vld [vmem:[%s0 + $0x68] sm:$0xff]
  %v2676 = vld [vmem:[%s0 + $0x70] sm:$0xff]
  %v2677 = vld [vmem:[%s0 + $0x78] sm:$0xff]
  %v2678 = vld [vmem:[%s0 + $0x80] sm:$0xff]
  %v2679 = vld [vmem:[%s0 + $0x88] sm:$0xff]
  %v2680 = vld [vmem:[%s0 + $0x90] sm:$0xff]
  %v2681 = vld [vmem:[%s0 + $0x98] sm:$0xff]
  %v2682 = vld [vmem:[%s0 + $0xa0] sm:$0xff]
  %v2683 = vld [vmem:[%s0 + $0xa8] sm:$0xff]
  %v2684 = vld [vmem:[%s0 + $0xb0] sm:$0xff]
  %v2685 = vld [vmem:[%s0 + $0xb8] sm:$0xff]
  %v2686 = vld [vmem:[%s0 + $0xc0] sm:$0xff]
  %v2687 = vld [vmem:[%s0 + $0xc8] sm:$0xff]
  %v2688 = vld [vmem:[%s0 + $0xd0] sm:$0xff]
  %v2689 = vld [vmem:[%s0 + $0xd8] sm:$0xff]
  %v2690 = vld [vmem:[%s0 + $0xe0] sm:$0xff]
  %v2691 = vld [vmem:[%s0 + $0xe8] sm:$0xff]
  %v2692 = vld [vmem:[%s0 + $0xf0] sm:$0xff]
  %v2693 = vld [vmem:[%s0 + $0xf8] sm:$0xff]
  %v2694 = vld [vmem:[%s0 + $0x100] sm:$0xff]
  %v2695 = vld [vmem:[%s0 + $0x108] sm:$0xff]
  %v2696 = vld [vmem:[%s0 + $0x110] sm:$0xff]
  %v2697 = vld [vmem:[%s0 + $0x118] sm:$0xff]
  %v2698 = vld [vmem:[%s0 + $0x120] sm:$0xff]
  %v2699 = vld [vmem:[%s0 + $0x128] sm:$0xff]
  %v2700 = vld [vmem:[%s0 + $0x130] sm:$0xff]
  %v2701 = vld [vmem:[%s0 + $0x138] sm:$0xff]
  %v2702 = vld [vmem:[%s0 + $0x140] sm:$0xff]
  %v2703 = vld [vmem:[%s0 + $0x148] sm:$0xff]
  %v2704 = vld [vmem:[%s0 + $0x150] sm:$0xff]
  %v2705 = vld [vmem:[%s0 + $0x158] sm:$0xff]
  %v2706 = vld [vmem:[%s0 + $0x160] sm:$0xff]
  %v2707 = vld [vmem:[%s0 + $0x168] sm:$0xff]
  %v2708 = vld [vmem:[%s0 + $0x170] sm:$0xff]
  %v2709 = vld [vmem:[%s0 + $0x178] sm:$0xff]
  %v2710 = vld [vmem:[%s0 + $0x180] sm:$0xff]
  %v2711 = vld [vmem:[%s0 + $0x188] sm:$0xff]
  %v2712 = vld [vmem:[%s0 + $0x190] sm:$0xff]
  %v2713 = vld [vmem:[%s0 + $0x198] sm:$0xff]
  %v2714 = vld [vmem:[%s0 + $0x1a0] sm:$0xff]
  %v2715 = vld [vmem:[%s0 + $0x1a8] sm:$0xff]
  %v2716 = vld [vmem:[%s0 + $0x1b0] sm:$0xff]
  %v2717 = vld [vmem:[%s0 + $0x1b8] sm:$0xff]
  %v2718 = vld [vmem:[%s0 + $0x1c0] sm:$0xff]
  %v2719 = vld [vmem:[%s0 + $0x1c8] sm:$0xff]
  %v2720 = vld [vmem:[%s0 + $0x1d0] sm:$0xff]
  %v2721 = vld [vmem:[%s0 + $0x1d8] sm:$0xff]
  %v2722 = vadd.f32 %v2483, %v2662
  %v2723 = vadd.f32 %v2486, %v2663
  %v2724 = vadd.f32 %v2489, %v2664
  %v2725 = vadd.f32 %v2492, %v2665
  %v2726 = vadd.f32 %v2495, %v2666
  %v2727 = vadd.f32 %v2498, %v2667
  %v2728 = vadd.f32 %v2501, %v2668
  %v2729 = vadd.f32 %v2504, %v2669
  %v2730 = vadd.f32 %v2507, %v2670
  %v2731 = vadd.f32 %v2510, %v2671
  %v2732 = vadd.f32 %v2513, %v2672
  %v2733 = vadd.f32 %v2516, %v2673
  %v2734 = vadd.f32 %v2519, %v2674
  %v2735 = vadd.f32 %v2522, %v2675
  %v2736 = vadd.f32 %v2525, %v2676
  %v2737 = vadd.f32 %v2528, %v2677
  %v2738 = vadd.f32 %v2531, %v2678
  %v2739 = vadd.f32 %v2534, %v2679
  %v2740 = vadd.f32 %v2537, %v2680
  %v2741 = vadd.f32 %v2540, %v2681
  %v2742 = vadd.f32 %v2543, %v2682
  %v2743 = vadd.f32 %v2546, %v2683
  %v2744 = vadd.f32 %v2549, %v2684
  %v2745 = vadd.f32 %v2552, %v2685
  %v2746 = vadd.f32 %v2555, %v2686
  %v2747 = vadd.f32 %v2558, %v2687
  %v2748 = vadd.f32 %v2561, %v2688
  %v2749 = vadd.f32 %v2564, %v2689
  %v2750 = vadd.f32 %v2567, %v2690
  %v2751 = vadd.f32 %v2570, %v2691
  %v2752 = vadd.f32 %v2573, %v2692
  %v2753 = vadd.f32 %v2576, %v2693
  %v2754 = vadd.f32 %v2579, %v2694
  %v2755 = vadd.f32 %v2582, %v2695
  %v2756 = vadd.f32 %v2585, %v2696
  %v2757 = vadd.f32 %v2588, %v2697
  %v2758 = vadd.f32 %v2591, %v2698
  %v2759 = vadd.f32 %v2594, %v2699
  %v2760 = vadd.f32 %v2597, %v2700
  %v2761 = vadd.f32 %v2600, %v2701
  %v2762 = vadd.f32 %v2603, %v2702
  %v2763 = vadd.f32 %v2606, %v2703
  %v2764 = vadd.f32 %v2609, %v2704
  %v2765 = vadd.f32 %v2612, %v2705
  %v2766 = vadd.f32 %v2615, %v2706
  %v2767 = vadd.f32 %v2618, %v2707
  %v2768 = vadd.f32 %v2621, %v2708
  %v2769 = vadd.f32 %v2624, %v2709
  %v2770 = vadd.f32 %v2627, %v2710
  %v2771 = vadd.f32 %v2630, %v2711
  %v2772 = vadd.f32 %v2633, %v2712
  %v2773 = vadd.f32 %v2636, %v2713
  %v2774 = vadd.f32 %v2639, %v2714
  %v2775 = vadd.f32 %v2642, %v2715
  %v2776 = vadd.f32 %v2645, %v2716
  %v2777 = vadd.f32 %v2648, %v2717
  %v2778 = vadd.f32 %v2651, %v2718
  %v2779 = vadd.f32 %v2654, %v2719
  %v2780 = vadd.f32 %v2657, %v2720
  %v2781 = vadd.f32 %v2660, %v2721
  %2782 = vst [vmem:[%s9] sm:$0xff] %v2722
  %2783 = vst [vmem:[%s9 + $0x8] sm:$0xff] %v2723
  %2784 = vst [vmem:[%s9 + $0x10] sm:$0xff] %v2724
  %2785 = vst [vmem:[%s9 + $0x18] sm:$0xff] %v2725
  %2786 = vst [vmem:[%s9 + $0x20] sm:$0xff] %v2726
  %2787 = vst [vmem:[%s9 + $0x28] sm:$0xff] %v2727
  %2788 = vst [vmem:[%s9 + $0x30] sm:$0xff] %v2728
  %2789 = vst [vmem:[%s9 + $0x38] sm:$0xff] %v2729
  %2790 = vst [vmem:[%s9 + $0x40] sm:$0xff] %v2730
  %2791 = vst [vmem:[%s9 + $0x48] sm:$0xff] %v2731
  %2792 = vst [vmem:[%s9 + $0x50] sm:$0xff] %v2732
  %2793 = vst [vmem:[%s9 + $0x58] sm:$0xff] %v2733
  %2794 = vst [vmem:[%s9 + $0x60] sm:$0xff] %v2734
  %2795 = vst [vmem:[%s9 + $0x68] sm:$0xff] %v2735
  %2796 = vst [vmem:[%s9 + $0x70] sm:$0xff] %v2736
  %2797 = vst [vmem:[%s9 + $0x78] sm:$0xff] %v2737
  %2798 = vst [vmem:[%s9 + $0x80] sm:$0xff] %v2738
  %2799 = vst [vmem:[%s9 + $0x88] sm:$0xff] %v2739
  %2800 = vst [vmem:[%s9 + $0x90] sm:$0xff] %v2740
  %2801 = vst [vmem:[%s9 + $0x98] sm:$0xff] %v2741
  %2802 = vst [vmem:[%s9 + $0xa0] sm:$0xff] %v2742
  %2803 = vst [vmem:[%s9 + $0xa8] sm:$0xff] %v2743
  %2804 = vst [vmem:[%s9 + $0xb0] sm:$0xff] %v2744
  %2805 = vst [vmem:[%s9 + $0xb8] sm:$0xff] %v2745
  %2806 = vst [vmem:[%s9 + $0xc0] sm:$0xff] %v2746
  %2807 = vst [vmem:[%s9 + $0xc8] sm:$0xff] %v2747
  %2808 = vst [vmem:[%s9 + $0xd0] sm:$0xff] %v2748
  %2809 = vst [vmem:[%s9 + $0xd8] sm:$0xff] %v2749
  %2810 = vst [vmem:[%s9 + $0xe0] sm:$0xff] %v2750
  %2811 = vst [vmem:[%s9 + $0xe8] sm:$0xff] %v2751
  %2812 = vst [vmem:[%s9 + $0xf0] sm:$0xff] %v2752
  %2813 = vst [vmem:[%s9 + $0xf8] sm:$0xff] %v2753
  %2814 = vst [vmem:[%s9 + $0x100] sm:$0xff] %v2754
  %2815 = vst [vmem:[%s9 + $0x108] sm:$0xff] %v2755
  %2816 = vst [vmem:[%s9 + $0x110] sm:$0xff] %v2756
  %2817 = vst [vmem:[%s9 + $0x118] sm:$0xff] %v2757
  %2818 = vst [vmem:[%s9 + $0x120] sm:$0xff] %v2758
  %2819 = vst [vmem:[%s9 + $0x128] sm:$0xff] %v2759
  %2820 = vst [vmem:[%s9 + $0x130] sm:$0xff] %v2760
  %2821 = vst [vmem:[%s9 + $0x138] sm:$0xff] %v2761
  %2822 = vst [vmem:[%s9 + $0x140] sm:$0xff] %v2762
  %2823 = vst [vmem:[%s9 + $0x148] sm:$0xff] %v2763
  %2824 = vst [vmem:[%s9 + $0x150] sm:$0xff] %v2764
  %2825 = vst [vmem:[%s9 + $0x158] sm:$0xff] %v2765
  %2826 = vst [vmem:[%s9 + $0x160] sm:$0xff] %v2766
  %2827 = vst [vmem:[%s9 + $0x168] sm:$0xff] %v2767
  %2828 = vst [vmem:[%s9 + $0x170] sm:$0xff] %v2768
  %2829 = vst [vmem:[%s9 + $0x178] sm:$0xff] %v2769
  %2830 = vst [vmem:[%s9 + $0x180] sm:$0xff] %v2770
  %2831 = vst [vmem:[%s9 + $0x188] sm:$0xff] %v2771
  %2832 = vst [vmem:[%s9 + $0x190] sm:$0xff] %v2772
  %2833 = vst [vmem:[%s9 + $0x198] sm:$0xff] %v2773
  %2834 = vst [vmem:[%s9 + $0x1a0] sm:$0xff] %v2774
  %2835 = vst [vmem:[%s9 + $0x1a8] sm:$0xff] %v2775
  %2836 = vst [vmem:[%s9 + $0x1b0] sm:$0xff] %v2776
  %2837 = vst [vmem:[%s9 + $0x1b8] sm:$0xff] %v2777
  %2838 = vst [vmem:[%s9 + $0x1c0] sm:$0xff] %v2778
  %2839 = vst [vmem:[%s9 + $0x1c8] sm:$0xff] %v2779
  %2840 = vst [vmem:[%s9 + $0x1d0] sm:$0xff] %v2780
  %2841 = vst [vmem:[%s9 + $0x1d8] sm:$0xff] %v2781
  %v2842 = vld [vmem:[#allocation6] sm:$0xff]
  %v2843 = vld [vmem:[#allocation6 + $0x8] sm:$0xff]
  %v2844 = vld [vmem:[#allocation6 + $0x10] sm:$0xff]
  %v2845 = vld [vmem:[#allocation6 + $0x18] sm:$0xff]
  %v2846 = vld [vmem:[#allocation6 + $0x20] sm:$0xff]
  %v2847 = vld [vmem:[#allocation6 + $0x28] sm:$0xff]
  %v2848 = vld [vmem:[#allocation6 + $0x30] sm:$0xff]
  %v2849 = vld [vmem:[#allocation6 + $0x38] sm:$0xff]
  %v2850 = vld [vmem:[#allocation6 + $0x40] sm:$0xff]
  %v2851 = vld [vmem:[#allocation6 + $0x48] sm:$0xff]
  %v2852 = vld [vmem:[#allocation6 + $0x50] sm:$0xff]
  %v2853 = vld [vmem:[#allocation6 + $0x58] sm:$0xff]
  %v2854 = vld [vmem:[#allocation6 + $0x60] sm:$0xff]
  %v2855 = vld [vmem:[#allocation6 + $0x68] sm:$0xff]
  %v2856 = vld [vmem:[#allocation6 + $0x70] sm:$0xff]
  %v2857 = vld [vmem:[#allocation6 + $0x78] sm:$0xff]
  %v2858 = vld [vmem:[#allocation6 + $0x80] sm:$0xff]
  %v2859 = vld [vmem:[#allocation6 + $0x88] sm:$0xff]
  %v2860 = vld [vmem:[#allocation6 + $0x90] sm:$0xff]
  %v2861 = vld [vmem:[#allocation6 + $0x98] sm:$0xff]
  %v2862 = vld [vmem:[#allocation6 + $0xa0] sm:$0xff]
  %v2863 = vld [vmem:[#allocation6 + $0xa8] sm:$0xff]
  %v2864 = vld [vmem:[#allocation6 + $0xb0] sm:$0xff]
  %v2865 = vld [vmem:[#allocation6 + $0xb8] sm:$0xff]
  %v2866 = vld [vmem:[#allocation6 + $0xc0] sm:$0xff]
  %v2867 = vld [vmem:[#allocation6 + $0xc8] sm:$0xff]
  %v2868 = vld [vmem:[#allocation6 + $0xd0] sm:$0xff]
  %v2869 = vld [vmem:[#allocation6 + $0xd8] sm:$0xff]
  %v2870 = vld [vmem:[#allocation6 + $0xe0] sm:$0xff]
  %v2871 = vld [vmem:[#allocation6 + $0xe8] sm:$0xff]
  %v2872 = vld [vmem:[#allocation6 + $0xf0] sm:$0xff]
  %v2873 = vld [vmem:[#allocation6 + $0xf8] sm:$0xff]
  %v2874 = vld [vmem:[#allocation6 + $0x100] sm:$0xff]
  %v2875 = vld [vmem:[#allocation6 + $0x108] sm:$0xff]
  %v2876 = vld [vmem:[#allocation6 + $0x110] sm:$0xff]
  %v2877 = vld [vmem:[#allocation6 + $0x118] sm:$0xff]
  %v2878 = vld [vmem:[#allocation6 + $0x120] sm:$0xff]
  %v2879 = vld [vmem:[#allocation6 + $0x128] sm:$0xff]
  %v2880 = vld [vmem:[#allocation6 + $0x130] sm:$0xff]
  %v2881 = vld [vmem:[#allocation6 + $0x138] sm:$0xff]
  %v2882 = vld [vmem:[#allocation6 + $0x140] sm:$0xff]
  %v2883 = vld [vmem:[#allocation6 + $0x148] sm:$0xff]
  %v2884 = vld [vmem:[#allocation6 + $0x150] sm:$0xff]
  %v2885 = vld [vmem:[#allocation6 + $0x158] sm:$0xff]
  %v2886 = vld [vmem:[#allocation6 + $0x160] sm:$0xff]
  %v2887 = vld [vmem:[#allocation6 + $0x168] sm:$0xff]
  %v2888 = vld [vmem:[#allocation6 + $0x170] sm:$0xff]
  %v2889 = vld [vmem:[#allocation6 + $0x178] sm:$0xff]
  %v2890 = vld [vmem:[#allocation6 + $0x180] sm:$0xff]
  %v2891 = vld [vmem:[#allocation6 + $0x188] sm:$0xff]
  %v2892 = vld [vmem:[%s7] sm:$0xff]
  %v2893 = vld [vmem:[%s7 + $0x8] sm:$0xff]
  %v2894 = vld [vmem:[%s7 + $0x10] sm:$0xff]
  %v2895 = vld [vmem:[%s7 + $0x18] sm:$0xff]
  %v2896 = vld [vmem:[%s8] sm:$0x1]
  %v2898 = vperm.slane %v2896, 0
  %v2901 = vsel %vm1119, %v2842, 0
  %v2904 = vsel %vm1119, %v2843, 0
  %v2907 = vsel %vm1119, %v2844, 0
  %v2910 = vsel %vm1119, %v2845, 0
  %v2913 = vsel %vm1119, %v2846, 0
  %v2916 = vsel %vm1119, %v2847, 0
  %v2919 = vsel %vm1119, %v2848, 0
  %v2922 = vsel %vm1119, %v2849, 0
  %v2925 = vsel %vm1119, %v2850, 0
  %v2928 = vsel %vm1119, %v2851, 0
  %v2931 = vsel %vm1119, %v2852, 0
  %v2934 = vsel %vm1119, %v2853, 0
  %v2937 = vsel %vm1119, %v2854, 0
  %v2940 = vsel %vm1119, %v2855, 0
  %v2943 = vsel %vm1119, %v2856, 0
  %v2946 = vsel %vm1119, %v2857, 0
  %v2949 = vsel %vm1119, %v2858, 0
  %v2952 = vsel %vm1119, %v2859, 0
  %v2955 = vsel %vm1119, %v2860, 0
  %v2958 = vsel %vm1119, %v2861, 0
  %v2961 = vsel %vm1119, %v2862, 0
  %v2964 = vsel %vm1119, %v2863, 0
  %v2967 = vsel %vm1119, %v2864, 0
  %v2970 = vsel %vm1119, %v2865, 0
  %v2973 = vsel %vm1119, %v2866, 0
  %v2976 = vsel %vm1119, %v2867, 0
  %v2979 = vsel %vm1119, %v2868, 0
  %v2982 = vsel %vm1119, %v2869, 0
  %v2985 = vsel %vm1119, %v2870, 0
  %v2988 = vsel %vm1119, %v2871, 0
  %v2991 = vsel %vm1119, %v2872, 0
  %v2994 = vsel %vm1119, %v2873, 0
  %v2997 = vsel %vm1119, %v2874, 0
  %v3000 = vsel %vm1119, %v2875, 0
  %v3003 = vsel %vm1119, %v2876, 0
  %v3006 = vsel %vm1119, %v2877, 0
  %v3009 = vsel %vm1119, %v2878, 0
  %v3012 = vsel %vm1119, %v2879, 0
  %v3015 = vsel %vm1119, %v2880, 0
  %v3018 = vsel %vm1119, %v2881, 0
  %v3021 = vsel %vm1119, %v2882, 0
  %v3024 = vsel %vm1119, %v2883, 0
  %v3027 = vsel %vm1119, %v2884, 0
  %v3030 = vsel %vm1119, %v2885, 0
  %v3033 = vsel %vm1119, %v2886, 0
  %v3036 = vsel %vm1119, %v2887, 0
  %v3039 = vsel %vm1119, %v2888, 0
  %v3042 = vsel %vm1119, %v2889, 0
  %v3045 = vsel %vm1119, %v2890, 0
  %v3048 = vsel %vm1119, %v2891, 0
  %3050 = vmatpush.msra.mxu0 0.0
  %3051 = vmatpush.msra.mxu0 0.0
  %3052 = vmatpush.msra.mxu0 0.0
  %3053 = vmatpush.msra.mxu0 0.0
  %3054 = vmatpush.msra.mxu0 0.0
  %3055 = vmatpush.msra.mxu0 0.0
  %3056 = vmatpush.msra.mxu0 0.0
  %3057 = vmatpush.msra.mxu0 0.0
  %3058 = vmatpush.msra.mxu0 0.0
  %3059 = vmatpush.msra.mxu0 0.0
  %3060 = vmatpush.msra.mxu0 0.0
  %3061 = vmatpush.msra.mxu0 0.0
  %3062 = vmatpush.msra.mxu0 %v2895
  %3063 = vmatpush.msra.mxu0 %v2894
  %3064 = vmatpush.msra.mxu0 %v2893
  %3065 = vmatpush.msra.mxu0 %v2892
  %3066 = vmatmul.f32.gmra.mxu0 %v2901
  %v3067 = vpop.f32.mrf.mxu0
  %v3068 = vadd.f32 %v2898, %v3067
  %3069 = vmatmul.f32.gmra.mxu0 %v2904
  %v3070 = vpop.f32.mrf.mxu0
  %v3071 = vadd.f32 %v2898, %v3070
  %3072 = vmatmul.f32.gmra.mxu0 %v2907
  %v3073 = vpop.f32.mrf.mxu0
  %v3074 = vadd.f32 %v2898, %v3073
  %3075 = vmatmul.f32.gmra.mxu0 %v2910
  %v3076 = vpop.f32.mrf.mxu0
  %v3077 = vadd.f32 %v2898, %v3076
  %3078 = vmatmul.f32.gmra.mxu0 %v2913
  %v3079 = vpop.f32.mrf.mxu0
  %v3080 = vadd.f32 %v2898, %v3079
  %3081 = vmatmul.f32.gmra.mxu0 %v2916
  %v3082 = vpop.f32.mrf.mxu0
  %v3083 = vadd.f32 %v2898, %v3082
  %3084 = vmatmul.f32.gmra.mxu0 %v2919
  %v3085 = vpop.f32.mrf.mxu0
  %v3086 = vadd.f32 %v2898, %v3085
  %3087 = vmatmul.f32.gmra.mxu0 %v2922
  %v3088 = vpop.f32.mrf.mxu0
  %v3089 = vadd.f32 %v2898, %v3088
  %3090 = vmatmul.f32.gmra.mxu0 %v2925
  %v3091 = vpop.f32.mrf.mxu0
  %v3092 = vadd.f32 %v2898, %v3091
  %3093 = vmatmul.f32.gmra.mxu0 %v2928
  %v3094 = vpop.f32.mrf.mxu0
  %v3095 = vadd.f32 %v2898, %v3094
  %3096 = vmatmul.f32.gmra.mxu0 %v2931
  %v3097 = vpop.f32.mrf.mxu0
  %v3098 = vadd.f32 %v2898, %v3097
  %3099 = vmatmul.f32.gmra.mxu0 %v2934
  %v3100 = vpop.f32.mrf.mxu0
  %v3101 = vadd.f32 %v2898, %v3100
  %3102 = vmatmul.f32.gmra.mxu0 %v2937
  %v3103 = vpop.f32.mrf.mxu0
  %v3104 = vadd.f32 %v2898, %v3103
  %3105 = vmatmul.f32.gmra.mxu0 %v2940
  %v3106 = vpop.f32.mrf.mxu0
  %v3107 = vadd.f32 %v2898, %v3106
  %3108 = vmatmul.f32.gmra.mxu0 %v2943
  %v3109 = vpop.f32.mrf.mxu0
  %v3110 = vadd.f32 %v2898, %v3109
  %3111 = vmatmul.f32.gmra.mxu0 %v2946
  %v3112 = vpop.f32.mrf.mxu0
  %v3113 = vadd.f32 %v2898, %v3112
  %3114 = vmatmul.f32.gmra.mxu0 %v2949
  %v3115 = vpop.f32.mrf.mxu0
  %v3116 = vadd.f32 %v2898, %v3115
  %3117 = vmatmul.f32.gmra.mxu0 %v2952
  %v3118 = vpop.f32.mrf.mxu0
  %v3119 = vadd.f32 %v2898, %v3118
  %3120 = vmatmul.f32.gmra.mxu0 %v2955
  %v3121 = vpop.f32.mrf.mxu0
  %v3122 = vadd.f32 %v2898, %v3121
  %3123 = vmatmul.f32.gmra.mxu0 %v2958
  %v3124 = vpop.f32.mrf.mxu0
  %v3125 = vadd.f32 %v2898, %v3124
  %3126 = vmatmul.f32.gmra.mxu0 %v2961
  %v3127 = vpop.f32.mrf.mxu0
  %v3128 = vadd.f32 %v2898, %v3127
  %3129 = vmatmul.f32.gmra.mxu0 %v2964
  %v3130 = vpop.f32.mrf.mxu0
  %v3131 = vadd.f32 %v2898, %v3130
  %3132 = vmatmul.f32.gmra.mxu0 %v2967
  %v3133 = vpop.f32.mrf.mxu0
  %v3134 = vadd.f32 %v2898, %v3133
  %3135 = vmatmul.f32.gmra.mxu0 %v2970
  %v3136 = vpop.f32.mrf.mxu0
  %v3137 = vadd.f32 %v2898, %v3136
  %3138 = vmatmul.f32.gmra.mxu0 %v2973
  %v3139 = vpop.f32.mrf.mxu0
  %v3140 = vadd.f32 %v2898, %v3139
  %3141 = vmatmul.f32.gmra.mxu0 %v2976
  %v3142 = vpop.f32.mrf.mxu0
  %v3143 = vadd.f32 %v2898, %v3142
  %3144 = vmatmul.f32.gmra.mxu0 %v2979
  %v3145 = vpop.f32.mrf.mxu0
  %v3146 = vadd.f32 %v2898, %v3145
  %3147 = vmatmul.f32.gmra.mxu0 %v2982
  %v3148 = vpop.f32.mrf.mxu0
  %v3149 = vadd.f32 %v2898, %v3148
  %3150 = vmatmul.f32.gmra.mxu0 %v2985
  %v3151 = vpop.f32.mrf.mxu0
  %v3152 = vadd.f32 %v2898, %v3151
  %3153 = vmatmul.f32.gmra.mxu0 %v2988
  %v3154 = vpop.f32.mrf.mxu0
  %v3155 = vadd.f32 %v2898, %v3154
  %3156 = vmatmul.f32.gmra.mxu0 %v2991
  %v3157 = vpop.f32.mrf.mxu0
  %v3158 = vadd.f32 %v2898, %v3157
  %3159 = vmatmul.f32.gmra.mxu0 %v2994
  %v3160 = vpop.f32.mrf.mxu0
  %v3161 = vadd.f32 %v2898, %v3160
  %3162 = vmatmul.f32.gmra.mxu0 %v2997
  %v3163 = vpop.f32.mrf.mxu0
  %v3164 = vadd.f32 %v2898, %v3163
  %3165 = vmatmul.f32.gmra.mxu0 %v3000
  %v3166 = vpop.f32.mrf.mxu0
  %v3167 = vadd.f32 %v2898, %v3166
  %3168 = vmatmul.f32.gmra.mxu0 %v3003
  %v3169 = vpop.f32.mrf.mxu0
  %v3170 = vadd.f32 %v2898, %v3169
  %3171 = vmatmul.f32.gmra.mxu0 %v3006
  %v3172 = vpop.f32.mrf.mxu0
  %v3173 = vadd.f32 %v2898, %v3172
  %3174 = vmatmul.f32.gmra.mxu0 %v3009
  %v3175 = vpop.f32.mrf.mxu0
  %v3176 = vadd.f32 %v2898, %v3175
  %3177 = vmatmul.f32.gmra.mxu0 %v3012
  %v3178 = vpop.f32.mrf.mxu0
  %v3179 = vadd.f32 %v2898, %v3178
  %3180 = vmatmul.f32.gmra.mxu0 %v3015
  %v3181 = vpop.f32.mrf.mxu0
  %v3182 = vadd.f32 %v2898, %v3181
  %3183 = vmatmul.f32.gmra.mxu0 %v3018
  %v3184 = vpop.f32.mrf.mxu0
  %v3185 = vadd.f32 %v2898, %v3184
  %3186 = vmatmul.f32.gmra.mxu0 %v3021
  %v3187 = vpop.f32.mrf.mxu0
  %v3188 = vadd.f32 %v2898, %v3187
  %3189 = vmatmul.f32.gmra.mxu0 %v3024
  %v3190 = vpop.f32.mrf.mxu0
  %v3191 = vadd.f32 %v2898, %v3190
  %3192 = vmatmul.f32.gmra.mxu0 %v3027
  %v3193 = vpop.f32.mrf.mxu0
  %v3194 = vadd.f32 %v2898, %v3193
  %3195 = vmatmul.f32.gmra.mxu0 %v3030
  %v3196 = vpop.f32.mrf.mxu0
  %v3197 = vadd.f32 %v2898, %v3196
  %3198 = vmatmul.f32.gmra.mxu0 %v3033
  %v3199 = vpop.f32.mrf.mxu0
  %v3200 = vadd.f32 %v2898, %v3199
  %3201 = vmatmul.f32.gmra.mxu0 %v3036
  %v3202 = vpop.f32.mrf.mxu0
  %v3203 = vadd.f32 %v2898, %v3202
  %3204 = vmatmul.f32.gmra.mxu0 %v3039
  %v3205 = vpop.f32.mrf.mxu0
  %v3206 = vadd.f32 %v2898, %v3205
  %3207 = vmatmul.f32.gmra.mxu0 %v3042
  %v3208 = vpop.f32.mrf.mxu0
  %v3209 = vadd.f32 %v2898, %v3208
  %3210 = vmatmul.f32.gmra.mxu0 %v3045
  %v3211 = vpop.f32.mrf.mxu0
  %v3212 = vadd.f32 %v2898, %v3211
  %3213 = vmatmul.f32.gmra.mxu0 %v3048
  %v3214 = vpop.f32.mrf.mxu0
  %v3215 = vadd.f32 %v2898, %v3214
  %3216 = vdwg.mxu0
  %v3217 = vld [vmem:[%s0] sm:$0xff]
  %v3218 = vld [vmem:[%s0 + $0x8] sm:$0xff]
  %v3219 = vld [vmem:[%s0 + $0x10] sm:$0xff]
  %v3220 = vld [vmem:[%s0 + $0x18] sm:$0xff]
  %v3221 = vld [vmem:[%s0 + $0x20] sm:$0xff]
  %v3222 = vld [vmem:[%s0 + $0x28] sm:$0xff]
  %v3223 = vld [vmem:[%s0 + $0x30] sm:$0xff]
  %v3224 = vld [vmem:[%s0 + $0x38] sm:$0xff]
  %v3225 = vld [vmem:[%s0 + $0x40] sm:$0xff]
  %v3226 = vld [vmem:[%s0 + $0x48] sm:$0xff]
  %v3227 = vld [vmem:[%s0 + $0x50] sm:$0xff]
  %v3228 = vld [vmem:[%s0 + $0x58] sm:$0xff]
  %v3229 = vld [vmem:[%s0 + $0x60] sm:$0xff]
  %v3230 = vld [vmem:[%s0 + $0x68] sm:$0xff]
  %v3231 = vld [vmem:[%s0 + $0x70] sm:$0xff]
  %v3232 = vld [vmem:[%s0 + $0x78] sm:$0xff]
  %v3233 = vld [vmem:[%s0 + $0x80] sm:$0xff]
  %v3234 = vld [vmem:[%s0 + $0x88] sm:$0xff]
  %v3235 = vld [vmem:[%s0 + $0x90] sm:$0xff]
  %v3236 = vld [vmem:[%s0 + $0x98] sm:$0xff]
  %v3237 = vld [vmem:[%s0 + $0xa0] sm:$0xff]
  %v3238 = vld [vmem:[%s0 + $0xa8] sm:$0xff]
  %v3239 = vld [vmem:[%s0 + $0xb0] sm:$0xff]
  %v3240 = vld [vmem:[%s0 + $0xb8] sm:$0xff]
  %v3241 = vld [vmem:[%s0 + $0xc0] sm:$0xff]
  %v3242 = vld [vmem:[%s0 + $0xc8] sm:$0xff]
  %v3243 = vld [vmem:[%s0 + $0xd0] sm:$0xff]
  %v3244 = vld [vmem:[%s0 + $0xd8] sm:$0xff]
  %v3245 = vld [vmem:[%s0 + $0xe0] sm:$0xff]
  %v3246 = vld [vmem:[%s0 + $0xe8] sm:$0xff]
  %v3247 = vld [vmem:[%s0 + $0xf0] sm:$0xff]
  %v3248 = vld [vmem:[%s0 + $0xf8] sm:$0xff]
  %v3249 = vld [vmem:[%s0 + $0x100] sm:$0xff]
  %v3250 = vld [vmem:[%s0 + $0x108] sm:$0xff]
  %v3251 = vld [vmem:[%s0 + $0x110] sm:$0xff]
  %v3252 = vld [vmem:[%s0 + $0x118] sm:$0xff]
  %v3253 = vld [vmem:[%s0 + $0x120] sm:$0xff]
  %v3254 = vld [vmem:[%s0 + $0x128] sm:$0xff]
  %v3255 = vld [vmem:[%s0 + $0x130] sm:$0xff]
  %v3256 = vld [vmem:[%s0 + $0x138] sm:$0xff]
  %v3257 = vld [vmem:[%s0 + $0x140] sm:$0xff]
  %v3258 = vld [vmem:[%s0 + $0x148] sm:$0xff]
  %v3259 = vld [vmem:[%s0 + $0x150] sm:$0xff]
  %v3260 = vld [vmem:[%s0 + $0x158] sm:$0xff]
  %v3261 = vld [vmem:[%s0 + $0x160] sm:$0xff]
  %v3262 = vld [vmem:[%s0 + $0x168] sm:$0xff]
  %v3263 = vld [vmem:[%s0 + $0x170] sm:$0xff]
  %v3264 = vld [vmem:[%s0 + $0x178] sm:$0xff]
  %v3265 = vld [vmem:[%s0 + $0x180] sm:$0xff]
  %v3266 = vld [vmem:[%s0 + $0x188] sm:$0xff]
  %v3267 = vadd.f32 %v3068, %v3217
  %v3268 = vadd.f32 %v3071, %v3218
  %v3269 = vadd.f32 %v3074, %v3219
  %v3270 = vadd.f32 %v3077, %v3220
  %v3271 = vadd.f32 %v3080, %v3221
  %v3272 = vadd.f32 %v3083, %v3222
  %v3273 = vadd.f32 %v3086, %v3223
  %v3274 = vadd.f32 %v3089, %v3224
  %v3275 = vadd.f32 %v3092, %v3225
  %v3276 = vadd.f32 %v3095, %v3226
  %v3277 = vadd.f32 %v3098, %v3227
  %v3278 = vadd.f32 %v3101, %v3228
  %v3279 = vadd.f32 %v3104, %v3229
  %v3280 = vadd.f32 %v3107, %v3230
  %v3281 = vadd.f32 %v3110, %v3231
  %v3282 = vadd.f32 %v3113, %v3232
  %v3283 = vadd.f32 %v3116, %v3233
  %v3284 = vadd.f32 %v3119, %v3234
  %v3285 = vadd.f32 %v3122, %v3235
  %v3286 = vadd.f32 %v3125, %v3236
  %v3287 = vadd.f32 %v3128, %v3237
  %v3288 = vadd.f32 %v3131, %v3238
  %v3289 = vadd.f32 %v3134, %v3239
  %v3290 = vadd.f32 %v3137, %v3240
  %v3291 = vadd.f32 %v3140, %v3241
  %v3292 = vadd.f32 %v3143, %v3242
  %v3293 = vadd.f32 %v3146, %v3243
  %v3294 = vadd.f32 %v3149, %v3244
  %v3295 = vadd.f32 %v3152, %v3245
  %v3296 = vadd.f32 %v3155, %v3246
  %v3297 = vadd.f32 %v3158, %v3247
  %v3298 = vadd.f32 %v3161, %v3248
  %v3299 = vadd.f32 %v3164, %v3249
  %v3300 = vadd.f32 %v3167, %v3250
  %v3301 = vadd.f32 %v3170, %v3251
  %v3302 = vadd.f32 %v3173, %v3252
  %v3303 = vadd.f32 %v3176, %v3253
  %v3304 = vadd.f32 %v3179, %v3254
  %v3305 = vadd.f32 %v3182, %v3255
  %v3306 = vadd.f32 %v3185, %v3256
  %v3307 = vadd.f32 %v3188, %v3257
  %v3308 = vadd.f32 %v3191, %v3258
  %v3309 = vadd.f32 %v3194, %v3259
  %v3310 = vadd.f32 %v3197, %v3260
  %v3311 = vadd.f32 %v3200, %v3261
  %v3312 = vadd.f32 %v3203, %v3262
  %v3313 = vadd.f32 %v3206, %v3263
  %v3314 = vadd.f32 %v3209, %v3264
  %v3315 = vadd.f32 %v3212, %v3265
  %v3316 = vadd.f32 %v3215, %v3266
  %3317 = vst [vmem:[%s10] sm:$0xff] %v3267
  %3318 = vst [vmem:[%s10 + $0x8] sm:$0xff] %v3268
  %3319 = vst [vmem:[%s10 + $0x10] sm:$0xff] %v3269
  %3320 = vst [vmem:[%s10 + $0x18] sm:$0xff] %v3270
  %3321 = vst [vmem:[%s10 + $0x20] sm:$0xff] %v3271
  %3322 = vst [vmem:[%s10 + $0x28] sm:$0xff] %v3272
  %3323 = vst [vmem:[%s10 + $0x30] sm:$0xff] %v3273
  %3324 = vst [vmem:[%s10 + $0x38] sm:$0xff] %v3274
  %3325 = vst [vmem:[%s10 + $0x40] sm:$0xff] %v3275
  %3326 = vst [vmem:[%s10 + $0x48] sm:$0xff] %v3276
  %3327 = vst [vmem:[%s10 + $0x50] sm:$0xff] %v3277
  %3328 = vst [vmem:[%s10 + $0x58] sm:$0xff] %v3278
  %3329 = vst [vmem:[%s10 + $0x60] sm:$0xff] %v3279
  %3330 = vst [vmem:[%s10 + $0x68] sm:$0xff] %v3280
  %3331 = vst [vmem:[%s10 + $0x70] sm:$0xff] %v3281
  %3332 = vst [vmem:[%s10 + $0x78] sm:$0xff] %v3282
  %3333 = vst [vmem:[%s10 + $0x80] sm:$0xff] %v3283
  %3334 = vst [vmem:[%s10 + $0x88] sm:$0xff] %v3284
  %3335 = vst [vmem:[%s10 + $0x90] sm:$0xff] %v3285
  %3336 = vst [vmem:[%s10 + $0x98] sm:$0xff] %v3286
  %3337 = vst [vmem:[%s10 + $0xa0] sm:$0xff] %v3287
  %3338 = vst [vmem:[%s10 + $0xa8] sm:$0xff] %v3288
  %3339 = vst [vmem:[%s10 + $0xb0] sm:$0xff] %v3289
  %3340 = vst [vmem:[%s10 + $0xb8] sm:$0xff] %v3290
  %3341 = vst [vmem:[%s10 + $0xc0] sm:$0xff] %v3291
  %3342 = vst [vmem:[%s10 + $0xc8] sm:$0xff] %v3292
  %3343 = vst [vmem:[%s10 + $0xd0] sm:$0xff] %v3293
  %3344 = vst [vmem:[%s10 + $0xd8] sm:$0xff] %v3294
  %3345 = vst [vmem:[%s10 + $0xe0] sm:$0xff] %v3295
  %3346 = vst [vmem:[%s10 + $0xe8] sm:$0xff] %v3296
  %3347 = vst [vmem:[%s10 + $0xf0] sm:$0xff] %v3297
  %3348 = vst [vmem:[%s10 + $0xf8] sm:$0xff] %v3298
  %3349 = vst [vmem:[%s10 + $0x100] sm:$0xff] %v3299
  %3350 = vst [vmem:[%s10 + $0x108] sm:$0xff] %v3300
  %3351 = vst [vmem:[%s10 + $0x110] sm:$0xff] %v3301
  %3352 = vst [vmem:[%s10 + $0x118] sm:$0xff] %v3302
  %3353 = vst [vmem:[%s10 + $0x120] sm:$0xff] %v3303
  %3354 = vst [vmem:[%s10 + $0x128] sm:$0xff] %v3304
  %3355 = vst [vmem:[%s10 + $0x130] sm:$0xff] %v3305
  %3356 = vst [vmem:[%s10 + $0x138] sm:$0xff] %v3306
  %3357 = vst [vmem:[%s10 + $0x140] sm:$0xff] %v3307
  %3358 = vst [vmem:[%s10 + $0x148] sm:$0xff] %v3308
  %3359 = vst [vmem:[%s10 + $0x150] sm:$0xff] %v3309
  %3360 = vst [vmem:[%s10 + $0x158] sm:$0xff] %v3310
  %3361 = vst [vmem:[%s10 + $0x160] sm:$0xff] %v3311
  %3362 = vst [vmem:[%s10 + $0x168] sm:$0xff] %v3312
  %3363 = vst [vmem:[%s10 + $0x170] sm:$0xff] %v3313
  %3364 = vst [vmem:[%s10 + $0x178] sm:$0xff] %v3314
  %3365 = vst [vmem:[%s10 + $0x180] sm:$0xff] %v3315
  %3366 = vst [vmem:[%s10 + $0x188] sm:$0xff] %v3316
  // Predicated region
  $region59: #{srivastava_lstm_forward.1} parent=0 // pred_check
    _
  $region60: #{srivastava_lstm_forward.1} parent=0 // pred_check_branch
    %3368 = sbr.rel (0) target = $region62
  $region61: #{srivastava_lstm_forward.1} parent=0 // pred_region
    _
  $region62: #{srivastava_lstm_forward.1} parent=0 // pred_fallthru
    _
  // Predicated region
  $region63: #{srivastava_lstm_forward.1} parent=0 // pred_check
    _
  $region64: #{srivastava_lstm_forward.1} parent=0 // pred_check_branch
    %3370 = sbr.rel (0) target = $region66
  $region65: #{srivastava_lstm_forward.1} parent=0 // pred_region
    _
  $region66: #{srivastava_lstm_forward.1} parent=0 // pred_fallthru
    _
  // Predicated region
  $region67: #{srivastava_lstm_forward.1} parent=0 // pred_check
    _
  $region68: #{srivastava_lstm_forward.1} parent=0 // pred_check_branch
    %3372 = sbr.rel (0) target = $region70
  $region69: #{srivastava_lstm_forward.1} parent=0 // pred_region
    _
  $region70: #{srivastava_lstm_forward.1} parent=0 // pred_fallthru
    _
  // Predicated region
  $region71: #{srivastava_lstm_forward.1} parent=0 // pred_check
    _
  $region72: #{srivastava_lstm_forward.1} parent=0 // pred_check_branch
    %3374 = sbr.rel (0) target = $region74
  $region73: #{srivastava_lstm_forward.1} parent=0 // pred_region
    _
  $region74: #{srivastava_lstm_forward.1} parent=0 // pred_fallthru
    _

</llo_original>
